<compile_context>
chip_gen: v7x
topology: tpu7x:2x2x1
jax: 0.10.0
libtpu: 0.0.40
codegen_flags: <defaults>
</compile_context>

<pallas_src>
import math

import jax
import jax.numpy as jnp
from jax.experimental import pallas as pl
from jax.experimental.pallas import tpu as pltpu

LEAKY_SLOPE = 0.01   # nn.LeakyReLU() default negative_slope
BN_EPS = 1e-5


# ----------------------------------------------------------------------------
# Kernel
# ----------------------------------------------------------------------------
def _make_kernel(C, H):
    """Kernel over a (T*H, W*C) row block; W and C are folded into the lanes."""

    def kernel(upper_ref, lower_ref,
               w3a_ref, w1a_ref, w3b1_ref, w3b2_ref, w1b_ref,
               bias_ref, out_ref, col_ref):
        TH, L = lower_ref.shape            # TH = T*H rows, L = W*C lanes
        f32 = jnp.float32
        bf16 = jnp.bfloat16

        bias = bias_ref[...]               # (3, L) f32; BN scale already in weights

        # Boundary masks, computed once and reused by all three 3x3 convs.
        # Rows are flattened (b,d,h); blocks start at multiples of H, so the
        # in-image h coordinate is simply row % H.
        h_idx = jax.lax.broadcasted_iota(jnp.int32, (TH, L), 0) % H
        l_idx = jax.lax.broadcasted_iota(jnp.int32, (TH, L), 1)
        hmask = {-1: h_idx >= 1, 1: h_idx < H - 1}
        lmask = {-1: l_idx >= C, 1: l_idx < L - C}

        def im2col(x):
            # x: (TH, L) -> col_ref (TH, 9L) bf16 scratch; tap k = (dy+1)*3+(dx+1).
            x = x.astype(f32)              # single f32 copy; taps stored as bf16
            k = 0
            for dy in (-1, 0, 1):
                if dy == 0:
                    xh = x
                else:
                    xh = pltpu.roll(x, shift=(-dy) % TH, axis=0)       # sublane roll (XLU)
                    xh = jnp.where(hmask[dy], xh, 0.0)
                for dx in (-1, 0, 1):
                    if dx == 0:
                        xw = xh
                    else:
                        xw = pltpu.roll(xh, shift=(-dx * C) % L, axis=1)  # lane roll (XLU)
                        xw = jnp.where(lmask[dx], xw, 0.0)
                    col_ref[:, k * L:(k + 1) * L] = xw.astype(bf16)    # 128-aligned store
                    k += 1
            return col_ref[...]

        def conv3x3(x, w_ref):
            # One MXU matmul: (TH, 9L) x (9L, L) -> (TH, L) f32.
            return jnp.dot(im2col(x), w_ref[...], preferred_element_type=f32)

        def bias_lrelu(y, i):
            y = y + bias[i][None, :]
            return jnp.maximum(y, LEAKY_SLOPE * y)

        # --- branch_1(lower): Conv3x3 -> BN -> LReLU -> Conv1x1 ---
        t = bias_lrelu(conv3x3(lower_ref[...], w3a_ref), 0)
        f1 = jnp.dot(t.astype(bf16), w1a_ref[...], preferred_element_type=f32)
        f2 = f1 + upper_ref[...].astype(f32)           # upper cast delayed to here

        # --- branch_2(f2): (Conv3x3 -> BN -> LReLU) x2 -> Conv1x1 ---
        t = bias_lrelu(conv3x3(f2, w3b1_ref), 1)
        t = bias_lrelu(conv3x3(t, w3b2_ref), 2)
        b2 = jnp.dot(t.astype(bf16), w1b_ref[...], preferred_element_type=f32)

        out = b2 + lower_ref[...].astype(f32)          # residual; lower stays bf16 in VMEM
        out_ref[...] = out.astype(out_ref.dtype)       # bf16 writeback

    return kernel


# ----------------------------------------------------------------------------
# Tiling: slices per grid step
# ----------------------------------------------------------------------------
def _pick_T(N, H, L, *, min_steps=4, target_rows=2048, vmem_budget=18 << 20):
    """T = (b,d)-slices per grid step.  Divisor of N, sublane-aligned block,
    per-step working set within budget, >= min_steps grid steps when possible,
    and large enough (target_rows) to amortize the ~0.35us/step grid overhead."""

    def step_bytes(t):
        th = t * H
        per_row = L * (2 * 2 * 2     # 2 bf16 inputs, double-buffered
                       + 2 * 2       # bf16 output, double-buffered
                       + 9 * 2       # bf16 im2col scratch
                       + 3 * 4)      # live f32 intermediates (~3 tiles)
        return th * per_row

    cands = [t for t in range(1, N + 1)
             if N % t == 0
             and ((t * H) % 8 == 0 or t == N)
             and step_bytes(t) <= vmem_budget]
    if not cands:
        cands = [1]
    stepped = [t for t in cands if N // t >= min_steps] or cands
    under = [t for t in stepped if t * H <= target_rows] or [min(stepped)]
    return max(under)


# ----------------------------------------------------------------------------
# Wrapper: layout + weight preparation + pallas_call
# ----------------------------------------------------------------------------
def _expand_conv3_weight(w9, W):
    # w9: (9, Cin, Cout) -> (9*W*Cin, W*Cout) block-diagonal (per tap) for the
    # fused (W*C) lane layout.  Row = k*(W*C) + w*C + ci, col = w*C + co.
    C = w9.shape[1]
    eye = jnp.eye(W, dtype=w9.dtype)
    big = jnp.einsum("kio,uv->kuivo", w9, eye)     # (9, W, Cin, W, Cout)
    return big.reshape(9 * W * C, W * C)


def _expand_1x1_weight(w, W):
    # w: (Cin, Cout) -> (W*Cin, W*Cout) block-diagonal.
    C = w.shape[0]
    eye = jnp.eye(W, dtype=w.dtype)
    return jnp.einsum("io,uv->uivo", w, eye).reshape(W * C, W * C)


def coupling_block(upper, lower, params):
    """upper, lower: (B, C, D, H, W) float32 -> (B, C, D, H, W) float32."""
    B, C, D, H, W = lower.shape
    N = B * D
    L = W * C
    R = N * H

    def to_kernel_layout(x):
        # NCDHW -> (B*D*H, W*C) rows, bf16 on the HBM->VMEM path.
        x = jnp.transpose(x, (0, 2, 3, 4, 1))           # (B, D, H, W, C)
        return x.reshape(R, L).astype(jnp.bfloat16)

    up = to_kernel_layout(upper)
    lo = to_kernel_layout(lower)

    # Weights prepared once in their final kernel layout, bf16, with the
    # eval-mode BatchNorm scale folded into the 3x3 output channels.
    s = params["bn_scale"]                               # (3, C)
    w3a = _expand_conv3_weight(params["w3a"] * s[0][None, None, :], W).astype(jnp.bfloat16)
    w3b1 = _expand_conv3_weight(params["w3b1"] * s[1][None, None, :], W).astype(jnp.bfloat16)
    w3b2 = _expand_conv3_weight(params["w3b2"] * s[2][None, None, :], W).astype(jnp.bfloat16)
    w1a = _expand_1x1_weight(params["w1a"], W).astype(jnp.bfloat16)
    w1b = _expand_1x1_weight(params["w1b"], W).astype(jnp.bfloat16)
    bias = jnp.tile(params["bn_bias"], (1, W)).astype(jnp.float32)   # (3, W*C)

    T = _pick_T(N, H, L)
    TH = T * H
    grid = (R // TH,)

    slice_spec = pl.BlockSpec((TH, L), lambda i: (i, 0))
    w3_spec = pl.BlockSpec((9 * L, L), lambda i: (0, 0))
    w1_spec = pl.BlockSpec((L, L), lambda i: (0, 0))
    bn_spec = pl.BlockSpec((3, L), lambda i: (0, 0))

    flops = int(R * (3 * 2 * (9 * L) * L + 2 * 2 * L * L))
    weight_bytes = (3 * 9 * L * L + 2 * L * L) * 2 + 3 * L * 4
    bytes_accessed = int(R * L * (2 + 2 + 2) + weight_bytes)   # bf16 in/in/out + weights

    out = pl.pallas_call(
        _make_kernel(C, H),
        out_shape=jax.ShapeDtypeStruct((R, L), jnp.bfloat16),
        grid=grid,
        in_specs=[slice_spec, slice_spec,
                  w3_spec, w1_spec, w3_spec, w3_spec, w1_spec,
                  bn_spec],
        out_specs=slice_spec,
        scratch_shapes=[pltpu.VMEM((TH, 9 * L), jnp.bfloat16)],
        compiler_params=pltpu.CompilerParams(
            dimension_semantics=("parallel",),
            vmem_limit_bytes=32 * 1024 * 1024),
        cost_estimate=pl.CostEstimate(flops=flops, transcendentals=0,
                                      bytes_accessed=bytes_accessed),
    )(up, lo, w3a, w1a, w3b1, w3b2, w1b, bias)

    out = out.reshape(B, D, H, W, C).astype(jnp.float32)
    return jnp.transpose(out, (0, 4, 1, 2, 3))


# ----------------------------------------------------------------------------
# Parameters (SubModule.weight_init semantics) and pure-JAX f32 reference
# ----------------------------------------------------------------------------
def init_params(key, C):
    ks = jax.random.split(key, 5)

    def conv3x3_w(k):
        # Conv3d weight (Cout, Cin, 1, 3, 3), std = sqrt(2 / (1*3*3*Cout))
        std = math.sqrt(2.0 / (1 * 3 * 3 * C))
        w = jax.random.normal(k, (C, C, 1, 3, 3), jnp.float32) * std
        return jnp.transpose(w[:, :, 0], (2, 3, 1, 0)).reshape(9, C, C)  # (tap, ci, co)

    def conv1x1_w(k):
        std = math.sqrt(2.0 / C)
        w = jax.random.normal(k, (C, C), jnp.float32) * std   # (Cout, Cin)
        return jnp.transpose(w)                                # (Cin, Cout)

    # Eval-mode BN right after weight_init: gamma=1, beta=0, mean=0, var=1.
    gamma = jnp.ones((3, C), jnp.float32)
    beta = jnp.zeros((3, C), jnp.float32)
    r_mean = jnp.zeros((3, C), jnp.float32)
    r_var = jnp.ones((3, C), jnp.float32)
    scale = gamma / jnp.sqrt(r_var + BN_EPS)
    bias = beta - r_mean * scale

    return dict(
        w3a=conv3x3_w(ks[0]), w1a=conv1x1_w(ks[1]),
        w3b1=conv3x3_w(ks[2]), w3b2=conv3x3_w(ks[3]), w1b=conv1x1_w(ks[4]),
        bn_scale=scale, bn_bias=bias,
    )


def _ref_conv3x3(x, w9):
    # x: (N, H, W, C); w9: (9, Cin, Cout) -> HWIO
    w = w9.reshape(3, 3, w9.shape[1], w9.shape[2])
    return jax.lax.conv_general_dilated(
        x, w, window_strides=(1, 1), padding="SAME",
        dimension_numbers=("NHWC", "HWIO", "NHWC"))


def coupling_block_reference(upper, lower, params):
    B, C, D, H, W = lower.shape

    def to4(x):
        return jnp.transpose(x, (0, 2, 3, 4, 1)).reshape(B * D, H, W, C)

    up, lo = to4(upper), to4(lower)
    s, b = params["bn_scale"], params["bn_bias"]

    def bnl(y, i):
        y = y * s[i] + b[i]
        return jnp.where(y > 0, y, LEAKY_SLOPE * y)

    t = bnl(_ref_conv3x3(lo, params["w3a"]), 0)
    f1 = t @ params["w1a"]
    f2 = f1 + up
    t = bnl(_ref_conv3x3(f2, params["w3b1"]), 1)
    t = bnl(_ref_conv3x3(t, params["w3b2"]), 2)
    out4 = t @ params["w1b"] + lo
    return jnp.transpose(out4.reshape(B, D, H, W, C), (0, 4, 1, 2, 3))


# ----------------------------------------------------------------------------
if __name__ == "__main__":
    B, C, D, H, W = 2, 8, 4, 16, 16   # cv_chan = 8, cost-volume-like shapes
    key = jax.random.PRNGKey(0)
    k_up, k_lo, k_par = jax.random.split(key, 3)

    upper = jax.random.normal(k_up, (B, C, D, H, W), jnp.float32)
    lower = jax.random.normal(k_lo, (B, C, D, H, W), jnp.float32)
    params = init_params(k_par, C)

    out = coupling_block(upper, lower, params)
    jax.block_until_ready(out)
    assert out.shape == (B, C, D, H, W), out.shape

    # Loose check against the pure-JAX f32 reference (kernel path is bf16 end-to-end).
    ref = coupling_block_reference(upper, lower, params)
    rel = float(jnp.linalg.norm(out - ref) / (jnp.linalg.norm(ref) + 1e-12))
    assert rel < 5e-2, f"relative error too high: {rel}"

    print("KERNEL_OK")
</pallas_src>

<mosaic_0001>
module attributes {stable_mosaic.version = 11 : i64} {
  func.func @kernel(%arg0: i32, %arg1: memref<32x128xbf16, #tpu.memory_space<vmem>>, %arg2: memref<32x128xbf16, #tpu.memory_space<vmem>>, %arg3: memref<1152x128xbf16, #tpu.memory_space<vmem>>, %arg4: memref<128x128xbf16, #tpu.memory_space<vmem>>, %arg5: memref<1152x128xbf16, #tpu.memory_space<vmem>>, %arg6: memref<1152x128xbf16, #tpu.memory_space<vmem>>, %arg7: memref<128x128xbf16, #tpu.memory_space<vmem>>, %arg8: memref<3x128xf32, #tpu.memory_space<vmem>>, %arg9: memref<32x128xbf16, #tpu.memory_space<vmem>>, %arg10: memref<32x1152xbf16, #tpu.memory_space<vmem>>) attributes {dimension_semantics = [#tpu.dimension_semantics<parallel>], iteration_bounds = array<i64: 4>, scalar_prefetch = 0 : i64, scratch_operands = 1 : i64, tpu.core_type = #tpu.core_type<tc>, window_params = [{transform_indices = @transform_0, window_bounds = array<i64: 32, 128>}, {transform_indices = @transform_1, window_bounds = array<i64: 32, 128>}, {pipeline_mode = #tpu.pipeline_mode<synchronous>, transform_indices = @transform_2, window_bounds = array<i64: 1152, 128>}, {pipeline_mode = #tpu.pipeline_mode<synchronous>, transform_indices = @transform_3, window_bounds = array<i64: 128, 128>}, {pipeline_mode = #tpu.pipeline_mode<synchronous>, transform_indices = @transform_4, window_bounds = array<i64: 1152, 128>}, {pipeline_mode = #tpu.pipeline_mode<synchronous>, transform_indices = @transform_5, window_bounds = array<i64: 1152, 128>}, {pipeline_mode = #tpu.pipeline_mode<synchronous>, transform_indices = @transform_6, window_bounds = array<i64: 128, 128>}, {pipeline_mode = #tpu.pipeline_mode<synchronous>, transform_indices = @transform_7, window_bounds = array<i64: 3, 128>}, {transform_indices = @transform_8, window_bounds = array<i64: 32, 128>}]} {
    %c0 = arith.constant 0 : index
    %c0_0 = arith.constant 0 : index
    %0 = vector.load %arg8[%c0, %c0_0] : memref<3x128xf32, #tpu.memory_space<vmem>>, vector<3x128xf32>
    %1 = tpu.iota {dimensions = array<i32: 0>} : vector<32x128xi32>
    %c16_i32 = arith.constant 16 : i32
    %c0_i32 = arith.constant 0 : i32
    %2 = arith.cmpi eq, %c16_i32, %c0_i32 : i32
    %c1_i32 = arith.constant 1 : i32
    %3 = arith.select %2, %c1_i32, %c16_i32 : i32
    %4 = vector.broadcast %3 : i32 to vector<32x128xi32>
    %5 = arith.remsi %1, %4 : vector<32x128xi32>
    %c0_i32_1 = arith.constant 0 : i32
    %6 = vector.broadcast %c0_i32_1 : i32 to vector<32x128xi32>
    %7 = arith.cmpi ne, %5, %6 : vector<32x128xi32>
    %c0_i32_2 = arith.constant 0 : i32
    %8 = vector.broadcast %c0_i32_2 : i32 to vector<32x128xi32>
    %9 = arith.cmpi slt, %5, %8 : vector<32x128xi32>
    %c0_i32_3 = arith.constant 0 : i32
    %10 = arith.cmpi slt, %3, %c0_i32_3 : i32
    %11 = vector.broadcast %10 : i1 to vector<32x128xi1>
    %12 = vector.broadcast %11 : vector<32x128xi1> to vector<32x128xi1>
    %13 = arith.xori %9, %12 : vector<32x128xi1>
    %14 = arith.andi %13, %7 : vector<32x128xi1>
    %15 = vector.broadcast %3 : i32 to vector<32x128xi32>
    %16 = arith.addi %5, %15 : vector<32x128xi32>
    %17 = arith.select %14, %16, %5 : vector<32x128xi1>, vector<32x128xi32>
    %18 = tpu.iota {dimensions = array<i32: 1>} : vector<32x128xi32>
    %c1_i32_4 = arith.constant 1 : i32
    %19 = vector.broadcast %c1_i32_4 : i32 to vector<32x128xi32>
    %20 = arith.cmpi sge, %17, %19 : vector<32x128xi32>
    %c15_i32 = arith.constant 15 : i32
    %21 = vector.broadcast %c15_i32 : i32 to vector<32x128xi32>
    %22 = arith.cmpi slt, %17, %21 : vector<32x128xi32>
    %c8_i32 = arith.constant 8 : i32
    %23 = vector.broadcast %c8_i32 : i32 to vector<32x128xi32>
    %24 = arith.cmpi sge, %18, %23 : vector<32x128xi32>
    %c120_i32 = arith.constant 120 : i32
    %25 = vector.broadcast %c120_i32 : i32 to vector<32x128xi32>
    %26 = arith.cmpi slt, %18, %25 : vector<32x128xi32>
    %c0_5 = arith.constant 0 : index
    %c0_6 = arith.constant 0 : index
    %27 = vector.load %arg2[%c0_5, %c0_6] : memref<32x128xbf16, #tpu.memory_space<vmem>>, vector<32x128xbf16>
    %28 = arith.extf %27 : vector<32x128xbf16> to vector<32x128xf32>
    %c1_i32_7 = arith.constant 1 : i32
    %29 = tpu.dynamic_rotate %28 by %c1_i32_7 dim 0 : vector<32x128xf32>, i32 -> vector<32x128xf32>
    %cst = arith.constant 0.000000e+00 : f32
    %30 = vector.broadcast %cst : f32 to vector<32x128xf32>
    %31 = arith.select %20, %29, %30 : vector<32x128xi1>, vector<32x128xf32>
    %c8_i32_8 = arith.constant 8 : i32
    %32 = tpu.dynamic_rotate %31 by %c8_i32_8 dim 1 : vector<32x128xf32>, i32 -> vector<32x128xf32>
    %cst_9 = arith.constant 0.000000e+00 : f32
    %33 = vector.broadcast %cst_9 : f32 to vector<32x128xf32>
    %34 = arith.select %24, %32, %33 : vector<32x128xi1>, vector<32x128xf32>
    %35 = arith.truncf %34 : vector<32x128xf32> to vector<32x128xbf16>
    %c0_10 = arith.constant 0 : index
    %c0_11 = arith.constant 0 : index
    %36 = vector.load %arg10[%c0_10, %c0_11] : memref<32x1152xbf16, #tpu.memory_space<vmem>>, vector<32x128xbf16>
    tpu.vector_store %arg10[%c0_10, %c0_11], %35 {strides = array<i32>} : memref<32x1152xbf16, #tpu.memory_space<vmem>>, vector<32x128xbf16>,
    %37 = arith.truncf %31 : vector<32x128xf32> to vector<32x128xbf16>
    %c0_12 = arith.constant 0 : index
    %c128 = arith.constant 128 : index
    %38 = vector.load %arg10[%c0_12, %c128] : memref<32x1152xbf16, #tpu.memory_space<vmem>>, vector<32x128xbf16>
    tpu.vector_store %arg10[%c0_12, %c128], %37 {strides = array<i32>} : memref<32x1152xbf16, #tpu.memory_space<vmem>>, vector<32x128xbf16>,
    %c120_i32_13 = arith.constant 120 : i32
    %39 = tpu.dynamic_rotate %31 by %c120_i32_13 dim 1 : vector<32x128xf32>, i32 -> vector<32x128xf32>
    %cst_14 = arith.constant 0.000000e+00 : f32
    %40 = vector.broadcast %cst_14 : f32 to vector<32x128xf32>
    %41 = arith.select %26, %39, %40 : vector<32x128xi1>, vector<32x128xf32>
    %42 = arith.truncf %41 : vector<32x128xf32> to vector<32x128xbf16>
    %c0_15 = arith.constant 0 : index
    %c256 = arith.constant 256 : index
    %43 = vector.load %arg10[%c0_15, %c256] : memref<32x1152xbf16, #tpu.memory_space<vmem>>, vector<32x128xbf16>
    tpu.vector_store %arg10[%c0_15, %c256], %42 {strides = array<i32>} : memref<32x1152xbf16, #tpu.memory_space<vmem>>, vector<32x128xbf16>,
    %c8_i32_16 = arith.constant 8 : i32
    %44 = tpu.dynamic_rotate %28 by %c8_i32_16 dim 1 : vector<32x128xf32>, i32 -> vector<32x128xf32>
    %cst_17 = arith.constant 0.000000e+00 : f32
    %45 = vector.broadcast %cst_17 : f32 to vector<32x128xf32>
    %46 = arith.select %24, %44, %45 : vector<32x128xi1>, vector<32x128xf32>
    %47 = arith.truncf %46 : vector<32x128xf32> to vector<32x128xbf16>
    %c0_18 = arith.constant 0 : index
    %c384 = arith.constant 384 : index
    %48 = vector.load %arg10[%c0_18, %c384] : memref<32x1152xbf16, #tpu.memory_space<vmem>>, vector<32x128xbf16>
    tpu.vector_store %arg10[%c0_18, %c384], %47 {strides = array<i32>} : memref<32x1152xbf16, #tpu.memory_space<vmem>>, vector<32x128xbf16>,
    %49 = arith.truncf %28 : vector<32x128xf32> to vector<32x128xbf16>
    %c0_19 = arith.constant 0 : index
    %c512 = arith.constant 512 : index
    %50 = vector.load %arg10[%c0_19, %c512] : memref<32x1152xbf16, #tpu.memory_space<vmem>>, vector<32x128xbf16>
    tpu.vector_store %arg10[%c0_19, %c512], %49 {strides = array<i32>} : memref<32x1152xbf16, #tpu.memory_space<vmem>>, vector<32x128xbf16>,
    %c120_i32_20 = arith.constant 120 : i32
    %51 = tpu.dynamic_rotate %28 by %c120_i32_20 dim 1 : vector<32x128xf32>, i32 -> vector<32x128xf32>
    %cst_21 = arith.constant 0.000000e+00 : f32
    %52 = vector.broadcast %cst_21 : f32 to vector<32x128xf32>
    %53 = arith.select %26, %51, %52 : vector<32x128xi1>, vector<32x128xf32>
    %54 = arith.truncf %53 : vector<32x128xf32> to vector<32x128xbf16>
    %c0_22 = arith.constant 0 : index
    %c640 = arith.constant 640 : index
    %55 = vector.load %arg10[%c0_22, %c640] : memref<32x1152xbf16, #tpu.memory_space<vmem>>, vector<32x128xbf16>
    tpu.vector_store %arg10[%c0_22, %c640], %54 {strides = array<i32>} : memref<32x1152xbf16, #tpu.memory_space<vmem>>, vector<32x128xbf16>,
    %c31_i32 = arith.constant 31 : i32
    %56 = tpu.dynamic_rotate %28 by %c31_i32 dim 0 : vector<32x128xf32>, i32 -> vector<32x128xf32>
    %cst_23 = arith.constant 0.000000e+00 : f32
    %57 = vector.broadcast %cst_23 : f32 to vector<32x128xf32>
    %58 = arith.select %22, %56, %57 : vector<32x128xi1>, vector<32x128xf32>
    %c8_i32_24 = arith.constant 8 : i32
    %59 = tpu.dynamic_rotate %58 by %c8_i32_24 dim 1 : vector<32x128xf32>, i32 -> vector<32x128xf32>
    %cst_25 = arith.constant 0.000000e+00 : f32
    %60 = vector.broadcast %cst_25 : f32 to vector<32x128xf32>
    %61 = arith.select %24, %59, %60 : vector<32x128xi1>, vector<32x128xf32>
    %62 = arith.truncf %61 : vector<32x128xf32> to vector<32x128xbf16>
    %c0_26 = arith.constant 0 : index
    %c768 = arith.constant 768 : index
    %63 = vector.load %arg10[%c0_26, %c768] : memref<32x1152xbf16, #tpu.memory_space<vmem>>, vector<32x128xbf16>
    tpu.vector_store %arg10[%c0_26, %c768], %62 {strides = array<i32>} : memref<32x1152xbf16, #tpu.memory_space<vmem>>, vector<32x128xbf16>,
    %64 = arith.truncf %58 : vector<32x128xf32> to vector<32x128xbf16>
    %c0_27 = arith.constant 0 : index
    %c896 = arith.constant 896 : index
    %65 = vector.load %arg10[%c0_27, %c896] : memref<32x1152xbf16, #tpu.memory_space<vmem>>, vector<32x128xbf16>
    tpu.vector_store %arg10[%c0_27, %c896], %64 {strides = array<i32>} : memref<32x1152xbf16, #tpu.memory_space<vmem>>, vector<32x128xbf16>,
    %c120_i32_28 = arith.constant 120 : i32
    %66 = tpu.dynamic_rotate %58 by %c120_i32_28 dim 1 : vector<32x128xf32>, i32 -> vector<32x128xf32>
    %cst_29 = arith.constant 0.000000e+00 : f32
    %67 = vector.broadcast %cst_29 : f32 to vector<32x128xf32>
    %68 = arith.select %26, %66, %67 : vector<32x128xi1>, vector<32x128xf32>
    %69 = arith.truncf %68 : vector<32x128xf32> to vector<32x128xbf16>
    %c0_30 = arith.constant 0 : index
    %c1024 = arith.constant 1024 : index
    %70 = vector.load %arg10[%c0_30, %c1024] : memref<32x1152xbf16, #tpu.memory_space<vmem>>, vector<32x128xbf16>
    tpu.vector_store %arg10[%c0_30, %c1024], %69 {strides = array<i32>} : memref<32x1152xbf16, #tpu.memory_space<vmem>>, vector<32x128xbf16>,
    %c0_31 = arith.constant 0 : index
    %c0_32 = arith.constant 0 : index
    %71 = vector.load %arg10[%c0_31, %c0_32] : memref<32x1152xbf16, #tpu.memory_space<vmem>>, vector<32x1152xbf16>
    %c0_33 = arith.constant 0 : index
    %c0_34 = arith.constant 0 : index
    %72 = vector.load %arg3[%c0_33, %c0_34] : memref<1152x128xbf16, #tpu.memory_space<vmem>>, vector<1152x128xbf16>
    %cst_35 = arith.constant dense<0.000000e+00> : vector<32x128xf32>
    %73 = tpu.matmul %71, %72, %cst_35 {dimension_numbers = #tpu.dot_dimension_numbers<[1], [0], [0], [1], [0, 0, 1, 1], [], []>} : vector<32x1152xbf16>, vector<1152x128xbf16>, vector<32x128xf32> -> vector<32x128xf32>
    %74 = vector.extract_strided_slice %0 {offsets = [0, 0], sizes = [1, 128], strides = [1, 1]} : vector<3x128xf32> to vector<1x128xf32>
    %75 = vector.shape_cast %74 : vector<1x128xf32> to vector<128xf32>
    %76 = vector.shape_cast %75 : vector<128xf32> to vector<1x128xf32>
    %77 = vector.broadcast %76 : vector<1x128xf32> to vector<32x128xf32>
    %78 = arith.addf %73, %77 : vector<32x128xf32>
    %cst_36 = arith.constant 0.00999999977 : f32
    %79 = vector.broadcast %cst_36 : f32 to vector<32x128xf32>
    %80 = arith.mulf %79, %78 : vector<32x128xf32>
    %81 = arith.maximumf %78, %80 : vector<32x128xf32>
    %82 = arith.truncf %81 : vector<32x128xf32> to vector<32x128xbf16>
    %c0_37 = arith.constant 0 : index
    %c0_38 = arith.constant 0 : index
    %83 = vector.load %arg4[%c0_37, %c0_38] : memref<128x128xbf16, #tpu.memory_space<vmem>>, vector<128x128xbf16>
    %cst_39 = arith.constant dense<0.000000e+00> : vector<32x128xf32>
    %84 = tpu.matmul %82, %83, %cst_39 {dimension_numbers = #tpu.dot_dimension_numbers<[1], [0], [0], [1], [0, 0, 1, 1], [], []>} : vector<32x128xbf16>, vector<128x128xbf16>, vector<32x128xf32> -> vector<32x128xf32>
    %c0_40 = arith.constant 0 : index
    %c0_41 = arith.constant 0 : index
    %85 = vector.load %arg1[%c0_40, %c0_41] : memref<32x128xbf16, #tpu.memory_space<vmem>>, vector<32x128xbf16>
    %86 = arith.extf %85 : vector<32x128xbf16> to vector<32x128xf32>
    %87 = arith.addf %84, %86 : vector<32x128xf32>
    %c1_i32_42 = arith.constant 1 : i32
    %88 = tpu.dynamic_rotate %87 by %c1_i32_42 dim 0 : vector<32x128xf32>, i32 -> vector<32x128xf32>
    %cst_43 = arith.constant 0.000000e+00 : f32
    %89 = vector.broadcast %cst_43 : f32 to vector<32x128xf32>
    %90 = arith.select %20, %88, %89 : vector<32x128xi1>, vector<32x128xf32>
    %c8_i32_44 = arith.constant 8 : i32
    %91 = tpu.dynamic_rotate %90 by %c8_i32_44 dim 1 : vector<32x128xf32>, i32 -> vector<32x128xf32>
    %cst_45 = arith.constant 0.000000e+00 : f32
    %92 = vector.broadcast %cst_45 : f32 to vector<32x128xf32>
    %93 = arith.select %24, %91, %92 : vector<32x128xi1>, vector<32x128xf32>
    %94 = arith.truncf %93 : vector<32x128xf32> to vector<32x128xbf16>
    %c0_46 = arith.constant 0 : index
    %c0_47 = arith.constant 0 : index
    %95 = vector.load %arg10[%c0_46, %c0_47] : memref<32x1152xbf16, #tpu.memory_space<vmem>>, vector<32x128xbf16>
    tpu.vector_store %arg10[%c0_46, %c0_47], %94 {strides = array<i32>} : memref<32x1152xbf16, #tpu.memory_space<vmem>>, vector<32x128xbf16>,
    %96 = arith.truncf %90 : vector<32x128xf32> to vector<32x128xbf16>
    %c0_48 = arith.constant 0 : index
    %c128_49 = arith.constant 128 : index
    %97 = vector.load %arg10[%c0_48, %c128_49] : memref<32x1152xbf16, #tpu.memory_space<vmem>>, vector<32x128xbf16>
    tpu.vector_store %arg10[%c0_48, %c128_49], %96 {strides = array<i32>} : memref<32x1152xbf16, #tpu.memory_space<vmem>>, vector<32x128xbf16>,
    %c120_i32_50 = arith.constant 120 : i32
    %98 = tpu.dynamic_rotate %90 by %c120_i32_50 dim 1 : vector<32x128xf32>, i32 -> vector<32x128xf32>
    %cst_51 = arith.constant 0.000000e+00 : f32
    %99 = vector.broadcast %cst_51 : f32 to vector<32x128xf32>
    %100 = arith.select %26, %98, %99 : vector<32x128xi1>, vector<32x128xf32>
    %101 = arith.truncf %100 : vector<32x128xf32> to vector<32x128xbf16>
    %c0_52 = arith.constant 0 : index
    %c256_53 = arith.constant 256 : index
    %102 = vector.load %arg10[%c0_52, %c256_53] : memref<32x1152xbf16, #tpu.memory_space<vmem>>, vector<32x128xbf16>
    tpu.vector_store %arg10[%c0_52, %c256_53], %101 {strides = array<i32>} : memref<32x1152xbf16, #tpu.memory_space<vmem>>, vector<32x128xbf16>,
    %c8_i32_54 = arith.constant 8 : i32
    %103 = tpu.dynamic_rotate %87 by %c8_i32_54 dim 1 : vector<32x128xf32>, i32 -> vector<32x128xf32>
    %cst_55 = arith.constant 0.000000e+00 : f32
    %104 = vector.broadcast %cst_55 : f32 to vector<32x128xf32>
    %105 = arith.select %24, %103, %104 : vector<32x128xi1>, vector<32x128xf32>
    %106 = arith.truncf %105 : vector<32x128xf32> to vector<32x128xbf16>
    %c0_56 = arith.constant 0 : index
    %c384_57 = arith.constant 384 : index
    %107 = vector.load %arg10[%c0_56, %c384_57] : memref<32x1152xbf16, #tpu.memory_space<vmem>>, vector<32x128xbf16>
    tpu.vector_store %arg10[%c0_56, %c384_57], %106 {strides = array<i32>} : memref<32x1152xbf16, #tpu.memory_space<vmem>>, vector<32x128xbf16>,
    %108 = arith.truncf %87 : vector<32x128xf32> to vector<32x128xbf16>
    %c0_58 = arith.constant 0 : index
    %c512_59 = arith.constant 512 : index
    %109 = vector.load %arg10[%c0_58, %c512_59] : memref<32x1152xbf16, #tpu.memory_space<vmem>>, vector<32x128xbf16>
    tpu.vector_store %arg10[%c0_58, %c512_59], %108 {strides = array<i32>} : memref<32x1152xbf16, #tpu.memory_space<vmem>>, vector<32x128xbf16>,
    %c120_i32_60 = arith.constant 120 : i32
    %110 = tpu.dynamic_rotate %87 by %c120_i32_60 dim 1 : vector<32x128xf32>, i32 -> vector<32x128xf32>
    %cst_61 = arith.constant 0.000000e+00 : f32
    %111 = vector.broadcast %cst_61 : f32 to vector<32x128xf32>
    %112 = arith.select %26, %110, %111 : vector<32x128xi1>, vector<32x128xf32>
    %113 = arith.truncf %112 : vector<32x128xf32> to vector<32x128xbf16>
    %c0_62 = arith.constant 0 : index
    %c640_63 = arith.constant 640 : index
    %114 = vector.load %arg10[%c0_62, %c640_63] : memref<32x1152xbf16, #tpu.memory_space<vmem>>, vector<32x128xbf16>
    tpu.vector_store %arg10[%c0_62, %c640_63], %113 {strides = array<i32>} : memref<32x1152xbf16, #tpu.memory_space<vmem>>, vector<32x128xbf16>,
    %c31_i32_64 = arith.constant 31 : i32
    %115 = tpu.dynamic_rotate %87 by %c31_i32_64 dim 0 : vector<32x128xf32>, i32 -> vector<32x128xf32>
    %cst_65 = arith.constant 0.000000e+00 : f32
    %116 = vector.broadcast %cst_65 : f32 to vector<32x128xf32>
    %117 = arith.select %22, %115, %116 : vector<32x128xi1>, vector<32x128xf32>
    %c8_i32_66 = arith.constant 8 : i32
    %118 = tpu.dynamic_rotate %117 by %c8_i32_66 dim 1 : vector<32x128xf32>, i32 -> vector<32x128xf32>
    %cst_67 = arith.constant 0.000000e+00 : f32
    %119 = vector.broadcast %cst_67 : f32 to vector<32x128xf32>
    %120 = arith.select %24, %118, %119 : vector<32x128xi1>, vector<32x128xf32>
    %121 = arith.truncf %120 : vector<32x128xf32> to vector<32x128xbf16>
    %c0_68 = arith.constant 0 : index
    %c768_69 = arith.constant 768 : index
    %122 = vector.load %arg10[%c0_68, %c768_69] : memref<32x1152xbf16, #tpu.memory_space<vmem>>, vector<32x128xbf16>
    tpu.vector_store %arg10[%c0_68, %c768_69], %121 {strides = array<i32>} : memref<32x1152xbf16, #tpu.memory_space<vmem>>, vector<32x128xbf16>,
    %123 = arith.truncf %117 : vector<32x128xf32> to vector<32x128xbf16>
    %c0_70 = arith.constant 0 : index
    %c896_71 = arith.constant 896 : index
    %124 = vector.load %arg10[%c0_70, %c896_71] : memref<32x1152xbf16, #tpu.memory_space<vmem>>, vector<32x128xbf16>
    tpu.vector_store %arg10[%c0_70, %c896_71], %123 {strides = array<i32>} : memref<32x1152xbf16, #tpu.memory_space<vmem>>, vector<32x128xbf16>,
    %c120_i32_72 = arith.constant 120 : i32
    %125 = tpu.dynamic_rotate %117 by %c120_i32_72 dim 1 : vector<32x128xf32>, i32 -> vector<32x128xf32>
    %cst_73 = arith.constant 0.000000e+00 : f32
    %126 = vector.broadcast %cst_73 : f32 to vector<32x128xf32>
    %127 = arith.select %26, %125, %126 : vector<32x128xi1>, vector<32x128xf32>
    %128 = arith.truncf %127 : vector<32x128xf32> to vector<32x128xbf16>
    %c0_74 = arith.constant 0 : index
    %c1024_75 = arith.constant 1024 : index
    %129 = vector.load %arg10[%c0_74, %c1024_75] : memref<32x1152xbf16, #tpu.memory_space<vmem>>, vector<32x128xbf16>
    tpu.vector_store %arg10[%c0_74, %c1024_75], %128 {strides = array<i32>} : memref<32x1152xbf16, #tpu.memory_space<vmem>>, vector<32x128xbf16>,
    %c0_76 = arith.constant 0 : index
    %c0_77 = arith.constant 0 : index
    %130 = vector.load %arg10[%c0_76, %c0_77] : memref<32x1152xbf16, #tpu.memory_space<vmem>>, vector<32x1152xbf16>
    %c0_78 = arith.constant 0 : index
    %c0_79 = arith.constant 0 : index
    %131 = vector.load %arg5[%c0_78, %c0_79] : memref<1152x128xbf16, #tpu.memory_space<vmem>>, vector<1152x128xbf16>
    %cst_80 = arith.constant dense<0.000000e+00> : vector<32x128xf32>
    %132 = tpu.matmul %130, %131, %cst_80 {dimension_numbers = #tpu.dot_dimension_numbers<[1], [0], [0], [1], [0, 0, 1, 1], [], []>} : vector<32x1152xbf16>, vector<1152x128xbf16>, vector<32x128xf32> -> vector<32x128xf32>
    %133 = vector.extract_strided_slice %0 {offsets = [1, 0], sizes = [1, 128], strides = [1, 1]} : vector<3x128xf32> to vector<1x128xf32>
    %134 = vector.shape_cast %133 : vector<1x128xf32> to vector<128xf32>
    %135 = vector.shape_cast %134 : vector<128xf32> to vector<1x128xf32>
    %136 = vector.broadcast %135 : vector<1x128xf32> to vector<32x128xf32>
    %137 = arith.addf %132, %136 : vector<32x128xf32>
    %cst_81 = arith.constant 0.00999999977 : f32
    %138 = vector.broadcast %cst_81 : f32 to vector<32x128xf32>
    %139 = arith.mulf %138, %137 : vector<32x128xf32>
    %140 = arith.maximumf %137, %139 : vector<32x128xf32>
    %c1_i32_82 = arith.constant 1 : i32
    %141 = tpu.dynamic_rotate %140 by %c1_i32_82 dim 0 : vector<32x128xf32>, i32 -> vector<32x128xf32>
    %cst_83 = arith.constant 0.000000e+00 : f32
    %142 = vector.broadcast %cst_83 : f32 to vector<32x128xf32>
    %143 = arith.select %20, %141, %142 : vector<32x128xi1>, vector<32x128xf32>
    %c8_i32_84 = arith.constant 8 : i32
    %144 = tpu.dynamic_rotate %143 by %c8_i32_84 dim 1 : vector<32x128xf32>, i32 -> vector<32x128xf32>
    %cst_85 = arith.constant 0.000000e+00 : f32
    %145 = vector.broadcast %cst_85 : f32 to vector<32x128xf32>
    %146 = arith.select %24, %144, %145 : vector<32x128xi1>, vector<32x128xf32>
    %147 = arith.truncf %146 : vector<32x128xf32> to vector<32x128xbf16>
    %c0_86 = arith.constant 0 : index
    %c0_87 = arith.constant 0 : index
    %148 = vector.load %arg10[%c0_86, %c0_87] : memref<32x1152xbf16, #tpu.memory_space<vmem>>, vector<32x128xbf16>
    tpu.vector_store %arg10[%c0_86, %c0_87], %147 {strides = array<i32>} : memref<32x1152xbf16, #tpu.memory_space<vmem>>, vector<32x128xbf16>,
    %149 = arith.truncf %143 : vector<32x128xf32> to vector<32x128xbf16>
    %c0_88 = arith.constant 0 : index
    %c128_89 = arith.constant 128 : index
    %150 = vector.load %arg10[%c0_88, %c128_89] : memref<32x1152xbf16, #tpu.memory_space<vmem>>, vector<32x128xbf16>
    tpu.vector_store %arg10[%c0_88, %c128_89], %149 {strides = array<i32>} : memref<32x1152xbf16, #tpu.memory_space<vmem>>, vector<32x128xbf16>,
    %c120_i32_90 = arith.constant 120 : i32
    %151 = tpu.dynamic_rotate %143 by %c120_i32_90 dim 1 : vector<32x128xf32>, i32 -> vector<32x128xf32>
    %cst_91 = arith.constant 0.000000e+00 : f32
    %152 = vector.broadcast %cst_91 : f32 to vector<32x128xf32>
    %153 = arith.select %26, %151, %152 : vector<32x128xi1>, vector<32x128xf32>
    %154 = arith.truncf %153 : vector<32x128xf32> to vector<32x128xbf16>
    %c0_92 = arith.constant 0 : index
    %c256_93 = arith.constant 256 : index
    %155 = vector.load %arg10[%c0_92, %c256_93] : memref<32x1152xbf16, #tpu.memory_space<vmem>>, vector<32x128xbf16>
    tpu.vector_store %arg10[%c0_92, %c256_93], %154 {strides = array<i32>} : memref<32x1152xbf16, #tpu.memory_space<vmem>>, vector<32x128xbf16>,
    %c8_i32_94 = arith.constant 8 : i32
    %156 = tpu.dynamic_rotate %140 by %c8_i32_94 dim 1 : vector<32x128xf32>, i32 -> vector<32x128xf32>
    %cst_95 = arith.constant 0.000000e+00 : f32
    %157 = vector.broadcast %cst_95 : f32 to vector<32x128xf32>
    %158 = arith.select %24, %156, %157 : vector<32x128xi1>, vector<32x128xf32>
    %159 = arith.truncf %158 : vector<32x128xf32> to vector<32x128xbf16>
    %c0_96 = arith.constant 0 : index
    %c384_97 = arith.constant 384 : index
    %160 = vector.load %arg10[%c0_96, %c384_97] : memref<32x1152xbf16, #tpu.memory_space<vmem>>, vector<32x128xbf16>
    tpu.vector_store %arg10[%c0_96, %c384_97], %159 {strides = array<i32>} : memref<32x1152xbf16, #tpu.memory_space<vmem>>, vector<32x128xbf16>,
    %161 = arith.truncf %140 : vector<32x128xf32> to vector<32x128xbf16>
    %c0_98 = arith.constant 0 : index
    %c512_99 = arith.constant 512 : index
    %162 = vector.load %arg10[%c0_98, %c512_99] : memref<32x1152xbf16, #tpu.memory_space<vmem>>, vector<32x128xbf16>
    tpu.vector_store %arg10[%c0_98, %c512_99], %161 {strides = array<i32>} : memref<32x1152xbf16, #tpu.memory_space<vmem>>, vector<32x128xbf16>,
    %c120_i32_100 = arith.constant 120 : i32
    %163 = tpu.dynamic_rotate %140 by %c120_i32_100 dim 1 : vector<32x128xf32>, i32 -> vector<32x128xf32>
    %cst_101 = arith.constant 0.000000e+00 : f32
    %164 = vector.broadcast %cst_101 : f32 to vector<32x128xf32>
    %165 = arith.select %26, %163, %164 : vector<32x128xi1>, vector<32x128xf32>
    %166 = arith.truncf %165 : vector<32x128xf32> to vector<32x128xbf16>
    %c0_102 = arith.constant 0 : index
    %c640_103 = arith.constant 640 : index
    %167 = vector.load %arg10[%c0_102, %c640_103] : memref<32x1152xbf16, #tpu.memory_space<vmem>>, vector<32x128xbf16>
    tpu.vector_store %arg10[%c0_102, %c640_103], %166 {strides = array<i32>} : memref<32x1152xbf16, #tpu.memory_space<vmem>>, vector<32x128xbf16>,
    %c31_i32_104 = arith.constant 31 : i32
    %168 = tpu.dynamic_rotate %140 by %c31_i32_104 dim 0 : vector<32x128xf32>, i32 -> vector<32x128xf32>
    %cst_105 = arith.constant 0.000000e+00 : f32
    %169 = vector.broadcast %cst_105 : f32 to vector<32x128xf32>
    %170 = arith.select %22, %168, %169 : vector<32x128xi1>, vector<32x128xf32>
    %c8_i32_106 = arith.constant 8 : i32
    %171 = tpu.dynamic_rotate %170 by %c8_i32_106 dim 1 : vector<32x128xf32>, i32 -> vector<32x128xf32>
    %cst_107 = arith.constant 0.000000e+00 : f32
    %172 = vector.broadcast %cst_107 : f32 to vector<32x128xf32>
    %173 = arith.select %24, %171, %172 : vector<32x128xi1>, vector<32x128xf32>
    %174 = arith.truncf %173 : vector<32x128xf32> to vector<32x128xbf16>
    %c0_108 = arith.constant 0 : index
    %c768_109 = arith.constant 768 : index
    %175 = vector.load %arg10[%c0_108, %c768_109] : memref<32x1152xbf16, #tpu.memory_space<vmem>>, vector<32x128xbf16>
    tpu.vector_store %arg10[%c0_108, %c768_109], %174 {strides = array<i32>} : memref<32x1152xbf16, #tpu.memory_space<vmem>>, vector<32x128xbf16>,
    %176 = arith.truncf %170 : vector<32x128xf32> to vector<32x128xbf16>
    %c0_110 = arith.constant 0 : index
    %c896_111 = arith.constant 896 : index
    %177 = vector.load %arg10[%c0_110, %c896_111] : memref<32x1152xbf16, #tpu.memory_space<vmem>>, vector<32x128xbf16>
    tpu.vector_store %arg10[%c0_110, %c896_111], %176 {strides = array<i32>} : memref<32x1152xbf16, #tpu.memory_space<vmem>>, vector<32x128xbf16>,
    %c120_i32_112 = arith.constant 120 : i32
    %178 = tpu.dynamic_rotate %170 by %c120_i32_112 dim 1 : vector<32x128xf32>, i32 -> vector<32x128xf32>
    %cst_113 = arith.constant 0.000000e+00 : f32
    %179 = vector.broadcast %cst_113 : f32 to vector<32x128xf32>
    %180 = arith.select %26, %178, %179 : vector<32x128xi1>, vector<32x128xf32>
    %181 = arith.truncf %180 : vector<32x128xf32> to vector<32x128xbf16>
    %c0_114 = arith.constant 0 : index
    %c1024_115 = arith.constant 1024 : index
    %182 = vector.load %arg10[%c0_114, %c1024_115] : memref<32x1152xbf16, #tpu.memory_space<vmem>>, vector<32x128xbf16>
    tpu.vector_store %arg10[%c0_114, %c1024_115], %181 {strides = array<i32>} : memref<32x1152xbf16, #tpu.memory_space<vmem>>, vector<32x128xbf16>,
    %c0_116 = arith.constant 0 : index
    %c0_117 = arith.constant 0 : index
    %183 = vector.load %arg10[%c0_116, %c0_117] : memref<32x1152xbf16, #tpu.memory_space<vmem>>, vector<32x1152xbf16>
    %c0_118 = arith.constant 0 : index
    %c0_119 = arith.constant 0 : index
    %184 = vector.load %arg6[%c0_118, %c0_119] : memref<1152x128xbf16, #tpu.memory_space<vmem>>, vector<1152x128xbf16>
    %cst_120 = arith.constant dense<0.000000e+00> : vector<32x128xf32>
    %185 = tpu.matmul %183, %184, %cst_120 {dimension_numbers = #tpu.dot_dimension_numbers<[1], [0], [0], [1], [0, 0, 1, 1], [], []>} : vector<32x1152xbf16>, vector<1152x128xbf16>, vector<32x128xf32> -> vector<32x128xf32>
    %186 = vector.extract_strided_slice %0 {offsets = [2, 0], sizes = [1, 128], strides = [1, 1]} : vector<3x128xf32> to vector<1x128xf32>
    %187 = vector.shape_cast %186 : vector<1x128xf32> to vector<128xf32>
    %188 = vector.shape_cast %187 : vector<128xf32> to vector<1x128xf32>
    %189 = vector.broadcast %188 : vector<1x128xf32> to vector<32x128xf32>
    %190 = arith.addf %185, %189 : vector<32x128xf32>
    %cst_121 = arith.constant 0.00999999977 : f32
    %191 = vector.broadcast %cst_121 : f32 to vector<32x128xf32>
    %192 = arith.mulf %191, %190 : vector<32x128xf32>
    %193 = arith.maximumf %190, %192 : vector<32x128xf32>
    %194 = arith.truncf %193 : vector<32x128xf32> to vector<32x128xbf16>
    %c0_122 = arith.constant 0 : index
    %c0_123 = arith.constant 0 : index
    %195 = vector.load %arg7[%c0_122, %c0_123] : memref<128x128xbf16, #tpu.memory_space<vmem>>, vector<128x128xbf16>
    %cst_124 = arith.constant dense<0.000000e+00> : vector<32x128xf32>
    %196 = tpu.matmul %194, %195, %cst_124 {dimension_numbers = #tpu.dot_dimension_numbers<[1], [0], [0], [1], [0, 0, 1, 1], [], []>} : vector<32x128xbf16>, vector<128x128xbf16>, vector<32x128xf32> -> vector<32x128xf32>
    %c0_125 = arith.constant 0 : index
    %c0_126 = arith.constant 0 : index
    %197 = vector.load %arg2[%c0_125, %c0_126] : memref<32x128xbf16, #tpu.memory_space<vmem>>, vector<32x128xbf16>
    %198 = arith.extf %197 : vector<32x128xbf16> to vector<32x128xf32>
    %199 = arith.addf %196, %198 : vector<32x128xf32>
    %200 = arith.truncf %199 : vector<32x128xf32> to vector<32x128xbf16>
    %c0_127 = arith.constant 0 : index
    %c0_128 = arith.constant 0 : index
    %201 = vector.load %arg9[%c0_127, %c0_128] : memref<32x128xbf16, #tpu.memory_space<vmem>>, vector<32x128xbf16>
    tpu.vector_store %arg9[%c0_127, %c0_128], %200 {strides = array<i32>} : memref<32x128xbf16, #tpu.memory_space<vmem>>, vector<32x128xbf16>,
    return
  }
  func.func @transform_0(%arg0: i32) -> (i32, i32) {
    %c0_i32 = arith.constant 0 : i32
    %c0_i32_0 = arith.constant 0 : i32
    return %arg0, %c0_i32 : i32, i32
  }
  func.func @transform_1(%arg0: i32) -> (i32, i32) {
    %c0_i32 = arith.constant 0 : i32
    %c0_i32_0 = arith.constant 0 : i32
    return %arg0, %c0_i32 : i32, i32
  }
  func.func @transform_2(%arg0: i32) -> (i32, i32) {
    %c0_i32 = arith.constant 0 : i32
    %c0_i32_0 = arith.constant 0 : i32
    %c0_i32_1 = arith.constant 0 : i32
    return %c0_i32, %c0_i32_0 : i32, i32
  }
  func.func @transform_3(%arg0: i32) -> (i32, i32) {
    %c0_i32 = arith.constant 0 : i32
    %c0_i32_0 = arith.constant 0 : i32
    %c0_i32_1 = arith.constant 0 : i32
    return %c0_i32, %c0_i32_0 : i32, i32
  }
  func.func @transform_4(%arg0: i32) -> (i32, i32) {
    %c0_i32 = arith.constant 0 : i32
    %c0_i32_0 = arith.constant 0 : i32
    %c0_i32_1 = arith.constant 0 : i32
    return %c0_i32, %c0_i32_0 : i32, i32
  }
  func.func @transform_5(%arg0: i32) -> (i32, i32) {
    %c0_i32 = arith.constant 0 : i32
    %c0_i32_0 = arith.constant 0 : i32
    %c0_i32_1 = arith.constant 0 : i32
    return %c0_i32, %c0_i32_0 : i32, i32
  }
  func.func @transform_6(%arg0: i32) -> (i32, i32) {
    %c0_i32 = arith.constant 0 : i32
    %c0_i32_0 = arith.constant 0 : i32
    %c0_i32_1 = arith.constant 0 : i32
    return %c0_i32, %c0_i32_0 : i32, i32
  }
  func.func @transform_7(%arg0: i32) -> (i32, i32) {
    %c0_i32 = arith.constant 0 : i32
    %c0_i32_0 = arith.constant 0 : i32
    %c0_i32_1 = arith.constant 0 : i32
    return %c0_i32, %c0_i32_0 : i32, i32
  }
  func.func @transform_8(%arg0: i32) -> (i32, i32) {
    %c0_i32 = arith.constant 0 : i32
    %c0_i32_0 = arith.constant 0 : i32
    return %arg0, %c0_i32 : i32, i32
  }
}

</mosaic_0001>

<llo_original>
// kernel: tpu_custom_call.1
$region0: #{tpu_custom_call.1}
  #allocation0 [shape = 'u32[]', space=smem, size = 0x4, offset = 0x4, fixed_abs, tag = 'smem constant byte address 0x4 - core index']
  #allocation1 [shape = 'u32[144,128]{1,0:T(1,128)}', space=vmem, size = 0x12000, scoped, tag = 'internal scratch']
  #allocation2 [shape = 'bf16[32,1152]{1,0:T(16,128)(2,1)}', space=vmem, size = 0x12000, scoped, tag = 'scratch operand']
  %s0 = inlined_call_operand.hbm [shape: bf16[128,128], index: 0, kind: input, shape index: {}]
  %s1 = inlined_call_operand.hbm [shape: bf16[128,128], index: 1, kind: input, shape index: {}]
  %s2 = inlined_call_operand.hbm [shape: bf16[1152,128], index: 2, kind: input, shape index: {}]
  %s3 = inlined_call_operand.hbm [shape: bf16[128,128], index: 3, kind: input, shape index: {}]
  %s4 = inlined_call_operand.hbm [shape: bf16[1152,128], index: 4, kind: input, shape index: {}]
  %s5 = inlined_call_operand.hbm [shape: bf16[1152,128], index: 5, kind: input, shape index: {}]
  %s6 = inlined_call_operand.hbm [shape: bf16[128,128], index: 6, kind: input, shape index: {}]
  %s7 = inlined_call_operand.vmem [shape: f32[3,128], index: 7, kind: input, shape index: {}]
  %s8 = inlined_call_operand.hbm [shape: bf16[128,128], index: 8, kind: output, shape index: {}]
  %s9 = sld [smem:[#allocation0]]
  $region93: #{tpu_custom_call.1} parent=0
    _
  %s11 = ssub.s32 1, %s9
  %s12 = scalar_select 0, %s11, %s9
  $region1: #{tpu_custom_call.1} parent=0
    #allocation3 [shape = 'u8[16384]{0}', space=vmem, size = 0x4000, scoped, tag = 'input window, operand 0']
    #allocation4 [shape = 's32[2]{0}', space=sflag, size = 0x8, scoped, tag = 'scoped memory for tpu_custom_call.1']
    #allocation5 [shape = 's32[2]{0}', space=sflag, size = 0x8, scoped, tag = 'scoped memory for tpu_custom_call.1']
    #allocation6 [shape = 'u8[16384]{0}', space=vmem, size = 0x4000, scoped, tag = 'input window, operand 1']
    #allocation7 [shape = 's32[2]{0}', space=sflag, size = 0x8, scoped, tag = 'scoped memory for tpu_custom_call.1']
    #allocation8 [shape = 'u8[294912]{0}', space=vmem, size = 0x48000, scoped, tag = 'input window, operand 2, single buffered']
    #allocation9 [shape = 'u8[32768]{0}', space=vmem, size = 0x8000, scoped, tag = 'input window, operand 3, single buffered']
    #allocation10 [shape = 's32[1]{0}', space=sflag, size = 0x4, scoped, tag = 'scoped memory for tpu_custom_call.1']
    #allocation11 [shape = 'u8[294912]{0}', space=vmem, size = 0x48000, scoped, tag = 'input window, operand 4, single buffered']
    #allocation12 [shape = 'u8[294912]{0}', space=vmem, size = 0x48000, scoped, tag = 'input window, operand 5, single buffered']
    #allocation13 [shape = 's32[1]{0}', space=sflag, size = 0x4, scoped, tag = 'scoped memory for tpu_custom_call.1']
    #allocation14 [shape = 'u8[32768]{0}', space=vmem, size = 0x8000, scoped, tag = 'input window, operand 6, single buffered']
    #allocation15 [shape = 'u8[16384]{0}', space=vmem, size = 0x4000, scoped, tag = 'output window, operand 0']
    %13 = vsyncpa [#allocation4], 0
    %s14 = scalar_lea.sflag [#allocation4], 1
    %15 = vsyncpa %s14, 0
    %16 = vsyncpa [#allocation7], 0
    %s17 = scalar_lea.sflag [#allocation7], 1
    %18 = vsyncpa %s17, 0
    %19 = vsyncpa [#allocation10], 0
    %20 = vsyncpa [#allocation13], 0
    %21 = vsyncpa [#allocation5], 0
    %s22 = scalar_lea.sflag [#allocation5], 1
    %23 = vsyncpa %s22, 0
    loop: start=0, step=1, limit=6
    $region2: #{tpu_custom_call.1} parent=1 // loop_pre_header
      _
    $region3: #{tpu_custom_call.1} parent=1 // loop_header
      %s25 = sphi 0, %s29
      %p26 = scmp.ge.s32.totalorder %s25, 6
      %s35 = sphi 0, %s37
      %s38 = sphi 0, %s35
      %s39 = sphi 0, %s38
      %s55 = sphi 0, %s39
      %s61 = sphi 0, %s63
      %s64 = sphi 0, %s61
      %s65 = sphi 0, %s64
      %s81 = sphi 0, %s65
      %s85 = sphi 0, %s85
      %s87 = sphi 0, %s85
      %s88 = sphi 0, %s87
      %s102 = sphi 0, %s88
      %s106 = sphi 0, %s106
      %s108 = sphi 0, %s106
      %s109 = sphi 0, %s108
      %s123 = sphi 0, %s109
      %s127 = sphi 0, %s127
      %s129 = sphi 0, %s127
      %s130 = sphi 0, %s129
      %s144 = sphi 0, %s130
      %s148 = sphi 0, %s148
      %s150 = sphi 0, %s148
      %s151 = sphi 0, %s150
      %s165 = sphi 0, %s151
      %s169 = sphi 0, %s169
      %s171 = sphi 0, %s169
      %s172 = sphi 0, %s171
      %s186 = sphi 0, %s172
      %s190 = sphi 0, %s190
      %s192 = sphi 0, %s190
      %s193 = sphi 0, %s192
      %s207 = sphi 0, %s193
      %s213 = sphi 0, %s215
      %s216 = sphi 0, %s213
      %s217 = sphi 0, %s216
      %s233 = sphi 0, %s217
    $region4: #{tpu_custom_call.1} parent=1 // loop_header_branch
      %28 = sbr.rel (%p26) target = $region8
    $region5: #{tpu_custom_call.1} parent=1 // loop_body
      %s30 = ssub.s32 %s25, 1
      %s31 = ssub.s32 %s25, 2
      %s32 = sadd.s32 %s25, 1
      %s33 = ssub.s32 %s25, %s32
      %p34 = scmp.eq.s32.totalorder %s33, 0
      %s36 = sadd.s32 %s35, 1
      %s37 = scalar_select %p34, %s35, %s36
      %p40 = pneg %p34
      %p41 = scmp.eq.s32.totalorder %s25, 3
      %p42 = por %p40, %p41
      %p43 = scmp.ne.s32.totalorder %s35, %s38
      %p44 = scmp.eq.s32.totalorder %s25, 0
      %p45 = por %p43, %p44
      %p46 = scmp.ne.s32.totalorder %s35, %s38
      %p47 = scmp.eq.s32.totalorder %s30, 3
      %p48 = por %p46, %p47
      %p49 = scmp.ne.s32.totalorder %s38, %s39
      %p50 = scmp.eq.s32.totalorder %s30, 0
      %p51 = por %p49, %p50
      %p52 = scmp.ne.s32.totalorder %s38, %s39
      %p53 = scmp.eq.s32.totalorder %s31, 3
      %p54 = por %p52, %p53
      %p56 = scmp.ne.s32.totalorder %s39, %s55
      %p57 = scmp.eq.s32.totalorder %s31, 0
      %p58 = por %p56, %p57
      %s59 = ssub.s32 %s25, %s32
      %p60 = scmp.eq.s32.totalorder %s59, 0
      %s62 = sadd.s32 %s61, 1
      %s63 = scalar_select %p60, %s61, %s62
      %p66 = pneg %p60
      %p67 = scmp.eq.s32.totalorder %s25, 3
      %p68 = por %p66, %p67
      %p69 = scmp.ne.s32.totalorder %s61, %s64
      %p70 = scmp.eq.s32.totalorder %s25, 0
      %p71 = por %p69, %p70
      %p72 = scmp.ne.s32.totalorder %s61, %s64
      %p73 = scmp.eq.s32.totalorder %s30, 3
      %p74 = por %p72, %p73
      %p75 = scmp.ne.s32.totalorder %s64, %s65
      %p76 = scmp.eq.s32.totalorder %s30, 0
      %p77 = por %p75, %p76
      %p78 = scmp.ne.s32.totalorder %s64, %s65
      %p79 = scmp.eq.s32.totalorder %s31, 3
      %p80 = por %p78, %p79
      %p82 = scmp.ne.s32.totalorder %s65, %s81
      %p83 = scmp.eq.s32.totalorder %s31, 0
      %p84 = por %p82, %p83
      %s86 = sadd.s32 %s85, 1
      %p89 = scmp.eq.s32.totalorder %s25, 3
      %p90 = scmp.ne.s32.totalorder %s85, %s87
      %p91 = scmp.eq.s32.totalorder %s25, 0
      %p92 = por %p90, %p91
      %p93 = scmp.ne.s32.totalorder %s85, %s87
      %p94 = scmp.eq.s32.totalorder %s30, 3
      %p95 = por %p93, %p94
      %p96 = scmp.ne.s32.totalorder %s87, %s88
      %p97 = scmp.eq.s32.totalorder %s30, 0
      %p98 = por %p96, %p97
      %p99 = scmp.ne.s32.totalorder %s87, %s88
      %p100 = scmp.eq.s32.totalorder %s31, 3
      %p101 = por %p99, %p100
      %p103 = scmp.ne.s32.totalorder %s88, %s102
      %p104 = scmp.eq.s32.totalorder %s31, 0
      %p105 = por %p103, %p104
      %s107 = sadd.s32 %s106, 1
      %p110 = scmp.eq.s32.totalorder %s25, 3
      %p111 = scmp.ne.s32.totalorder %s106, %s108
      %p112 = scmp.eq.s32.totalorder %s25, 0
      %p113 = por %p111, %p112
      %p114 = scmp.ne.s32.totalorder %s106, %s108
      %p115 = scmp.eq.s32.totalorder %s30, 3
      %p116 = por %p114, %p115
      %p117 = scmp.ne.s32.totalorder %s108, %s109
      %p118 = scmp.eq.s32.totalorder %s30, 0
      %p119 = por %p117, %p118
      %p120 = scmp.ne.s32.totalorder %s108, %s109
      %p121 = scmp.eq.s32.totalorder %s31, 3
      %p122 = por %p120, %p121
      %p124 = scmp.ne.s32.totalorder %s109, %s123
      %p125 = scmp.eq.s32.totalorder %s31, 0
      %p126 = por %p124, %p125
      %s128 = sadd.s32 %s127, 1
      %p131 = scmp.eq.s32.totalorder %s25, 3
      %p132 = scmp.ne.s32.totalorder %s127, %s129
      %p133 = scmp.eq.s32.totalorder %s25, 0
      %p134 = por %p132, %p133
      %p135 = scmp.ne.s32.totalorder %s127, %s129
      %p136 = scmp.eq.s32.totalorder %s30, 3
      %p137 = por %p135, %p136
      %p138 = scmp.ne.s32.totalorder %s129, %s130
      %p139 = scmp.eq.s32.totalorder %s30, 0
      %p140 = por %p138, %p139
      %p141 = scmp.ne.s32.totalorder %s129, %s130
      %p142 = scmp.eq.s32.totalorder %s31, 3
      %p143 = por %p141, %p142
      %p145 = scmp.ne.s32.totalorder %s130, %s144
      %p146 = scmp.eq.s32.totalorder %s31, 0
      %p147 = por %p145, %p146
      %s149 = sadd.s32 %s148, 1
      %p152 = scmp.eq.s32.totalorder %s25, 3
      %p153 = scmp.ne.s32.totalorder %s148, %s150
      %p154 = scmp.eq.s32.totalorder %s25, 0
      %p155 = por %p153, %p154
      %p156 = scmp.ne.s32.totalorder %s148, %s150
      %p157 = scmp.eq.s32.totalorder %s30, 3
      %p158 = por %p156, %p157
      %p159 = scmp.ne.s32.totalorder %s150, %s151
      %p160 = scmp.eq.s32.totalorder %s30, 0
      %p161 = por %p159, %p160
      %p162 = scmp.ne.s32.totalorder %s150, %s151
      %p163 = scmp.eq.s32.totalorder %s31, 3
      %p164 = por %p162, %p163
      %p166 = scmp.ne.s32.totalorder %s151, %s165
      %p167 = scmp.eq.s32.totalorder %s31, 0
      %p168 = por %p166, %p167
      %s170 = sadd.s32 %s169, 1
      %p173 = scmp.eq.s32.totalorder %s25, 3
      %p174 = scmp.ne.s32.totalorder %s169, %s171
      %p175 = scmp.eq.s32.totalorder %s25, 0
      %p176 = por %p174, %p175
      %p177 = scmp.ne.s32.totalorder %s169, %s171
      %p178 = scmp.eq.s32.totalorder %s30, 3
      %p179 = por %p177, %p178
      %p180 = scmp.ne.s32.totalorder %s171, %s172
      %p181 = scmp.eq.s32.totalorder %s30, 0
      %p182 = por %p180, %p181
      %p183 = scmp.ne.s32.totalorder %s171, %s172
      %p184 = scmp.eq.s32.totalorder %s31, 3
      %p185 = por %p183, %p184
      %p187 = scmp.ne.s32.totalorder %s172, %s186
      %p188 = scmp.eq.s32.totalorder %s31, 0
      %p189 = por %p187, %p188
      %s191 = sadd.s32 %s190, 1
      %p194 = scmp.eq.s32.totalorder %s25, 3
      %p195 = scmp.ne.s32.totalorder %s190, %s192
      %p196 = scmp.eq.s32.totalorder %s25, 0
      %p197 = por %p195, %p196
      %p198 = scmp.ne.s32.totalorder %s190, %s192
      %p199 = scmp.eq.s32.totalorder %s30, 3
      %p200 = por %p198, %p199
      %p201 = scmp.ne.s32.totalorder %s192, %s193
      %p202 = scmp.eq.s32.totalorder %s30, 0
      %p203 = por %p201, %p202
      %p204 = scmp.ne.s32.totalorder %s192, %s193
      %p205 = scmp.eq.s32.totalorder %s31, 3
      %p206 = por %p204, %p205
      %p208 = scmp.ne.s32.totalorder %s193, %s207
      %p209 = scmp.eq.s32.totalorder %s31, 0
      %p210 = por %p208, %p209
      %s211 = ssub.s32 %s25, %s32
      %p212 = scmp.eq.s32.totalorder %s211, 0
      %s214 = sadd.s32 %s213, 1
      %s215 = scalar_select %p212, %s213, %s214
      %p218 = pneg %p212
      %p219 = scmp.eq.s32.totalorder %s25, 3
      %p220 = por %p218, %p219
      %p221 = scmp.ne.s32.totalorder %s213, %s216
      %p222 = scmp.eq.s32.totalorder %s25, 0
      %p223 = por %p221, %p222
      %p224 = scmp.ne.s32.totalorder %s213, %s216
      %p225 = scmp.eq.s32.totalorder %s30, 3
      %p226 = por %p224, %p225
      %p227 = scmp.ne.s32.totalorder %s216, %s217
      %p228 = scmp.eq.s32.totalorder %s30, 0
      %p229 = por %p227, %p228
      %p230 = scmp.ne.s32.totalorder %s216, %s217
      %p231 = scmp.eq.s32.totalorder %s31, 3
      %p232 = por %p230, %p231
      %p234 = scmp.ne.s32.totalorder %s217, %s233
      %p235 = scmp.eq.s32.totalorder %s31, 0
      %p236 = por %p234, %p235
      %p237 = scmp.le.s32.totalorder 1, %s25
      %p238 = scmp.lt.s32.totalorder %s25, 5
      %p239 = pnand %p237, %p238
      %p240 = pneg %p239
      // Predicated region
      $region9: #{tpu_custom_call.1} parent=5 // pred_check
        _
      $region10: #{tpu_custom_call.1} parent=5 // pred_check_branch
        %242 = sbr.rel (%p239) target = $region12
      $region11: #{tpu_custom_call.1} parent=5 // pred_region
        %s243 = ssub.s32 %s25, 1
        // Predicated region
        $region13: #{tpu_custom_call.1} parent=11 // pred_check
          %p244 = pneg %p98
        $region14: #{tpu_custom_call.1} parent=11 // pred_check_branch
          %246 = sbr.rel (%p244) target = $region16
        $region15: #{tpu_custom_call.1} parent=11 // pred_region
          %s248 = ssub.s32 9216, 9216
          %249 = vsyncadd [#allocation7], %s248
          %s250 = sshll.u32 [#allocation8], 4
          %s251 = int_to_ptr.vmem [resolvable:$true] %s250
          %256 = dma.hbm_to_vmem [thread:$0]  %s2, 9216, %s251, [#allocation7], 64, 64, 4
        $region16: #{tpu_custom_call.1} parent=11 // pred_fallthru
          _
        // Predicated region
        $region17: #{tpu_custom_call.1} parent=11 // pred_check
          %p257 = pneg %p119
        $region18: #{tpu_custom_call.1} parent=11 // pred_check_branch
          %259 = sbr.rel (%p257) target = $region20
        $region19: #{tpu_custom_call.1} parent=11 // pred_region
          %s261 = ssub.s32 1024, 1024
          %262 = vsyncadd [#allocation10], %s261
          %s263 = sshll.u32 [#allocation9], 4
          %s264 = int_to_ptr.vmem [resolvable:$true] %s263
          %269 = dma.hbm_to_vmem [thread:$0]  %s3, 1024, %s264, [#allocation10], 64, 64, 4
        $region20: #{tpu_custom_call.1} parent=11 // pred_fallthru
          _
        // Predicated region
        $region21: #{tpu_custom_call.1} parent=11 // pred_check
          %p270 = pneg %p140
        $region22: #{tpu_custom_call.1} parent=11 // pred_check_branch
          %272 = sbr.rel (%p270) target = $region24
        $region23: #{tpu_custom_call.1} parent=11 // pred_region
          %s274 = ssub.s32 9216, 9216
          %275 = vsyncadd [#allocation10], %s274
          %s276 = sshll.u32 [#allocation11], 4
          %s277 = int_to_ptr.vmem [resolvable:$true] %s276
          %282 = dma.hbm_to_vmem [thread:$0]  %s4, 9216, %s277, [#allocation10], 64, 64, 4
        $region24: #{tpu_custom_call.1} parent=11 // pred_fallthru
          _
        // Predicated region
        $region25: #{tpu_custom_call.1} parent=11 // pred_check
          %p283 = pneg %p161
        $region26: #{tpu_custom_call.1} parent=11 // pred_check_branch
          %285 = sbr.rel (%p283) target = $region28
        $region27: #{tpu_custom_call.1} parent=11 // pred_region
          %s287 = ssub.s32 9216, 9216
          %288 = vsyncadd [#allocation13], %s287
          %s289 = sshll.u32 [#allocation12], 4
          %s290 = int_to_ptr.vmem [resolvable:$true] %s289
          %295 = dma.hbm_to_vmem [thread:$0]  %s5, 9216, %s290, [#allocation13], 64, 64, 4
        $region28: #{tpu_custom_call.1} parent=11 // pred_fallthru
          _
        // Predicated region
        $region29: #{tpu_custom_call.1} parent=11 // pred_check
          %p296 = pneg %p182
        $region30: #{tpu_custom_call.1} parent=11 // pred_check_branch
          %298 = sbr.rel (%p296) target = $region32
        $region31: #{tpu_custom_call.1} parent=11 // pred_region
          %s300 = ssub.s32 1024, 1024
          %301 = vsyncadd [#allocation13], %s300
          %s302 = sshll.u32 [#allocation14], 4
          %s303 = int_to_ptr.vmem [resolvable:$true] %s302
          %308 = dma.hbm_to_vmem [thread:$0]  %s6, 1024, %s303, [#allocation13], 64, 64, 4
        $region32: #{tpu_custom_call.1} parent=11 // pred_fallthru
          _
        // Predicated region
        $region33: #{tpu_custom_call.1} parent=11 // pred_check
          %p309 = pneg %p203
        $region34: #{tpu_custom_call.1} parent=11 // pred_check_branch
          %311 = sbr.rel (%p309) target = $region36
        $region35: #{tpu_custom_call.1} parent=11 // pred_region
          _
        $region36: #{tpu_custom_call.1} parent=11 // pred_fallthru
          _
      $region12: #{tpu_custom_call.1} parent=5 // pred_fallthru
        _
      %p312 = scmp.lt.s32.totalorder %s25, 4
      // Predicated region
      $region37: #{tpu_custom_call.1} parent=5 // pred_check
        %p313 = pneg %p312
      $region38: #{tpu_custom_call.1} parent=5 // pred_check_branch
        %315 = sbr.rel (%p313) target = $region40
      $region39: #{tpu_custom_call.1} parent=5 // pred_region
        // Predicated region
        $region41: #{tpu_custom_call.1} parent=39 // pred_check
          %p316 = pneg %p45
        $region42: #{tpu_custom_call.1} parent=39 // pred_check_branch
          %318 = sbr.rel (%p316) target = $region44
        $region43: #{tpu_custom_call.1} parent=39 // pred_region
          %s319 = sand.u32 %s35, 1
          %s320 = scalar_lea.sflag [#allocation4], %s319
          %s321 = sand.u32 %s35, 1
          %s322 = smul.addr %s321, 16
          %s323 = scalar_lea.vmem [#allocation3], %s322
          %s324 = smul.u32 4, %s25
          %s326 = ssub.s32 256, 256
          %327 = vsyncadd %s320, %s326
          %s328 = smul.addr %s324, 64
          %s329 = scalar_lea.hbm %s0, %s328
          %s330 = sshll.u32 %s323, 4
          %s331 = int_to_ptr.vmem [resolvable:$true] %s330
          %336 = dma.hbm_to_vmem [thread:$0]  %s329, 256, %s331, %s320, 64, 64, 4
        $region44: #{tpu_custom_call.1} parent=39 // pred_fallthru
          _
        // Predicated region
        $region45: #{tpu_custom_call.1} parent=39 // pred_check
          %p337 = pneg %p71
        $region46: #{tpu_custom_call.1} parent=39 // pred_check_branch
          %339 = sbr.rel (%p337) target = $region48
        $region47: #{tpu_custom_call.1} parent=39 // pred_region
          %s340 = sand.u32 %s25, 1
          %s341 = scalar_lea.sflag [#allocation7], %s340
          %s342 = sand.u32 %s61, 1
          %s343 = smul.addr %s342, 16
          %s344 = scalar_lea.vmem [#allocation6], %s343
          %s345 = smul.u32 4, %s25
          %s347 = ssub.s32 256, 256
          %348 = vsyncadd %s341, %s347
          %s349 = smul.addr %s345, 64
          %s350 = scalar_lea.hbm %s1, %s349
          %s351 = sshll.u32 %s344, 4
          %s352 = int_to_ptr.vmem [resolvable:$true] %s351
          %357 = dma.hbm_to_vmem [thread:$0]  %s350, 256, %s352, %s341, 64, 64, 4
        $region48: #{tpu_custom_call.1} parent=39 // pred_fallthru
          _
      $region40: #{tpu_custom_call.1} parent=5 // pred_fallthru
        _
      %p358 = scmp.le.s32.totalorder 1, %s25
      %p359 = scmp.lt.s32.totalorder %s25, 5
      %p360 = pnand %p358, %p359
      %p361 = pneg %p360
      // Predicated region
      $region49: #{tpu_custom_call.1} parent=5 // pred_check
        _
      $region50: #{tpu_custom_call.1} parent=5 // pred_check_branch
        %363 = sbr.rel (%p360) target = $region52
      $region51: #{tpu_custom_call.1} parent=5 // pred_region
        %s364 = ssub.s32 %s25, 1
        %s365 = sand.u32 %s38, 1
        %s366 = scalar_lea.sflag [#allocation4], %s365
        %s367 = sand.u32 %s38, 1
        %s368 = smul.addr %s367, 16
        %s369 = scalar_lea.vmem [#allocation3], %s368
        // Predicated region
        $region53: #{tpu_custom_call.1} parent=51 // pred_check
          %p370 = pneg %p51
        $region54: #{tpu_custom_call.1} parent=51 // pred_check_branch
          %372 = sbr.rel (%p370) target = $region56
        $region55: #{tpu_custom_call.1} parent=51 // pred_region
          %373 = dma.done %s366, 256
        $region56: #{tpu_custom_call.1} parent=51 // pred_fallthru
          _
        %s374 = sand.u32 %s30, 1
        %s375 = scalar_lea.sflag [#allocation7], %s374
        %s376 = sand.u32 %s64, 1
        %s377 = smul.addr %s376, 16
        %s378 = scalar_lea.vmem [#allocation6], %s377
        // Predicated region
        $region57: #{tpu_custom_call.1} parent=51 // pred_check
          %p379 = pneg %p77
        $region58: #{tpu_custom_call.1} parent=51 // pred_check_branch
          %381 = sbr.rel (%p379) target = $region60
        $region59: #{tpu_custom_call.1} parent=51 // pred_region
          %382 = dma.done %s375, 256
        $region60: #{tpu_custom_call.1} parent=51 // pred_fallthru
          _
        // Predicated region
        $region61: #{tpu_custom_call.1} parent=51 // pred_check
          %p383 = pneg %p98
        $region62: #{tpu_custom_call.1} parent=51 // pred_check_branch
          %385 = sbr.rel (%p383) target = $region64
        $region63: #{tpu_custom_call.1} parent=51 // pred_region
          %386 = dma.done [#allocation7], 9216
        $region64: #{tpu_custom_call.1} parent=51 // pred_fallthru
          _
        // Predicated region
        $region65: #{tpu_custom_call.1} parent=51 // pred_check
          %p387 = pneg %p119
        $region66: #{tpu_custom_call.1} parent=51 // pred_check_branch
          %389 = sbr.rel (%p387) target = $region68
        $region67: #{tpu_custom_call.1} parent=51 // pred_region
          %390 = dma.done [#allocation10], 1024
        $region68: #{tpu_custom_call.1} parent=51 // pred_fallthru
          _
        // Predicated region
        $region69: #{tpu_custom_call.1} parent=51 // pred_check
          %p391 = pneg %p140
        $region70: #{tpu_custom_call.1} parent=51 // pred_check_branch
          %393 = sbr.rel (%p391) target = $region72
        $region71: #{tpu_custom_call.1} parent=51 // pred_region
          %394 = dma.done [#allocation10], 9216
        $region72: #{tpu_custom_call.1} parent=51 // pred_fallthru
          _
        // Predicated region
        $region73: #{tpu_custom_call.1} parent=51 // pred_check
          %p395 = pneg %p161
        $region74: #{tpu_custom_call.1} parent=51 // pred_check_branch
          %397 = sbr.rel (%p395) target = $region76
        $region75: #{tpu_custom_call.1} parent=51 // pred_region
          %398 = dma.done [#allocation13], 9216
        $region76: #{tpu_custom_call.1} parent=51 // pred_fallthru
          _
        // Predicated region
        $region77: #{tpu_custom_call.1} parent=51 // pred_check
          %p399 = pneg %p182
        $region78: #{tpu_custom_call.1} parent=51 // pred_check_branch
          %401 = sbr.rel (%p399) target = $region80
        $region79: #{tpu_custom_call.1} parent=51 // pred_region
          %402 = dma.done [#allocation13], 1024
        $region80: #{tpu_custom_call.1} parent=51 // pred_fallthru
          _
        %s403 = sand.u32 %s38, 1
        %s404 = scalar_lea.sflag [#allocation4], %s403
        %s405 = sand.u32 %s38, 1
        %s406 = smul.addr %s405, 16
        %s407 = scalar_lea.vmem [#allocation3], %s406
        %p408 = pneg %p51
        %p409 = pneg %p48
        %s410 = sand.u32 %s30, 1
        %s411 = scalar_lea.sflag [#allocation7], %s410
        %s412 = sand.u32 %s64, 1
        %s413 = smul.addr %s412, 16
        %s414 = scalar_lea.vmem [#allocation6], %s413
        %p415 = pneg %p77
        %p416 = pneg %p74
        %p417 = pneg %p98
        %p418 = pneg %p95
        %p419 = pneg %p119
        %p420 = pneg %p116
        %p421 = pneg %p140
        %p422 = pneg %p137
        %p423 = pneg %p161
        %p424 = pneg %p158
        %p425 = pneg %p182
        %p426 = pneg %p179
        %p427 = pneg %p203
        %p428 = pneg %p200
        %p429 = pneg %p229
        %p430 = pneg %p226
        %s431 = sand.u32 %s216, 1
        %s432 = scalar_lea.sflag [#allocation5], %s431
        %s433 = sand.u32 %s216, 1
        %s434 = smul.addr %s433, 16
        %s435 = scalar_lea.vmem [#allocation15], %s434
        %s436 = smul.u32 4, %s30
        %s437 = smul.u32 4, %s30
        %s438 = smul.u32 4, %s30
        %v440 = vld [vmem:[%s7] sm:$0x7]
        %v441 = vlaneseq
        %v442 = vshrl.u32 %v441, 7
        %v443 = vadd.s32 %v442, 8
        %v444 = vadd.s32 %v442, 16
        %v445 = vadd.s32 %v442, 24
        %vm446 = vcmp.lt.s32.totalorder %v442, 0
        %v447 = vsub.s32 0, %v442
        %v448 = vsel %vm446, %v447, %v442
        %v449 = vshrl.u32 %v448, 4
        %v450 = vand.u32 %v448, 15
        %v451 = vsub.s32 0, %v450
        %v452 = vsel %vm446, %v451, %v450
        %vm453 = vcmp.lt.s32.totalorder %v443, 0
        %v454 = vsub.s32 0, %v443
        %v455 = vsel %vm453, %v454, %v443
        %v456 = vshrl.u32 %v455, 4
        %v457 = vand.u32 %v455, 15
        %v458 = vsub.s32 0, %v457
        %v459 = vsel %vm453, %v458, %v457
        %vm460 = vcmp.lt.s32.totalorder %v444, 0
        %v461 = vsub.s32 0, %v444
        %v462 = vsel %vm460, %v461, %v444
        %v463 = vshrl.u32 %v462, 4
        %v464 = vand.u32 %v462, 15
        %v465 = vsub.s32 0, %v464
        %v466 = vsel %vm460, %v465, %v464
        %vm467 = vcmp.lt.s32.totalorder %v445, 0
        %v468 = vsub.s32 0, %v445
        %v469 = vsel %vm467, %v468, %v445
        %v470 = vshrl.u32 %v469, 4
        %v471 = vand.u32 %v469, 15
        %v472 = vsub.s32 0, %v471
        %v473 = vsel %vm467, %v472, %v471
        %vm474 = vcmp.ne.s32.totalorder %v452, 0
        %vm475 = vcmp.ne.s32.totalorder %v459, 0
        %vm476 = vcmp.ne.s32.totalorder %v466, 0
        %vm477 = vcmp.ne.s32.totalorder %v473, 0
        %vm478 = vcmp.lt.s32.totalorder %v452, 0
        %vm479 = vcmp.lt.s32.totalorder %v459, 0
        %vm480 = vcmp.lt.s32.totalorder %v466, 0
        %vm481 = vcmp.lt.s32.totalorder %v473, 0
        %vm482 = vmand %vm478, %vm474
        %vm483 = vmand %vm479, %vm475
        %vm484 = vmand %vm480, %vm476
        %vm485 = vmand %vm481, %vm477
        %v486 = vadd.s32 %v452, 16
        %v487 = vadd.s32 %v459, 16
        %v488 = vadd.s32 %v466, 16
        %v489 = vadd.s32 %v473, 16
        %v490 = vsel %vm482, %v486, %v452
        %v491 = vsel %vm483, %v487, %v459
        %v492 = vsel %vm484, %v488, %v466
        %v493 = vsel %vm485, %v489, %v473
        %v494 = vlaneseq
        %v495 = vand.u32 %v494, 127
        %vm496 = vcmp.ge.s32.totalorder %v490, 1
        %vm497 = vcmp.ge.s32.totalorder %v491, 1
        %vm498 = vcmp.ge.s32.totalorder %v492, 1
        %vm499 = vcmp.ge.s32.totalorder %v493, 1
        %vm500 = vcmp.lt.s32.totalorder %v490, 15
        %vm501 = vcmp.lt.s32.totalorder %v491, 15
        %vm502 = vcmp.lt.s32.totalorder %v492, 15
        %vm503 = vcmp.lt.s32.totalorder %v493, 15
        %vm504 = vcmp.ge.s32.totalorder %v495, 8
        %vm505 = vcmp.lt.s32.totalorder %v495, 120
        %v506 = vld [vmem:[%s378] sm:$0xf]
        %v507 = vld [vmem:[%s378 + $0x4] sm:$0xf]
        %v508 = vld [vmem:[%s378 + $0x8] sm:$0xf]
        %v509 = vld [vmem:[%s378 + $0xc] sm:$0xf]
        %v510 = vunpack.c.l.bf16 %v506
        %v511 = vunpack.c.l.bf16 %v507
        %v512 = vunpack.c.l.bf16 %v508
        %v513 = vunpack.c.l.bf16 %v509
        %v514 = vrot.slane %v510, 7
        %v515 = vrot.slane %v511, 7
        %v516 = vrot.slane %v512, 7
        %v517 = vrot.slane %v513, 7
        %vm518 = vcmp.lt.s32.totalorder %v442, 1
        %v519 = vsel %vm518, %v516, %v517
        %v520 = vsel %vm518, %v515, %v516
        %v521 = vsel %vm518, %v514, %v515
        %v522 = vsel %vm518, %v517, %v514
        %v523 = vsel %vm496, %v522, 0.0
        %v524 = vsel %vm497, %v521, 0.0
        %v525 = vsel %vm498, %v520, 0.0
        %v526 = vsel %vm499, %v519, 0.0
        %527 = vrot.lane.b32.xlu0 %v523, 8
        %v528 = vpop.permute.xlu0 %527
        %529 = vrot.lane.b32.xlu0 %v524, 8
        %v530 = vpop.permute.xlu0 %529
        %531 = vrot.lane.b32.xlu0 %v525, 8
        %v532 = vpop.permute.xlu0 %531
        %533 = vrot.lane.b32.xlu0 %v526, 8
        %v534 = vpop.permute.xlu0 %533
        %v535 = vsel %vm504, %v528, 0.0
        %v536 = vsel %vm504, %v530, 0.0
        %v537 = vsel %vm504, %v532, 0.0
        %v538 = vsel %vm504, %v534, 0.0
        %v539 = vpack.c.bf16 %v536, %v535
        %v540 = vpack.c.bf16 %v538, %v537
        %541 = vst [vmem:[#allocation2] sm:$0xff] %v539
        %542 = vst [vmem:[#allocation2 + $0x48] sm:$0xff] %v540
        %v543 = vpack.c.bf16 %v524, %v523
        %v544 = vpack.c.bf16 %v526, %v525
        %545 = vst [vmem:[#allocation2 + $0x8] sm:$0xff] %v543
        %546 = vst [vmem:[#allocation2 + $0x50] sm:$0xff] %v544
        %547 = vrot.lane.b32.xlu0 %v523, 120
        %v548 = vpop.permute.xlu0 %547
        %549 = vrot.lane.b32.xlu0 %v524, 120
        %v550 = vpop.permute.xlu0 %549
        %551 = vrot.lane.b32.xlu0 %v525, 120
        %v552 = vpop.permute.xlu0 %551
        %553 = vrot.lane.b32.xlu0 %v526, 120
        %v554 = vpop.permute.xlu0 %553
        %v555 = vsel %vm505, %v548, 0.0
        %v556 = vsel %vm505, %v550, 0.0
        %v557 = vsel %vm505, %v552, 0.0
        %v558 = vsel %vm505, %v554, 0.0
        %v559 = vpack.c.bf16 %v556, %v555
        %v560 = vpack.c.bf16 %v558, %v557
        %561 = vst [vmem:[#allocation2 + $0x10] sm:$0xff] %v559
        %562 = vst [vmem:[#allocation2 + $0x58] sm:$0xff] %v560
        %563 = vrot.lane.b32.xlu0 %v510, 8
        %v564 = vpop.permute.xlu0 %563
        %565 = vrot.lane.b32.xlu0 %v511, 8
        %v566 = vpop.permute.xlu0 %565
        %567 = vrot.lane.b32.xlu0 %v512, 8
        %v568 = vpop.permute.xlu0 %567
        %569 = vrot.lane.b32.xlu0 %v513, 8
        %v570 = vpop.permute.xlu0 %569
        %v571 = vsel %vm504, %v564, 0.0
        %v572 = vsel %vm504, %v566, 0.0
        %v573 = vsel %vm504, %v568, 0.0
        %v574 = vsel %vm504, %v570, 0.0
        %v575 = vpack.c.bf16 %v572, %v571
        %v576 = vpack.c.bf16 %v574, %v573
        %577 = vst [vmem:[#allocation2 + $0x18] sm:$0xff] %v575
        %578 = vst [vmem:[#allocation2 + $0x60] sm:$0xff] %v576
        %v583 = vunpack.c.l.b16 %v506
        %v584 = vunpack.c.l.b16 %v507
        %v585 = vunpack.c.l.b16 %v508
        %v586 = vunpack.c.l.b16 %v509
        %v587 = vpack.c.b16 %v584, %v583
        %v588 = vpack.c.b16 %v586, %v585
        %591 = vst [vmem:[#allocation2 + $0x20] sm:$0xff] %v587
        %592 = vst [vmem:[#allocation2 + $0x68] sm:$0xff] %v588
        %593 = vrot.lane.b32.xlu0 %v510, 120
        %v594 = vpop.permute.xlu0 %593
        %595 = vrot.lane.b32.xlu0 %v511, 120
        %v596 = vpop.permute.xlu0 %595
        %597 = vrot.lane.b32.xlu0 %v512, 120
        %v598 = vpop.permute.xlu0 %597
        %599 = vrot.lane.b32.xlu0 %v513, 120
        %v600 = vpop.permute.xlu0 %599
        %v601 = vsel %vm505, %v594, 0.0
        %v602 = vsel %vm505, %v596, 0.0
        %v603 = vsel %vm505, %v598, 0.0
        %v604 = vsel %vm505, %v600, 0.0
        %v605 = vpack.c.bf16 %v602, %v601
        %v606 = vpack.c.bf16 %v604, %v603
        %607 = vst [vmem:[#allocation2 + $0x28] sm:$0xff] %v605
        %608 = vst [vmem:[#allocation2 + $0x70] sm:$0xff] %v606
        %v609 = vrot.slane %v510, 1
        %v610 = vrot.slane %v511, 1
        %v611 = vrot.slane %v512, 1
        %v612 = vrot.slane %v513, 1
        %vm613 = vcmp.lt.s32.totalorder %v442, 7
        %v614 = vsel %vm613, %v611, %v612
        %v615 = vsel %vm613, %v610, %v611
        %v616 = vsel %vm613, %v609, %v610
        %v617 = vsel %vm613, %v612, %v609
        %v618 = vsel %vm500, %v616, 0.0
        %v619 = vsel %vm501, %v615, 0.0
        %v620 = vsel %vm502, %v614, 0.0
        %v621 = vsel %vm503, %v617, 0.0
        %622 = vrot.lane.b32.xlu0 %v618, 8
        %v623 = vpop.permute.xlu0 %622
        %624 = vrot.lane.b32.xlu0 %v619, 8
        %v625 = vpop.permute.xlu0 %624
        %626 = vrot.lane.b32.xlu0 %v620, 8
        %v627 = vpop.permute.xlu0 %626
        %628 = vrot.lane.b32.xlu0 %v621, 8
        %v629 = vpop.permute.xlu0 %628
        %v630 = vsel %vm504, %v623, 0.0
        %v631 = vsel %vm504, %v625, 0.0
        %v632 = vsel %vm504, %v627, 0.0
        %v633 = vsel %vm504, %v629, 0.0
        %v634 = vpack.c.bf16 %v631, %v630
        %v635 = vpack.c.bf16 %v633, %v632
        %636 = vst [vmem:[#allocation2 + $0x30] sm:$0xff] %v634
        %637 = vst [vmem:[#allocation2 + $0x78] sm:$0xff] %v635
        %v638 = vpack.c.bf16 %v619, %v618
        %v639 = vpack.c.bf16 %v621, %v620
        %640 = vst [vmem:[#allocation2 + $0x38] sm:$0xff] %v638
        %641 = vst [vmem:[#allocation2 + $0x80] sm:$0xff] %v639
        %642 = vrot.lane.b32.xlu0 %v618, 120
        %v643 = vpop.permute.xlu0 %642
        %644 = vrot.lane.b32.xlu0 %v619, 120
        %v645 = vpop.permute.xlu0 %644
        %646 = vrot.lane.b32.xlu0 %v620, 120
        %v647 = vpop.permute.xlu0 %646
        %648 = vrot.lane.b32.xlu0 %v621, 120
        %v649 = vpop.permute.xlu0 %648
        %v650 = vsel %vm505, %v643, 0.0
        %v651 = vsel %vm505, %v645, 0.0
        %v652 = vsel %vm505, %v647, 0.0
        %v653 = vsel %vm505, %v649, 0.0
        %v654 = vpack.c.bf16 %v651, %v650
        %v655 = vpack.c.bf16 %v653, %v652
        %656 = vst [vmem:[#allocation2 + $0x40] sm:$0xff] %v654
        %657 = vst [vmem:[#allocation2 + $0x88] sm:$0xff] %v655
        %v658 = vld [vmem:[#allocation2] sm:$0xff]
        %v659 = vld [vmem:[#allocation2 + $0x8] sm:$0xff]
        %v660 = vld [vmem:[#allocation2 + $0x10] sm:$0xff]
        %v661 = vld [vmem:[#allocation2 + $0x18] sm:$0xff]
        %v662 = vld [vmem:[#allocation2 + $0x20] sm:$0xff]
        %v663 = vld [vmem:[#allocation2 + $0x28] sm:$0xff]
        %v664 = vld [vmem:[#allocation2 + $0x30] sm:$0xff]
        %v665 = vld [vmem:[#allocation2 + $0x38] sm:$0xff]
        %v666 = vld [vmem:[#allocation2 + $0x40] sm:$0xff]
        %v667 = vld [vmem:[#allocation2 + $0x48] sm:$0xff]
        %v668 = vld [vmem:[#allocation2 + $0x50] sm:$0xff]
        %v669 = vld [vmem:[#allocation2 + $0x58] sm:$0xff]
        %v670 = vld [vmem:[#allocation2 + $0x60] sm:$0xff]
        %v671 = vld [vmem:[#allocation2 + $0x68] sm:$0xff]
        %v672 = vld [vmem:[#allocation2 + $0x70] sm:$0xff]
        %v673 = vld [vmem:[#allocation2 + $0x78] sm:$0xff]
        %v674 = vld [vmem:[#allocation2 + $0x80] sm:$0xff]
        %v675 = vld [vmem:[#allocation2 + $0x88] sm:$0xff]
        %v676 = vld [vmem:[#allocation8] sm:$0xf]
        %v677 = vld [vmem:[#allocation8 + $0x4] sm:$0xf]
        %v678 = vld [vmem:[#allocation8 + $0x8] sm:$0xf]
        %v679 = vld [vmem:[#allocation8 + $0xc] sm:$0xf]
        %v680 = vld [vmem:[#allocation8 + $0x10] sm:$0xf]
        %v681 = vld [vmem:[#allocation8 + $0x14] sm:$0xf]
        %v682 = vld [vmem:[#allocation8 + $0x18] sm:$0xf]
        %v683 = vld [vmem:[#allocation8 + $0x1c] sm:$0xf]
        %v684 = vld [vmem:[#allocation8 + $0x20] sm:$0xf]
        %v685 = vld [vmem:[#allocation8 + $0x24] sm:$0xf]
        %v686 = vld [vmem:[#allocation8 + $0x28] sm:$0xf]
        %v687 = vld [vmem:[#allocation8 + $0x2c] sm:$0xf]
        %v688 = vld [vmem:[#allocation8 + $0x30] sm:$0xf]
        %v689 = vld [vmem:[#allocation8 + $0x34] sm:$0xf]
        %v690 = vld [vmem:[#allocation8 + $0x38] sm:$0xf]
        %v691 = vld [vmem:[#allocation8 + $0x3c] sm:$0xf]
        %v692 = vld [vmem:[#allocation8 + $0x40] sm:$0xf]
        %v693 = vld [vmem:[#allocation8 + $0x44] sm:$0xf]
        %v694 = vld [vmem:[#allocation8 + $0x48] sm:$0xf]
        %v695 = vld [vmem:[#allocation8 + $0x4c] sm:$0xf]
        %v696 = vld [vmem:[#allocation8 + $0x50] sm:$0xf]
        %v697 = vld [vmem:[#allocation8 + $0x54] sm:$0xf]
        %v698 = vld [vmem:[#allocation8 + $0x58] sm:$0xf]
        %v699 = vld [vmem:[#allocation8 + $0x5c] sm:$0xf]
        %v700 = vld [vmem:[#allocation8 + $0x60] sm:$0xf]
        %v701 = vld [vmem:[#allocation8 + $0x64] sm:$0xf]
        %v702 = vld [vmem:[#allocation8 + $0x68] sm:$0xf]
        %v703 = vld [vmem:[#allocation8 + $0x6c] sm:$0xf]
        %v704 = vld [vmem:[#allocation8 + $0x70] sm:$0xf]
        %v705 = vld [vmem:[#allocation8 + $0x74] sm:$0xf]
        %v706 = vld [vmem:[#allocation8 + $0x78] sm:$0xf]
        %v707 = vld [vmem:[#allocation8 + $0x7c] sm:$0xf]
        %v708 = vld [vmem:[#allocation8 + $0x80] sm:$0xf]
        %v709 = vld [vmem:[#allocation8 + $0x84] sm:$0xf]
        %v710 = vld [vmem:[#allocation8 + $0x88] sm:$0xf]
        %v711 = vld [vmem:[#allocation8 + $0x8c] sm:$0xf]
        %v712 = vld [vmem:[#allocation8 + $0x90] sm:$0xf]
        %v713 = vld [vmem:[#allocation8 + $0x94] sm:$0xf]
        %v714 = vld [vmem:[#allocation8 + $0x98] sm:$0xf]
        %v715 = vld [vmem:[#allocation8 + $0x9c] sm:$0xf]
        %v716 = vld [vmem:[#allocation8 + $0xa0] sm:$0xf]
        %v717 = vld [vmem:[#allocation8 + $0xa4] sm:$0xf]
        %v718 = vld [vmem:[#allocation8 + $0xa8] sm:$0xf]
        %v719 = vld [vmem:[#allocation8 + $0xac] sm:$0xf]
        %v720 = vld [vmem:[#allocation8 + $0xb0] sm:$0xf]
        %v721 = vld [vmem:[#allocation8 + $0xb4] sm:$0xf]
        %v722 = vld [vmem:[#allocation8 + $0xb8] sm:$0xf]
        %v723 = vld [vmem:[#allocation8 + $0xbc] sm:$0xf]
        %v724 = vld [vmem:[#allocation8 + $0xc0] sm:$0xf]
        %v725 = vld [vmem:[#allocation8 + $0xc4] sm:$0xf]
        %v726 = vld [vmem:[#allocation8 + $0xc8] sm:$0xf]
        %v727 = vld [vmem:[#allocation8 + $0xcc] sm:$0xf]
        %v728 = vld [vmem:[#allocation8 + $0xd0] sm:$0xf]
        %v729 = vld [vmem:[#allocation8 + $0xd4] sm:$0xf]
        %v730 = vld [vmem:[#allocation8 + $0xd8] sm:$0xf]
        %v731 = vld [vmem:[#allocation8 + $0xdc] sm:$0xf]
        %v732 = vld [vmem:[#allocation8 + $0xe0] sm:$0xf]
        %v733 = vld [vmem:[#allocation8 + $0xe4] sm:$0xf]
        %v734 = vld [vmem:[#allocation8 + $0xe8] sm:$0xf]
        %v735 = vld [vmem:[#allocation8 + $0xec] sm:$0xf]
        %v736 = vld [vmem:[#allocation8 + $0xf0] sm:$0xf]
        %v737 = vld [vmem:[#allocation8 + $0xf4] sm:$0xf]
        %v738 = vld [vmem:[#allocation8 + $0xf8] sm:$0xf]
        %v739 = vld [vmem:[#allocation8 + $0xfc] sm:$0xf]
        %v740 = vld [vmem:[#allocation8 + $0x100] sm:$0xf]
        %v741 = vld [vmem:[#allocation8 + $0x104] sm:$0xf]
        %v742 = vld [vmem:[#allocation8 + $0x108] sm:$0xf]
        %v743 = vld [vmem:[#allocation8 + $0x10c] sm:$0xf]
        %v744 = vld [vmem:[#allocation8 + $0x110] sm:$0xf]
        %v745 = vld [vmem:[#allocation8 + $0x114] sm:$0xf]
        %v746 = vld [vmem:[#allocation8 + $0x118] sm:$0xf]
        %v747 = vld [vmem:[#allocation8 + $0x11c] sm:$0xf]
        %v748 = vld [vmem:[#allocation8 + $0x120] sm:$0xf]
        %v749 = vld [vmem:[#allocation8 + $0x124] sm:$0xf]
        %v750 = vld [vmem:[#allocation8 + $0x128] sm:$0xf]
        %v751 = vld [vmem:[#allocation8 + $0x12c] sm:$0xf]
        %v752 = vld [vmem:[#allocation8 + $0x130] sm:$0xf]
        %v753 = vld [vmem:[#allocation8 + $0x134] sm:$0xf]
        %v754 = vld [vmem:[#allocation8 + $0x138] sm:$0xf]
        %v755 = vld [vmem:[#allocation8 + $0x13c] sm:$0xf]
        %v756 = vld [vmem:[#allocation8 + $0x140] sm:$0xf]
        %v757 = vld [vmem:[#allocation8 + $0x144] sm:$0xf]
        %v758 = vld [vmem:[#allocation8 + $0x148] sm:$0xf]
        %v759 = vld [vmem:[#allocation8 + $0x14c] sm:$0xf]
        %v760 = vld [vmem:[#allocation8 + $0x150] sm:$0xf]
        %v761 = vld [vmem:[#allocation8 + $0x154] sm:$0xf]
        %v762 = vld [vmem:[#allocation8 + $0x158] sm:$0xf]
        %v763 = vld [vmem:[#allocation8 + $0x15c] sm:$0xf]
        %v764 = vld [vmem:[#allocation8 + $0x160] sm:$0xf]
        %v765 = vld [vmem:[#allocation8 + $0x164] sm:$0xf]
        %v766 = vld [vmem:[#allocation8 + $0x168] sm:$0xf]
        %v767 = vld [vmem:[#allocation8 + $0x16c] sm:$0xf]
        %v768 = vld [vmem:[#allocation8 + $0x170] sm:$0xf]
        %v769 = vld [vmem:[#allocation8 + $0x174] sm:$0xf]
        %v770 = vld [vmem:[#allocation8 + $0x178] sm:$0xf]
        %v771 = vld [vmem:[#allocation8 + $0x17c] sm:$0xf]
        %v772 = vld [vmem:[#allocation8 + $0x180] sm:$0xf]
        %v773 = vld [vmem:[#allocation8 + $0x184] sm:$0xf]
        %v774 = vld [vmem:[#allocation8 + $0x188] sm:$0xf]
        %v775 = vld [vmem:[#allocation8 + $0x18c] sm:$0xf]
        %v776 = vld [vmem:[#allocation8 + $0x190] sm:$0xf]
        %v777 = vld [vmem:[#allocation8 + $0x194] sm:$0xf]
        %v778 = vld [vmem:[#allocation8 + $0x198] sm:$0xf]
        %v779 = vld [vmem:[#allocation8 + $0x19c] sm:$0xf]
        %v780 = vld [vmem:[#allocation8 + $0x1a0] sm:$0xf]
        %v781 = vld [vmem:[#allocation8 + $0x1a4] sm:$0xf]
        %v782 = vld [vmem:[#allocation8 + $0x1a8] sm:$0xf]
        %v783 = vld [vmem:[#allocation8 + $0x1ac] sm:$0xf]
        %v784 = vld [vmem:[#allocation8 + $0x1b0] sm:$0xf]
        %v785 = vld [vmem:[#allocation8 + $0x1b4] sm:$0xf]
        %v786 = vld [vmem:[#allocation8 + $0x1b8] sm:$0xf]
        %v787 = vld [vmem:[#allocation8 + $0x1bc] sm:$0xf]
        %v788 = vld [vmem:[#allocation8 + $0x1c0] sm:$0xf]
        %v789 = vld [vmem:[#allocation8 + $0x1c4] sm:$0xf]
        %v790 = vld [vmem:[#allocation8 + $0x1c8] sm:$0xf]
        %v791 = vld [vmem:[#allocation8 + $0x1cc] sm:$0xf]
        %v792 = vld [vmem:[#allocation8 + $0x1d0] sm:$0xf]
        %v793 = vld [vmem:[#allocation8 + $0x1d4] sm:$0xf]
        %v794 = vld [vmem:[#allocation8 + $0x1d8] sm:$0xf]
        %v795 = vld [vmem:[#allocation8 + $0x1dc] sm:$0xf]
        %v796 = vld [vmem:[#allocation8 + $0x1e0] sm:$0xf]
        %v797 = vld [vmem:[#allocation8 + $0x1e4] sm:$0xf]
        %v798 = vld [vmem:[#allocation8 + $0x1e8] sm:$0xf]
        %v799 = vld [vmem:[#allocation8 + $0x1ec] sm:$0xf]
        %v800 = vld [vmem:[#allocation8 + $0x1f0] sm:$0xf]
        %v801 = vld [vmem:[#allocation8 + $0x1f4] sm:$0xf]
        %v802 = vld [vmem:[#allocation8 + $0x1f8] sm:$0xf]
        %v803 = vld [vmem:[#allocation8 + $0x1fc] sm:$0xf]
        %v804 = vld [vmem:[#allocation8 + $0x200] sm:$0xf]
        %v805 = vld [vmem:[#allocation8 + $0x204] sm:$0xf]
        %v806 = vld [vmem:[#allocation8 + $0x208] sm:$0xf]
        %v807 = vld [vmem:[#allocation8 + $0x20c] sm:$0xf]
        %v808 = vld [vmem:[#allocation8 + $0x210] sm:$0xf]
        %v809 = vld [vmem:[#allocation8 + $0x214] sm:$0xf]
        %v810 = vld [vmem:[#allocation8 + $0x218] sm:$0xf]
        %v811 = vld [vmem:[#allocation8 + $0x21c] sm:$0xf]
        %v812 = vld [vmem:[#allocation8 + $0x220] sm:$0xf]
        %v813 = vld [vmem:[#allocation8 + $0x224] sm:$0xf]
        %v814 = vld [vmem:[#allocation8 + $0x228] sm:$0xf]
        %v815 = vld [vmem:[#allocation8 + $0x22c] sm:$0xf]
        %v816 = vld [vmem:[#allocation8 + $0x230] sm:$0xf]
        %v817 = vld [vmem:[#allocation8 + $0x234] sm:$0xf]
        %v818 = vld [vmem:[#allocation8 + $0x238] sm:$0xf]
        %v819 = vld [vmem:[#allocation8 + $0x23c] sm:$0xf]
        %v820 = vlaneseq
        %v821 = vshrl.u32 %v820, 7
        %v822 = vsub.s32 0, %v821
        %v823 = vrot.slane %v440, %v822
        %v968 = vunpack.c.l.b16 %v676
        %v969 = vunpack.c.l.b16 %v677
        %v970 = vunpack.c.l.b16 %v678
        %v971 = vunpack.c.l.b16 %v679
        %v972 = vunpack.c.l.b16 %v680
        %v973 = vunpack.c.l.b16 %v681
        %v974 = vunpack.c.l.b16 %v682
        %v975 = vunpack.c.l.b16 %v683
        %v976 = vunpack.c.l.b16 %v684
        %v977 = vunpack.c.l.b16 %v685
        %v978 = vunpack.c.l.b16 %v686
        %v979 = vunpack.c.l.b16 %v687
        %v980 = vunpack.c.l.b16 %v688
        %v981 = vunpack.c.l.b16 %v689
        %v982 = vunpack.c.l.b16 %v690
        %v983 = vunpack.c.l.b16 %v691
        %v984 = vunpack.c.l.b16 %v692
        %v985 = vunpack.c.l.b16 %v693
        %v986 = vunpack.c.l.b16 %v694
        %v987 = vunpack.c.l.b16 %v695
        %v988 = vunpack.c.l.b16 %v696
        %v989 = vunpack.c.l.b16 %v697
        %v990 = vunpack.c.l.b16 %v698
        %v991 = vunpack.c.l.b16 %v699
        %v992 = vunpack.c.l.b16 %v700
        %v993 = vunpack.c.l.b16 %v701
        %v994 = vunpack.c.l.b16 %v702
        %v995 = vunpack.c.l.b16 %v703
        %v996 = vunpack.c.l.b16 %v704
        %v997 = vunpack.c.l.b16 %v705
        %v998 = vunpack.c.l.b16 %v706
        %v999 = vunpack.c.l.b16 %v707
        %v1000 = vunpack.c.l.b16 %v708
        %v1001 = vunpack.c.l.b16 %v709
        %v1002 = vunpack.c.l.b16 %v710
        %v1003 = vunpack.c.l.b16 %v711
        %v1004 = vunpack.c.l.b16 %v712
        %v1005 = vunpack.c.l.b16 %v713
        %v1006 = vunpack.c.l.b16 %v714
        %v1007 = vunpack.c.l.b16 %v715
        %v1008 = vunpack.c.l.b16 %v716
        %v1009 = vunpack.c.l.b16 %v717
        %v1010 = vunpack.c.l.b16 %v718
        %v1011 = vunpack.c.l.b16 %v719
        %v1012 = vunpack.c.l.b16 %v720
        %v1013 = vunpack.c.l.b16 %v721
        %v1014 = vunpack.c.l.b16 %v722
        %v1015 = vunpack.c.l.b16 %v723
        %v1016 = vunpack.c.l.b16 %v724
        %v1017 = vunpack.c.l.b16 %v725
        %v1018 = vunpack.c.l.b16 %v726
        %v1019 = vunpack.c.l.b16 %v727
        %v1020 = vunpack.c.l.b16 %v728
        %v1021 = vunpack.c.l.b16 %v729
        %v1022 = vunpack.c.l.b16 %v730
        %v1023 = vunpack.c.l.b16 %v731
        %v1024 = vunpack.c.l.b16 %v732
        %v1025 = vunpack.c.l.b16 %v733
        %v1026 = vunpack.c.l.b16 %v734
        %v1027 = vunpack.c.l.b16 %v735
        %v1028 = vunpack.c.l.b16 %v736
        %v1029 = vunpack.c.l.b16 %v737
        %v1030 = vunpack.c.l.b16 %v738
        %v1031 = vunpack.c.l.b16 %v739
        %v1032 = vunpack.c.l.b16 %v740
        %v1033 = vunpack.c.l.b16 %v741
        %v1034 = vunpack.c.l.b16 %v742
        %v1035 = vunpack.c.l.b16 %v743
        %v1036 = vunpack.c.l.b16 %v744
        %v1037 = vunpack.c.l.b16 %v745
        %v1038 = vunpack.c.l.b16 %v746
        %v1039 = vunpack.c.l.b16 %v747
        %v1040 = vunpack.c.l.b16 %v748
        %v1041 = vunpack.c.l.b16 %v749
        %v1042 = vunpack.c.l.b16 %v750
        %v1043 = vunpack.c.l.b16 %v751
        %v1044 = vunpack.c.l.b16 %v752
        %v1045 = vunpack.c.l.b16 %v753
        %v1046 = vunpack.c.l.b16 %v754
        %v1047 = vunpack.c.l.b16 %v755
        %v1048 = vunpack.c.l.b16 %v756
        %v1049 = vunpack.c.l.b16 %v757
        %v1050 = vunpack.c.l.b16 %v758
        %v1051 = vunpack.c.l.b16 %v759
        %v1052 = vunpack.c.l.b16 %v760
        %v1053 = vunpack.c.l.b16 %v761
        %v1054 = vunpack.c.l.b16 %v762
        %v1055 = vunpack.c.l.b16 %v763
        %v1056 = vunpack.c.l.b16 %v764
        %v1057 = vunpack.c.l.b16 %v765
        %v1058 = vunpack.c.l.b16 %v766
        %v1059 = vunpack.c.l.b16 %v767
        %v1060 = vunpack.c.l.b16 %v768
        %v1061 = vunpack.c.l.b16 %v769
        %v1062 = vunpack.c.l.b16 %v770
        %v1063 = vunpack.c.l.b16 %v771
        %v1064 = vunpack.c.l.b16 %v772
        %v1065 = vunpack.c.l.b16 %v773
        %v1066 = vunpack.c.l.b16 %v774
        %v1067 = vunpack.c.l.b16 %v775
        %v1068 = vunpack.c.l.b16 %v776
        %v1069 = vunpack.c.l.b16 %v777
        %v1070 = vunpack.c.l.b16 %v778
        %v1071 = vunpack.c.l.b16 %v779
        %v1072 = vunpack.c.l.b16 %v780
        %v1073 = vunpack.c.l.b16 %v781
        %v1074 = vunpack.c.l.b16 %v782
        %v1075 = vunpack.c.l.b16 %v783
        %v1076 = vunpack.c.l.b16 %v784
        %v1077 = vunpack.c.l.b16 %v785
        %v1078 = vunpack.c.l.b16 %v786
        %v1079 = vunpack.c.l.b16 %v787
        %v1080 = vunpack.c.l.b16 %v788
        %v1081 = vunpack.c.l.b16 %v789
        %v1082 = vunpack.c.l.b16 %v790
        %v1083 = vunpack.c.l.b16 %v791
        %v1084 = vunpack.c.l.b16 %v792
        %v1085 = vunpack.c.l.b16 %v793
        %v1086 = vunpack.c.l.b16 %v794
        %v1087 = vunpack.c.l.b16 %v795
        %v1088 = vunpack.c.l.b16 %v796
        %v1089 = vunpack.c.l.b16 %v797
        %v1090 = vunpack.c.l.b16 %v798
        %v1091 = vunpack.c.l.b16 %v799
        %v1092 = vunpack.c.l.b16 %v800
        %v1093 = vunpack.c.l.b16 %v801
        %v1094 = vunpack.c.l.b16 %v802
        %v1095 = vunpack.c.l.b16 %v803
        %v1096 = vunpack.c.l.b16 %v804
        %v1097 = vunpack.c.l.b16 %v805
        %v1098 = vunpack.c.l.b16 %v806
        %v1099 = vunpack.c.l.b16 %v807
        %v1100 = vunpack.c.l.b16 %v808
        %v1101 = vunpack.c.l.b16 %v809
        %v1102 = vunpack.c.l.b16 %v810
        %v1103 = vunpack.c.l.b16 %v811
        %v1104 = vunpack.c.l.b16 %v812
        %v1105 = vunpack.c.l.b16 %v813
        %v1106 = vunpack.c.l.b16 %v814
        %v1107 = vunpack.c.l.b16 %v815
        %v1108 = vunpack.c.l.b16 %v816
        %v1109 = vunpack.c.l.b16 %v817
        %v1110 = vunpack.c.l.b16 %v818
        %v1111 = vunpack.c.l.b16 %v819
        %v1112 = vpack.c.b16 %v969, %v968
        %v1113 = vpack.c.b16 %v971, %v970
        %v1114 = vpack.c.b16 %v973, %v972
        %v1115 = vpack.c.b16 %v975, %v974
        %v1116 = vpack.c.b16 %v977, %v976
        %v1117 = vpack.c.b16 %v979, %v978
        %v1118 = vpack.c.b16 %v981, %v980
        %v1119 = vpack.c.b16 %v983, %v982
        %v1120 = vpack.c.b16 %v985, %v984
        %v1121 = vpack.c.b16 %v987, %v986
        %v1122 = vpack.c.b16 %v989, %v988
        %v1123 = vpack.c.b16 %v991, %v990
        %v1124 = vpack.c.b16 %v993, %v992
        %v1125 = vpack.c.b16 %v995, %v994
        %v1126 = vpack.c.b16 %v997, %v996
        %v1127 = vpack.c.b16 %v999, %v998
        %v1128 = vpack.c.b16 %v1001, %v1000
        %v1129 = vpack.c.b16 %v1003, %v1002
        %v1130 = vpack.c.b16 %v1005, %v1004
        %v1131 = vpack.c.b16 %v1007, %v1006
        %v1132 = vpack.c.b16 %v1009, %v1008
        %v1133 = vpack.c.b16 %v1011, %v1010
        %v1134 = vpack.c.b16 %v1013, %v1012
        %v1135 = vpack.c.b16 %v1015, %v1014
        %v1136 = vpack.c.b16 %v1017, %v1016
        %v1137 = vpack.c.b16 %v1019, %v1018
        %v1138 = vpack.c.b16 %v1021, %v1020
        %v1139 = vpack.c.b16 %v1023, %v1022
        %v1140 = vpack.c.b16 %v1025, %v1024
        %v1141 = vpack.c.b16 %v1027, %v1026
        %v1142 = vpack.c.b16 %v1029, %v1028
        %v1143 = vpack.c.b16 %v1031, %v1030
        %v1144 = vpack.c.b16 %v1033, %v1032
        %v1145 = vpack.c.b16 %v1035, %v1034
        %v1146 = vpack.c.b16 %v1037, %v1036
        %v1147 = vpack.c.b16 %v1039, %v1038
        %v1148 = vpack.c.b16 %v1041, %v1040
        %v1149 = vpack.c.b16 %v1043, %v1042
        %v1150 = vpack.c.b16 %v1045, %v1044
        %v1151 = vpack.c.b16 %v1047, %v1046
        %v1152 = vpack.c.b16 %v1049, %v1048
        %v1153 = vpack.c.b16 %v1051, %v1050
        %v1154 = vpack.c.b16 %v1053, %v1052
        %v1155 = vpack.c.b16 %v1055, %v1054
        %v1156 = vpack.c.b16 %v1057, %v1056
        %v1157 = vpack.c.b16 %v1059, %v1058
        %v1158 = vpack.c.b16 %v1061, %v1060
        %v1159 = vpack.c.b16 %v1063, %v1062
        %v1160 = vpack.c.b16 %v1065, %v1064
        %v1161 = vpack.c.b16 %v1067, %v1066
        %v1162 = vpack.c.b16 %v1069, %v1068
        %v1163 = vpack.c.b16 %v1071, %v1070
        %v1164 = vpack.c.b16 %v1073, %v1072
        %v1165 = vpack.c.b16 %v1075, %v1074
        %v1166 = vpack.c.b16 %v1077, %v1076
        %v1167 = vpack.c.b16 %v1079, %v1078
        %v1168 = vpack.c.b16 %v1081, %v1080
        %v1169 = vpack.c.b16 %v1083, %v1082
        %v1170 = vpack.c.b16 %v1085, %v1084
        %v1171 = vpack.c.b16 %v1087, %v1086
        %v1172 = vpack.c.b16 %v1089, %v1088
        %v1173 = vpack.c.b16 %v1091, %v1090
        %v1174 = vpack.c.b16 %v1093, %v1092
        %v1175 = vpack.c.b16 %v1095, %v1094
        %v1176 = vpack.c.b16 %v1097, %v1096
        %v1177 = vpack.c.b16 %v1099, %v1098
        %v1178 = vpack.c.b16 %v1101, %v1100
        %v1179 = vpack.c.b16 %v1103, %v1102
        %v1180 = vpack.c.b16 %v1105, %v1104
        %v1181 = vpack.c.b16 %v1107, %v1106
        %v1182 = vpack.c.b16 %v1109, %v1108
        %v1183 = vpack.c.b16 %v1111, %v1110
        %1256 = vmatprep.subr.bf16.mxu0 0
        %1257 = vmatpush1.bf16.msra.mxu0 %v1112
        %1258 = vmatprep.subr.bf16.mxu0 0
        %1259 = vmatpush1.bf16.msra.mxu0 %v1113
        %1260 = vmatprep.subr.bf16.mxu0 0
        %1261 = vmatpush1.bf16.msra.mxu0 %v1114
        %1262 = vmatprep.subr.bf16.mxu0 0
        %1263 = vmatpush1.bf16.msra.mxu0 %v1115
        %1264 = vmatprep.subr.bf16.mxu0 0
        %1265 = vmatpush1.bf16.msra.mxu0 %v1116
        %1266 = vmatprep.subr.bf16.mxu0 0
        %1267 = vmatpush1.bf16.msra.mxu0 %v1117
        %1268 = vmatprep.subr.bf16.mxu0 0
        %1269 = vmatpush1.bf16.msra.mxu0 %v1118
        %1270 = vmatprep.subr.bf16.mxu0 0
        %1271 = vmatpush1.bf16.msra.mxu0 %v1119
        %1272 = vmatprep.subr.bf16.mxu0 0
        %1273 = vmatpush1.bf16.msra.mxu0 %v1120
        %1274 = vmatprep.subr.bf16.mxu0 0
        %1275 = vmatpush1.bf16.msra.mxu0 %v1121
        %1276 = vmatprep.subr.bf16.mxu0 0
        %1277 = vmatpush1.bf16.msra.mxu0 %v1122
        %1278 = vmatprep.subr.bf16.mxu0 0
        %1279 = vmatpush1.bf16.msra.mxu0 %v1123
        %1280 = vmatprep.subr.bf16.mxu0 0
        %1281 = vmatpush1.bf16.msra.mxu0 %v1124
        %1282 = vmatprep.subr.bf16.mxu0 0
        %1283 = vmatpush1.bf16.msra.mxu0 %v1125
        %1284 = vmatprep.subr.bf16.mxu0 0
        %1285 = vmatpush1.bf16.msra.mxu0 %v1126
        %1286 = vmatprep.subr.bf16.mxu0 0
        %1287 = vmatpush1.bf16.msra.mxu0 %v1127
        %1288 = vmatprep.mubr.bf16.mxu0 %v659
        %1289 = vmatmul.mubr.bf16.gmra.mrb[0].mxu0 %v658
        %v1290 = vpop.f32.mrb[0].mxu0
        %v1291 = vadd.f32 %v823, %v1290
        %v1292 = vpop.f32.mrb[0].mxu0
        %v1293 = vpop.f32.mrb[0].mxu0
        %v1294 = vadd.f32 %v823, %v1293
        %v1295 = vpop.f32.mrb[0].mxu0
        %1296 = vmatprep.mubr.bf16.mxu0 %v668
        %1297 = vmatmul.mubr.bf16.gmra.mrb[0].mxu0 %v667
        %v1298 = vpop.f32.mrb[0].mxu0
        %v1299 = vadd.f32 %v823, %v1298
        %v1300 = vpop.f32.mrb[0].mxu0
        %v1301 = vpop.f32.mrb[0].mxu0
        %v1302 = vadd.f32 %v823, %v1301
        %v1303 = vpop.f32.mrb[0].mxu0
        %1304 = vdwg.mxu0
        %1305 = vmatprep.subr.bf16.mxu0 0
        %1306 = vmatpush1.bf16.msra.mxu0 %v1128
        %1307 = vmatprep.subr.bf16.mxu0 0
        %1308 = vmatpush1.bf16.msra.mxu0 %v1129
        %1309 = vmatprep.subr.bf16.mxu0 0
        %1310 = vmatpush1.bf16.msra.mxu0 %v1130
        %1311 = vmatprep.subr.bf16.mxu0 0
        %1312 = vmatpush1.bf16.msra.mxu0 %v1131
        %1313 = vmatprep.subr.bf16.mxu0 0
        %1314 = vmatpush1.bf16.msra.mxu0 %v1132
        %1315 = vmatprep.subr.bf16.mxu0 0
        %1316 = vmatpush1.bf16.msra.mxu0 %v1133
        %1317 = vmatprep.subr.bf16.mxu0 0
        %1318 = vmatpush1.bf16.msra.mxu0 %v1134
        %1319 = vmatprep.subr.bf16.mxu0 0
        %1320 = vmatpush1.bf16.msra.mxu0 %v1135
        %1321 = vmatprep.subr.bf16.mxu0 0
        %1322 = vmatpush1.bf16.msra.mxu0 %v1136
        %1323 = vmatprep.subr.bf16.mxu0 0
        %1324 = vmatpush1.bf16.msra.mxu0 %v1137
        %1325 = vmatprep.subr.bf16.mxu0 0
        %1326 = vmatpush1.bf16.msra.mxu0 %v1138
        %1327 = vmatprep.subr.bf16.mxu0 0
        %1328 = vmatpush1.bf16.msra.mxu0 %v1139
        %1329 = vmatprep.subr.bf16.mxu0 0
        %1330 = vmatpush1.bf16.msra.mxu0 %v1140
        %1331 = vmatprep.subr.bf16.mxu0 0
        %1332 = vmatpush1.bf16.msra.mxu0 %v1141
        %1333 = vmatprep.subr.bf16.mxu0 0
        %1334 = vmatpush1.bf16.msra.mxu0 %v1142
        %1335 = vmatprep.subr.bf16.mxu0 0
        %1336 = vmatpush1.bf16.msra.mxu0 %v1143
        %1337 = vmatprep.mubr.bf16.mxu0 %v661
        %1338 = vmatmul.mubr.bf16.gmra.mrb[0].mxu0 %v660
        %v1339 = vpop.f32.mrb[0].mxu0
        %v1340 = vadd.f32 %v1291, %v1339
        %v1341 = vpop.f32.mrb[0].mxu0
        %v1342 = vpop.f32.mrb[0].mxu0
        %v1343 = vadd.f32 %v1294, %v1342
        %v1344 = vpop.f32.mrb[0].mxu0
        %1345 = vmatprep.mubr.bf16.mxu0 %v670
        %1346 = vmatmul.mubr.bf16.gmra.mrb[0].mxu0 %v669
        %v1347 = vpop.f32.mrb[0].mxu0
        %v1348 = vadd.f32 %v1299, %v1347
        %v1349 = vpop.f32.mrb[0].mxu0
        %v1350 = vpop.f32.mrb[0].mxu0
        %v1351 = vadd.f32 %v1302, %v1350
        %v1352 = vpop.f32.mrb[0].mxu0
        %1353 = vdwg.mxu0
        %1354 = vmatprep.subr.bf16.mxu0 0
        %1355 = vmatpush1.bf16.msra.mxu0 %v1144
        %1356 = vmatprep.subr.bf16.mxu0 0
        %1357 = vmatpush1.bf16.msra.mxu0 %v1145
        %1358 = vmatprep.subr.bf16.mxu0 0
        %1359 = vmatpush1.bf16.msra.mxu0 %v1146
        %1360 = vmatprep.subr.bf16.mxu0 0
        %1361 = vmatpush1.bf16.msra.mxu0 %v1147
        %1362 = vmatprep.subr.bf16.mxu0 0
        %1363 = vmatpush1.bf16.msra.mxu0 %v1148
        %1364 = vmatprep.subr.bf16.mxu0 0
        %1365 = vmatpush1.bf16.msra.mxu0 %v1149
        %1366 = vmatprep.subr.bf16.mxu0 0
        %1367 = vmatpush1.bf16.msra.mxu0 %v1150
        %1368 = vmatprep.subr.bf16.mxu0 0
        %1369 = vmatpush1.bf16.msra.mxu0 %v1151
        %1370 = vmatprep.subr.bf16.mxu0 0
        %1371 = vmatpush1.bf16.msra.mxu0 %v1152
        %1372 = vmatprep.subr.bf16.mxu0 0
        %1373 = vmatpush1.bf16.msra.mxu0 %v1153
        %1374 = vmatprep.subr.bf16.mxu0 0
        %1375 = vmatpush1.bf16.msra.mxu0 %v1154
        %1376 = vmatprep.subr.bf16.mxu0 0
        %1377 = vmatpush1.bf16.msra.mxu0 %v1155
        %1378 = vmatprep.subr.bf16.mxu0 0
        %1379 = vmatpush1.bf16.msra.mxu0 %v1156
        %1380 = vmatprep.subr.bf16.mxu0 0
        %1381 = vmatpush1.bf16.msra.mxu0 %v1157
        %1382 = vmatprep.subr.bf16.mxu0 0
        %1383 = vmatpush1.bf16.msra.mxu0 %v1158
        %1384 = vmatprep.subr.bf16.mxu0 0
        %1385 = vmatpush1.bf16.msra.mxu0 %v1159
        %1386 = vmatprep.mubr.bf16.mxu0 %v663
        %1387 = vmatmul.mubr.bf16.gmra.mrb[0].mxu0 %v662
        %v1388 = vpop.f32.mrb[0].mxu0
        %v1389 = vadd.f32 %v1340, %v1388
        %v1390 = vpop.f32.mrb[0].mxu0
        %v1391 = vpop.f32.mrb[0].mxu0
        %v1392 = vadd.f32 %v1343, %v1391
        %v1393 = vpop.f32.mrb[0].mxu0
        %1394 = vmatprep.mubr.bf16.mxu0 %v672
        %1395 = vmatmul.mubr.bf16.gmra.mrb[0].mxu0 %v671
        %v1396 = vpop.f32.mrb[0].mxu0
        %v1397 = vadd.f32 %v1348, %v1396
        %v1398 = vpop.f32.mrb[0].mxu0
        %v1399 = vpop.f32.mrb[0].mxu0
        %v1400 = vadd.f32 %v1351, %v1399
        %v1401 = vpop.f32.mrb[0].mxu0
        %1402 = vdwg.mxu0
        %1403 = vmatprep.subr.bf16.mxu0 0
        %1404 = vmatpush1.bf16.msra.mxu0 %v1160
        %1405 = vmatprep.subr.bf16.mxu0 0
        %1406 = vmatpush1.bf16.msra.mxu0 %v1161
        %1407 = vmatprep.subr.bf16.mxu0 0
        %1408 = vmatpush1.bf16.msra.mxu0 %v1162
        %1409 = vmatprep.subr.bf16.mxu0 0
        %1410 = vmatpush1.bf16.msra.mxu0 %v1163
        %1411 = vmatprep.subr.bf16.mxu0 0
        %1412 = vmatpush1.bf16.msra.mxu0 %v1164
        %1413 = vmatprep.subr.bf16.mxu0 0
        %1414 = vmatpush1.bf16.msra.mxu0 %v1165
        %1415 = vmatprep.subr.bf16.mxu0 0
        %1416 = vmatpush1.bf16.msra.mxu0 %v1166
        %1417 = vmatprep.subr.bf16.mxu0 0
        %1418 = vmatpush1.bf16.msra.mxu0 %v1167
        %1419 = vmatprep.subr.bf16.mxu0 0
        %1420 = vmatpush1.bf16.msra.mxu0 %v1168
        %1421 = vmatprep.subr.bf16.mxu0 0
        %1422 = vmatpush1.bf16.msra.mxu0 %v1169
        %1423 = vmatprep.subr.bf16.mxu0 0
        %1424 = vmatpush1.bf16.msra.mxu0 %v1170
        %1425 = vmatprep.subr.bf16.mxu0 0
        %1426 = vmatpush1.bf16.msra.mxu0 %v1171
        %1427 = vmatprep.subr.bf16.mxu0 0
        %1428 = vmatpush1.bf16.msra.mxu0 %v1172
        %1429 = vmatprep.subr.bf16.mxu0 0
        %1430 = vmatpush1.bf16.msra.mxu0 %v1173
        %1431 = vmatprep.subr.bf16.mxu0 0
        %1432 = vmatpush1.bf16.msra.mxu0 %v1174
        %1433 = vmatprep.subr.bf16.mxu0 0
        %1434 = vmatpush1.bf16.msra.mxu0 %v1175
        %1435 = vmatprep.mubr.bf16.mxu0 %v665
        %1436 = vmatmul.mubr.bf16.gmra.mrb[0].mxu0 %v664
        %v1437 = vpop.f32.mrb[0].mxu0
        %v1438 = vadd.f32 %v1389, %v1437
        %v1439 = vpop.f32.mrb[0].mxu0
        %v1440 = vpop.f32.mrb[0].mxu0
        %v1441 = vadd.f32 %v1392, %v1440
        %v1442 = vpop.f32.mrb[0].mxu0
        %1443 = vmatprep.mubr.bf16.mxu0 %v674
        %1444 = vmatmul.mubr.bf16.gmra.mrb[0].mxu0 %v673
        %v1445 = vpop.f32.mrb[0].mxu0
        %v1446 = vadd.f32 %v1397, %v1445
        %v1447 = vpop.f32.mrb[0].mxu0
        %v1448 = vpop.f32.mrb[0].mxu0
        %v1449 = vadd.f32 %v1400, %v1448
        %v1450 = vpop.f32.mrb[0].mxu0
        %1451 = vdwg.mxu0
        %1452 = vmatprep.subr.bf16.mxu0 0
        %1453 = vmatpush1.bf16.msra.mxu0 %v1176
        %1454 = vmatprep.subr.bf16.mxu0 0
        %1455 = vmatpush1.bf16.msra.mxu0 %v1177
        %1456 = vmatprep.subr.bf16.mxu0 0
        %1457 = vmatpush1.bf16.msra.mxu0 %v1178
        %1458 = vmatprep.subr.bf16.mxu0 0
        %1459 = vmatpush1.bf16.msra.mxu0 %v1179
        %1460 = vmatprep.subr.bf16.mxu0 0
        %1461 = vmatpush1.bf16.msra.mxu0 %v1180
        %1462 = vmatprep.subr.bf16.mxu0 0
        %1463 = vmatpush1.bf16.msra.mxu0 %v1181
        %1464 = vmatprep.subr.bf16.mxu0 0
        %1465 = vmatpush1.bf16.msra.mxu0 %v1182
        %1466 = vmatprep.subr.bf16.mxu0 0
        %1467 = vmatpush1.bf16.msra.mxu0 %v1183
        %1468 = vmatprep.subr.bf16.mxu0 0
        %1469 = vmatpush1.bf16.msra.mxu0 0
        %1470 = vmatprep.subr.bf16.mxu0 0
        %1471 = vmatpush1.bf16.msra.mxu0 0
        %1472 = vmatprep.subr.bf16.mxu0 0
        %1473 = vmatpush1.bf16.msra.mxu0 0
        %1474 = vmatprep.subr.bf16.mxu0 0
        %1475 = vmatpush1.bf16.msra.mxu0 0
        %1476 = vmatprep.subr.bf16.mxu0 0
        %1477 = vmatpush1.bf16.msra.mxu0 0
        %1478 = vmatprep.subr.bf16.mxu0 0
        %1479 = vmatpush1.bf16.msra.mxu0 0
        %1480 = vmatprep.subr.bf16.mxu0 0
        %1481 = vmatpush1.bf16.msra.mxu0 0
        %1482 = vmatprep.subr.bf16.mxu0 0
        %1483 = vmatpush1.bf16.msra.mxu0 0
        %1484 = vmatprep.mubr.bf16.mxu0 0
        %1485 = vmatmul.mubr.bf16.gmra.mrb[0].mxu0 %v666
        %v1486 = vpop.f32.mrb[0].mxu0
        %v1487 = vadd.f32 %v1438, %v1486
        %v1488 = vpop.f32.mrb[0].mxu0
        %v1489 = vpop.f32.mrb[0].mxu0
        %v1490 = vadd.f32 %v1441, %v1489
        %v1491 = vpop.f32.mrb[0].mxu0
        %1492 = vmatprep.mubr.bf16.mxu0 0
        %1493 = vmatmul.mubr.bf16.gmra.mrb[0].mxu0 %v675
        %v1494 = vpop.f32.mrb[0].mxu0
        %v1495 = vadd.f32 %v1446, %v1494
        %v1496 = vpop.f32.mrb[0].mxu0
        %v1497 = vpop.f32.mrb[0].mxu0
        %v1498 = vadd.f32 %v1449, %v1497
        %v1499 = vpop.f32.mrb[0].mxu0
        %1500 = vdwg.mxu0
        %v1501 = vmul.f32 %v1487, 0.01
        %v1502 = vmul.f32 %v1490, 0.01
        %v1503 = vmul.f32 %v1495, 0.01
        %v1504 = vmul.f32 %v1498, 0.01
        %v1505 = vmax.f32 %v1487, %v1501
        %v1506 = vmax.f32 %v1490, %v1502
        %v1507 = vmax.f32 %v1495, %v1503
        %v1508 = vmax.f32 %v1498, %v1504
        %v1509 = vpack.c.bf16 %v1506, %v1505
        %v1510 = vpack.c.bf16 %v1508, %v1507
        %v1511 = vld [vmem:[#allocation9] sm:$0xf]
        %v1512 = vld [vmem:[#allocation9 + $0x4] sm:$0xf]
        %v1513 = vld [vmem:[#allocation9 + $0x8] sm:$0xf]
        %v1514 = vld [vmem:[#allocation9 + $0xc] sm:$0xf]
        %v1515 = vld [vmem:[#allocation9 + $0x10] sm:$0xf]
        %v1516 = vld [vmem:[#allocation9 + $0x14] sm:$0xf]
        %v1517 = vld [vmem:[#allocation9 + $0x18] sm:$0xf]
        %v1518 = vld [vmem:[#allocation9 + $0x1c] sm:$0xf]
        %v1519 = vld [vmem:[#allocation9 + $0x20] sm:$0xf]
        %v1520 = vld [vmem:[#allocation9 + $0x24] sm:$0xf]
        %v1521 = vld [vmem:[#allocation9 + $0x28] sm:$0xf]
        %v1522 = vld [vmem:[#allocation9 + $0x2c] sm:$0xf]
        %v1523 = vld [vmem:[#allocation9 + $0x30] sm:$0xf]
        %v1524 = vld [vmem:[#allocation9 + $0x34] sm:$0xf]
        %v1525 = vld [vmem:[#allocation9 + $0x38] sm:$0xf]
        %v1526 = vld [vmem:[#allocation9 + $0x3c] sm:$0xf]
        %v1527 = vld [vmem:[%s369] sm:$0xf]
        %v1528 = vld [vmem:[%s369 + $0x4] sm:$0xf]
        %v1529 = vld [vmem:[%s369 + $0x8] sm:$0xf]
        %v1530 = vld [vmem:[%s369 + $0xc] sm:$0xf]
        %v1531 = vunpack.c.l.bf16 %v1527
        %v1532 = vunpack.c.l.bf16 %v1528
        %v1533 = vunpack.c.l.bf16 %v1529
        %v1534 = vunpack.c.l.bf16 %v1530
        %v1551 = vunpack.c.l.b16 %v1511
        %v1552 = vunpack.c.l.b16 %v1512
        %v1553 = vunpack.c.l.b16 %v1513
        %v1554 = vunpack.c.l.b16 %v1514
        %v1555 = vunpack.c.l.b16 %v1515
        %v1556 = vunpack.c.l.b16 %v1516
        %v1557 = vunpack.c.l.b16 %v1517
        %v1558 = vunpack.c.l.b16 %v1518
        %v1559 = vunpack.c.l.b16 %v1519
        %v1560 = vunpack.c.l.b16 %v1520
        %v1561 = vunpack.c.l.b16 %v1521
        %v1562 = vunpack.c.l.b16 %v1522
        %v1563 = vunpack.c.l.b16 %v1523
        %v1564 = vunpack.c.l.b16 %v1524
        %v1565 = vunpack.c.l.b16 %v1525
        %v1566 = vunpack.c.l.b16 %v1526
        %v1567 = vpack.c.b16 %v1552, %v1551
        %v1568 = vpack.c.b16 %v1554, %v1553
        %v1569 = vpack.c.b16 %v1556, %v1555
        %v1570 = vpack.c.b16 %v1558, %v1557
        %v1571 = vpack.c.b16 %v1560, %v1559
        %v1572 = vpack.c.b16 %v1562, %v1561
        %v1573 = vpack.c.b16 %v1564, %v1563
        %v1574 = vpack.c.b16 %v1566, %v1565
        %1583 = vmatprep.subr.bf16.mxu0 0
        %1584 = vmatpush1.bf16.msra.mxu0 %v1567
        %1585 = vmatprep.subr.bf16.mxu0 0
        %1586 = vmatpush1.bf16.msra.mxu0 %v1568
        %1587 = vmatprep.subr.bf16.mxu0 0
        %1588 = vmatpush1.bf16.msra.mxu0 %v1569
        %1589 = vmatprep.subr.bf16.mxu0 0
        %1590 = vmatpush1.bf16.msra.mxu0 %v1570
        %1591 = vmatprep.subr.bf16.mxu0 0
        %1592 = vmatpush1.bf16.msra.mxu0 %v1571
        %1593 = vmatprep.subr.bf16.mxu0 0
        %1594 = vmatpush1.bf16.msra.mxu0 %v1572
        %1595 = vmatprep.subr.bf16.mxu0 0
        %1596 = vmatpush1.bf16.msra.mxu0 %v1573
        %1597 = vmatprep.subr.bf16.mxu0 0
        %1598 = vmatpush1.bf16.msra.mxu0 %v1574
        %1599 = vmatprep.subr.bf16.mxu0 0
        %1600 = vmatpush1.bf16.msra.mxu0 0
        %1601 = vmatprep.subr.bf16.mxu0 0
        %1602 = vmatpush1.bf16.msra.mxu0 0
        %1603 = vmatprep.subr.bf16.mxu0 0
        %1604 = vmatpush1.bf16.msra.mxu0 0
        %1605 = vmatprep.subr.bf16.mxu0 0
        %1606 = vmatpush1.bf16.msra.mxu0 0
        %1607 = vmatprep.subr.bf16.mxu0 0
        %1608 = vmatpush1.bf16.msra.mxu0 0
        %1609 = vmatprep.subr.bf16.mxu0 0
        %1610 = vmatpush1.bf16.msra.mxu0 0
        %1611 = vmatprep.subr.bf16.mxu0 0
        %1612 = vmatpush1.bf16.msra.mxu0 0
        %1613 = vmatprep.subr.bf16.mxu0 0
        %1614 = vmatpush1.bf16.msra.mxu0 0
        %1615 = vmatprep.mubr.bf16.mxu0 0
        %1616 = vmatmul.mubr.bf16.gmra.mrb[0].mxu0 %v1509
        %v1617 = vpop.f32.mrb[0].mxu0
        %v1618 = vadd.f32 %v1531, %v1617
        %v1619 = vpop.f32.mrb[0].mxu0
        %v1620 = vpop.f32.mrb[0].mxu0
        %v1621 = vadd.f32 %v1532, %v1620
        %v1622 = vpop.f32.mrb[0].mxu0
        %1623 = vmatprep.mubr.bf16.mxu0 0
        %1624 = vmatmul.mubr.bf16.gmra.mrb[0].mxu0 %v1510
        %v1625 = vpop.f32.mrb[0].mxu0
        %v1626 = vadd.f32 %v1533, %v1625
        %v1627 = vpop.f32.mrb[0].mxu0
        %v1628 = vpop.f32.mrb[0].mxu0
        %v1629 = vadd.f32 %v1534, %v1628
        %v1630 = vpop.f32.mrb[0].mxu0
        %1631 = vdwg.mxu0
        %v1632 = vrot.slane %v1618, 7
        %v1633 = vrot.slane %v1621, 7
        %v1634 = vrot.slane %v1626, 7
        %v1635 = vrot.slane %v1629, 7
        %v1636 = vsel %vm518, %v1634, %v1635
        %v1637 = vsel %vm518, %v1633, %v1634
        %v1638 = vsel %vm518, %v1632, %v1633
        %v1639 = vsel %vm518, %v1635, %v1632
        %v1640 = vsel %vm496, %v1639, 0.0
        %v1641 = vsel %vm497, %v1638, 0.0
        %v1642 = vsel %vm498, %v1637, 0.0
        %v1643 = vsel %vm499, %v1636, 0.0
        %1644 = vrot.lane.b32.xlu0 %v1640, 8
        %v1645 = vpop.permute.xlu0 %1644
        %1646 = vrot.lane.b32.xlu0 %v1641, 8
        %v1647 = vpop.permute.xlu0 %1646
        %1648 = vrot.lane.b32.xlu0 %v1642, 8
        %v1649 = vpop.permute.xlu0 %1648
        %1650 = vrot.lane.b32.xlu0 %v1643, 8
        %v1651 = vpop.permute.xlu0 %1650
        %v1652 = vsel %vm504, %v1645, 0.0
        %v1653 = vsel %vm504, %v1647, 0.0
        %v1654 = vsel %vm504, %v1649, 0.0
        %v1655 = vsel %vm504, %v1651, 0.0
        %v1656 = vpack.c.bf16 %v1653, %v1652
        %v1657 = vpack.c.bf16 %v1655, %v1654
        %1658 = vst [vmem:[#allocation2] sm:$0xff] %v1656
        %1659 = vst [vmem:[#allocation2 + $0x48] sm:$0xff] %v1657
        %v1660 = vpack.c.bf16 %v1641, %v1640
        %v1661 = vpack.c.bf16 %v1643, %v1642
        %1662 = vst [vmem:[#allocation2 + $0x8] sm:$0xff] %v1660
        %1663 = vst [vmem:[#allocation2 + $0x50] sm:$0xff] %v1661
        %1664 = vrot.lane.b32.xlu0 %v1640, 120
        %v1665 = vpop.permute.xlu0 %1664
        %1666 = vrot.lane.b32.xlu0 %v1641, 120
        %v1667 = vpop.permute.xlu0 %1666
        %1668 = vrot.lane.b32.xlu0 %v1642, 120
        %v1669 = vpop.permute.xlu0 %1668
        %1670 = vrot.lane.b32.xlu0 %v1643, 120
        %v1671 = vpop.permute.xlu0 %1670
        %v1672 = vsel %vm505, %v1665, 0.0
        %v1673 = vsel %vm505, %v1667, 0.0
        %v1674 = vsel %vm505, %v1669, 0.0
        %v1675 = vsel %vm505, %v1671, 0.0
        %v1676 = vpack.c.bf16 %v1673, %v1672
        %v1677 = vpack.c.bf16 %v1675, %v1674
        %1678 = vst [vmem:[#allocation2 + $0x10] sm:$0xff] %v1676
        %1679 = vst [vmem:[#allocation2 + $0x58] sm:$0xff] %v1677
        %1680 = vrot.lane.b32.xlu0 %v1618, 8
        %v1681 = vpop.permute.xlu0 %1680
        %1682 = vrot.lane.b32.xlu0 %v1621, 8
        %v1683 = vpop.permute.xlu0 %1682
        %1684 = vrot.lane.b32.xlu0 %v1626, 8
        %v1685 = vpop.permute.xlu0 %1684
        %1686 = vrot.lane.b32.xlu0 %v1629, 8
        %v1687 = vpop.permute.xlu0 %1686
        %v1688 = vsel %vm504, %v1681, 0.0
        %v1689 = vsel %vm504, %v1683, 0.0
        %v1690 = vsel %vm504, %v1685, 0.0
        %v1691 = vsel %vm504, %v1687, 0.0
        %v1692 = vpack.c.bf16 %v1689, %v1688
        %v1693 = vpack.c.bf16 %v1691, %v1690
        %1694 = vst [vmem:[#allocation2 + $0x18] sm:$0xff] %v1692
        %1695 = vst [vmem:[#allocation2 + $0x60] sm:$0xff] %v1693
        %v1696 = vpack.c.bf16 %v1621, %v1618
        %v1697 = vpack.c.bf16 %v1629, %v1626
        %1698 = vst [vmem:[#allocation2 + $0x20] sm:$0xff] %v1696
        %1699 = vst [vmem:[#allocation2 + $0x68] sm:$0xff] %v1697
        %1700 = vrot.lane.b32.xlu0 %v1618, 120
        %v1701 = vpop.permute.xlu0 %1700
        %1702 = vrot.lane.b32.xlu0 %v1621, 120
        %v1703 = vpop.permute.xlu0 %1702
        %1704 = vrot.lane.b32.xlu0 %v1626, 120
        %v1705 = vpop.permute.xlu0 %1704
        %1706 = vrot.lane.b32.xlu0 %v1629, 120
        %v1707 = vpop.permute.xlu0 %1706
        %v1708 = vsel %vm505, %v1701, 0.0
        %v1709 = vsel %vm505, %v1703, 0.0
        %v1710 = vsel %vm505, %v1705, 0.0
        %v1711 = vsel %vm505, %v1707, 0.0
        %v1712 = vpack.c.bf16 %v1709, %v1708
        %v1713 = vpack.c.bf16 %v1711, %v1710
        %1714 = vst [vmem:[#allocation2 + $0x28] sm:$0xff] %v1712
        %1715 = vst [vmem:[#allocation2 + $0x70] sm:$0xff] %v1713
        %v1716 = vrot.slane %v1618, 1
        %v1717 = vrot.slane %v1621, 1
        %v1718 = vrot.slane %v1626, 1
        %v1719 = vrot.slane %v1629, 1
        %v1720 = vsel %vm613, %v1718, %v1719
        %v1721 = vsel %vm613, %v1717, %v1718
        %v1722 = vsel %vm613, %v1716, %v1717
        %v1723 = vsel %vm613, %v1719, %v1716
        %v1724 = vsel %vm500, %v1722, 0.0
        %v1725 = vsel %vm501, %v1721, 0.0
        %v1726 = vsel %vm502, %v1720, 0.0
        %v1727 = vsel %vm503, %v1723, 0.0
        %1728 = vrot.lane.b32.xlu0 %v1724, 8
        %v1729 = vpop.permute.xlu0 %1728
        %1730 = vrot.lane.b32.xlu0 %v1725, 8
        %v1731 = vpop.permute.xlu0 %1730
        %1732 = vrot.lane.b32.xlu0 %v1726, 8
        %v1733 = vpop.permute.xlu0 %1732
        %1734 = vrot.lane.b32.xlu0 %v1727, 8
        %v1735 = vpop.permute.xlu0 %1734
        %v1736 = vsel %vm504, %v1729, 0.0
        %v1737 = vsel %vm504, %v1731, 0.0
        %v1738 = vsel %vm504, %v1733, 0.0
        %v1739 = vsel %vm504, %v1735, 0.0
        %v1740 = vpack.c.bf16 %v1737, %v1736
        %v1741 = vpack.c.bf16 %v1739, %v1738
        %1742 = vst [vmem:[#allocation2 + $0x30] sm:$0xff] %v1740
        %1743 = vst [vmem:[#allocation2 + $0x78] sm:$0xff] %v1741
        %v1744 = vpack.c.bf16 %v1725, %v1724
        %v1745 = vpack.c.bf16 %v1727, %v1726
        %1746 = vst [vmem:[#allocation2 + $0x38] sm:$0xff] %v1744
        %1747 = vst [vmem:[#allocation2 + $0x80] sm:$0xff] %v1745
        %1748 = vrot.lane.b32.xlu0 %v1724, 120
        %v1749 = vpop.permute.xlu0 %1748
        %1750 = vrot.lane.b32.xlu0 %v1725, 120
        %v1751 = vpop.permute.xlu0 %1750
        %1752 = vrot.lane.b32.xlu0 %v1726, 120
        %v1753 = vpop.permute.xlu0 %1752
        %1754 = vrot.lane.b32.xlu0 %v1727, 120
        %v1755 = vpop.permute.xlu0 %1754
        %v1756 = vsel %vm505, %v1749, 0.0
        %v1757 = vsel %vm505, %v1751, 0.0
        %v1758 = vsel %vm505, %v1753, 0.0
        %v1759 = vsel %vm505, %v1755, 0.0
        %v1760 = vpack.c.bf16 %v1757, %v1756
        %v1761 = vpack.c.bf16 %v1759, %v1758
        %1762 = vst [vmem:[#allocation2 + $0x40] sm:$0xff] %v1760
        %1763 = vst [vmem:[#allocation2 + $0x88] sm:$0xff] %v1761
        %v1764 = vld [vmem:[#allocation2] sm:$0xff]
        %v1765 = vld [vmem:[#allocation2 + $0x8] sm:$0xff]
        %v1766 = vld [vmem:[#allocation2 + $0x10] sm:$0xff]
        %v1767 = vld [vmem:[#allocation2 + $0x18] sm:$0xff]
        %v1768 = vld [vmem:[#allocation2 + $0x20] sm:$0xff]
        %v1769 = vld [vmem:[#allocation2 + $0x28] sm:$0xff]
        %v1770 = vld [vmem:[#allocation2 + $0x30] sm:$0xff]
        %v1771 = vld [vmem:[#allocation2 + $0x38] sm:$0xff]
        %v1772 = vld [vmem:[#allocation2 + $0x40] sm:$0xff]
        %v1773 = vld [vmem:[#allocation2 + $0x48] sm:$0xff]
        %v1774 = vld [vmem:[#allocation2 + $0x50] sm:$0xff]
        %v1775 = vld [vmem:[#allocation2 + $0x58] sm:$0xff]
        %v1776 = vld [vmem:[#allocation2 + $0x60] sm:$0xff]
        %v1777 = vld [vmem:[#allocation2 + $0x68] sm:$0xff]
        %v1778 = vld [vmem:[#allocation2 + $0x70] sm:$0xff]
        %v1779 = vld [vmem:[#allocation2 + $0x78] sm:$0xff]
        %v1780 = vld [vmem:[#allocation2 + $0x80] sm:$0xff]
        %v1781 = vld [vmem:[#allocation2 + $0x88] sm:$0xff]
        %v1782 = vld [vmem:[#allocation11] sm:$0xf]
        %v1783 = vld [vmem:[#allocation11 + $0x4] sm:$0xf]
        %v1784 = vld [vmem:[#allocation11 + $0x8] sm:$0xf]
        %v1785 = vld [vmem:[#allocation11 + $0xc] sm:$0xf]
        %v1786 = vld [vmem:[#allocation11 + $0x10] sm:$0xf]
        %v1787 = vld [vmem:[#allocation11 + $0x14] sm:$0xf]
        %v1788 = vld [vmem:[#allocation11 + $0x18] sm:$0xf]
        %v1789 = vld [vmem:[#allocation11 + $0x1c] sm:$0xf]
        %v1790 = vld [vmem:[#allocation11 + $0x20] sm:$0xf]
        %v1791 = vld [vmem:[#allocation11 + $0x24] sm:$0xf]
        %v1792 = vld [vmem:[#allocation11 + $0x28] sm:$0xf]
        %v1793 = vld [vmem:[#allocation11 + $0x2c] sm:$0xf]
        %v1794 = vld [vmem:[#allocation11 + $0x30] sm:$0xf]
        %v1795 = vld [vmem:[#allocation11 + $0x34] sm:$0xf]
        %v1796 = vld [vmem:[#allocation11 + $0x38] sm:$0xf]
        %v1797 = vld [vmem:[#allocation11 + $0x3c] sm:$0xf]
        %v1798 = vld [vmem:[#allocation11 + $0x40] sm:$0xf]
        %v1799 = vld [vmem:[#allocation11 + $0x44] sm:$0xf]
        %v1800 = vld [vmem:[#allocation11 + $0x48] sm:$0xf]
        %v1801 = vld [vmem:[#allocation11 + $0x4c] sm:$0xf]
        %v1802 = vld [vmem:[#allocation11 + $0x50] sm:$0xf]
        %v1803 = vld [vmem:[#allocation11 + $0x54] sm:$0xf]
        %v1804 = vld [vmem:[#allocation11 + $0x58] sm:$0xf]
        %v1805 = vld [vmem:[#allocation11 + $0x5c] sm:$0xf]
        %v1806 = vld [vmem:[#allocation11 + $0x60] sm:$0xf]
        %v1807 = vld [vmem:[#allocation11 + $0x64] sm:$0xf]
        %v1808 = vld [vmem:[#allocation11 + $0x68] sm:$0xf]
        %v1809 = vld [vmem:[#allocation11 + $0x6c] sm:$0xf]
        %v1810 = vld [vmem:[#allocation11 + $0x70] sm:$0xf]
        %v1811 = vld [vmem:[#allocation11 + $0x74] sm:$0xf]
        %v1812 = vld [vmem:[#allocation11 + $0x78] sm:$0xf]
        %v1813 = vld [vmem:[#allocation11 + $0x7c] sm:$0xf]
        %v1814 = vld [vmem:[#allocation11 + $0x80] sm:$0xf]
        %v1815 = vld [vmem:[#allocation11 + $0x84] sm:$0xf]
        %v1816 = vld [vmem:[#allocation11 + $0x88] sm:$0xf]
        %v1817 = vld [vmem:[#allocation11 + $0x8c] sm:$0xf]
        %v1818 = vld [vmem:[#allocation11 + $0x90] sm:$0xf]
        %v1819 = vld [vmem:[#allocation11 + $0x94] sm:$0xf]
        %v1820 = vld [vmem:[#allocation11 + $0x98] sm:$0xf]
        %v1821 = vld [vmem:[#allocation11 + $0x9c] sm:$0xf]
        %v1822 = vld [vmem:[#allocation11 + $0xa0] sm:$0xf]
        %v1823 = vld [vmem:[#allocation11 + $0xa4] sm:$0xf]
        %v1824 = vld [vmem:[#allocation11 + $0xa8] sm:$0xf]
        %v1825 = vld [vmem:[#allocation11 + $0xac] sm:$0xf]
        %v1826 = vld [vmem:[#allocation11 + $0xb0] sm:$0xf]
        %v1827 = vld [vmem:[#allocation11 + $0xb4] sm:$0xf]
        %v1828 = vld [vmem:[#allocation11 + $0xb8] sm:$0xf]
        %v1829 = vld [vmem:[#allocation11 + $0xbc] sm:$0xf]
        %v1830 = vld [vmem:[#allocation11 + $0xc0] sm:$0xf]
        %v1831 = vld [vmem:[#allocation11 + $0xc4] sm:$0xf]
        %v1832 = vld [vmem:[#allocation11 + $0xc8] sm:$0xf]
        %v1833 = vld [vmem:[#allocation11 + $0xcc] sm:$0xf]
        %v1834 = vld [vmem:[#allocation11 + $0xd0] sm:$0xf]
        %v1835 = vld [vmem:[#allocation11 + $0xd4] sm:$0xf]
        %v1836 = vld [vmem:[#allocation11 + $0xd8] sm:$0xf]
        %v1837 = vld [vmem:[#allocation11 + $0xdc] sm:$0xf]
        %v1838 = vld [vmem:[#allocation11 + $0xe0] sm:$0xf]
        %v1839 = vld [vmem:[#allocation11 + $0xe4] sm:$0xf]
        %v1840 = vld [vmem:[#allocation11 + $0xe8] sm:$0xf]
        %v1841 = vld [vmem:[#allocation11 + $0xec] sm:$0xf]
        %v1842 = vld [vmem:[#allocation11 + $0xf0] sm:$0xf]
        %v1843 = vld [vmem:[#allocation11 + $0xf4] sm:$0xf]
        %v1844 = vld [vmem:[#allocation11 + $0xf8] sm:$0xf]
        %v1845 = vld [vmem:[#allocation11 + $0xfc] sm:$0xf]
        %v1846 = vld [vmem:[#allocation11 + $0x100] sm:$0xf]
        %v1847 = vld [vmem:[#allocation11 + $0x104] sm:$0xf]
        %v1848 = vld [vmem:[#allocation11 + $0x108] sm:$0xf]
        %v1849 = vld [vmem:[#allocation11 + $0x10c] sm:$0xf]
        %v1850 = vld [vmem:[#allocation11 + $0x110] sm:$0xf]
        %v1851 = vld [vmem:[#allocation11 + $0x114] sm:$0xf]
        %v1852 = vld [vmem:[#allocation11 + $0x118] sm:$0xf]
        %v1853 = vld [vmem:[#allocation11 + $0x11c] sm:$0xf]
        %v1854 = vld [vmem:[#allocation11 + $0x120] sm:$0xf]
        %v1855 = vld [vmem:[#allocation11 + $0x124] sm:$0xf]
        %v1856 = vld [vmem:[#allocation11 + $0x128] sm:$0xf]
        %v1857 = vld [vmem:[#allocation11 + $0x12c] sm:$0xf]
        %v1858 = vld [vmem:[#allocation11 + $0x130] sm:$0xf]
        %v1859 = vld [vmem:[#allocation11 + $0x134] sm:$0xf]
        %v1860 = vld [vmem:[#allocation11 + $0x138] sm:$0xf]
        %v1861 = vld [vmem:[#allocation11 + $0x13c] sm:$0xf]
        %v1862 = vld [vmem:[#allocation11 + $0x140] sm:$0xf]
        %v1863 = vld [vmem:[#allocation11 + $0x144] sm:$0xf]
        %v1864 = vld [vmem:[#allocation11 + $0x148] sm:$0xf]
        %v1865 = vld [vmem:[#allocation11 + $0x14c] sm:$0xf]
        %v1866 = vld [vmem:[#allocation11 + $0x150] sm:$0xf]
        %v1867 = vld [vmem:[#allocation11 + $0x154] sm:$0xf]
        %v1868 = vld [vmem:[#allocation11 + $0x158] sm:$0xf]
        %v1869 = vld [vmem:[#allocation11 + $0x15c] sm:$0xf]
        %v1870 = vld [vmem:[#allocation11 + $0x160] sm:$0xf]
        %v1871 = vld [vmem:[#allocation11 + $0x164] sm:$0xf]
        %v1872 = vld [vmem:[#allocation11 + $0x168] sm:$0xf]
        %v1873 = vld [vmem:[#allocation11 + $0x16c] sm:$0xf]
        %v1874 = vld [vmem:[#allocation11 + $0x170] sm:$0xf]
        %v1875 = vld [vmem:[#allocation11 + $0x174] sm:$0xf]
        %v1876 = vld [vmem:[#allocation11 + $0x178] sm:$0xf]
        %v1877 = vld [vmem:[#allocation11 + $0x17c] sm:$0xf]
        %v1878 = vld [vmem:[#allocation11 + $0x180] sm:$0xf]
        %v1879 = vld [vmem:[#allocation11 + $0x184] sm:$0xf]
        %v1880 = vld [vmem:[#allocation11 + $0x188] sm:$0xf]
        %v1881 = vld [vmem:[#allocation11 + $0x18c] sm:$0xf]
        %v1882 = vld [vmem:[#allocation11 + $0x190] sm:$0xf]
        %v1883 = vld [vmem:[#allocation11 + $0x194] sm:$0xf]
        %v1884 = vld [vmem:[#allocation11 + $0x198] sm:$0xf]
        %v1885 = vld [vmem:[#allocation11 + $0x19c] sm:$0xf]
        %v1886 = vld [vmem:[#allocation11 + $0x1a0] sm:$0xf]
        %v1887 = vld [vmem:[#allocation11 + $0x1a4] sm:$0xf]
        %v1888 = vld [vmem:[#allocation11 + $0x1a8] sm:$0xf]
        %v1889 = vld [vmem:[#allocation11 + $0x1ac] sm:$0xf]
        %v1890 = vld [vmem:[#allocation11 + $0x1b0] sm:$0xf]
        %v1891 = vld [vmem:[#allocation11 + $0x1b4] sm:$0xf]
        %v1892 = vld [vmem:[#allocation11 + $0x1b8] sm:$0xf]
        %v1893 = vld [vmem:[#allocation11 + $0x1bc] sm:$0xf]
        %v1894 = vld [vmem:[#allocation11 + $0x1c0] sm:$0xf]
        %v1895 = vld [vmem:[#allocation11 + $0x1c4] sm:$0xf]
        %v1896 = vld [vmem:[#allocation11 + $0x1c8] sm:$0xf]
        %v1897 = vld [vmem:[#allocation11 + $0x1cc] sm:$0xf]
        %v1898 = vld [vmem:[#allocation11 + $0x1d0] sm:$0xf]
        %v1899 = vld [vmem:[#allocation11 + $0x1d4] sm:$0xf]
        %v1900 = vld [vmem:[#allocation11 + $0x1d8] sm:$0xf]
        %v1901 = vld [vmem:[#allocation11 + $0x1dc] sm:$0xf]
        %v1902 = vld [vmem:[#allocation11 + $0x1e0] sm:$0xf]
        %v1903 = vld [vmem:[#allocation11 + $0x1e4] sm:$0xf]
        %v1904 = vld [vmem:[#allocation11 + $0x1e8] sm:$0xf]
        %v1905 = vld [vmem:[#allocation11 + $0x1ec] sm:$0xf]
        %v1906 = vld [vmem:[#allocation11 + $0x1f0] sm:$0xf]
        %v1907 = vld [vmem:[#allocation11 + $0x1f4] sm:$0xf]
        %v1908 = vld [vmem:[#allocation11 + $0x1f8] sm:$0xf]
        %v1909 = vld [vmem:[#allocation11 + $0x1fc] sm:$0xf]
        %v1910 = vld [vmem:[#allocation11 + $0x200] sm:$0xf]
        %v1911 = vld [vmem:[#allocation11 + $0x204] sm:$0xf]
        %v1912 = vld [vmem:[#allocation11 + $0x208] sm:$0xf]
        %v1913 = vld [vmem:[#allocation11 + $0x20c] sm:$0xf]
        %v1914 = vld [vmem:[#allocation11 + $0x210] sm:$0xf]
        %v1915 = vld [vmem:[#allocation11 + $0x214] sm:$0xf]
        %v1916 = vld [vmem:[#allocation11 + $0x218] sm:$0xf]
        %v1917 = vld [vmem:[#allocation11 + $0x21c] sm:$0xf]
        %v1918 = vld [vmem:[#allocation11 + $0x220] sm:$0xf]
        %v1919 = vld [vmem:[#allocation11 + $0x224] sm:$0xf]
        %v1920 = vld [vmem:[#allocation11 + $0x228] sm:$0xf]
        %v1921 = vld [vmem:[#allocation11 + $0x22c] sm:$0xf]
        %v1922 = vld [vmem:[#allocation11 + $0x230] sm:$0xf]
        %v1923 = vld [vmem:[#allocation11 + $0x234] sm:$0xf]
        %v1924 = vld [vmem:[#allocation11 + $0x238] sm:$0xf]
        %v1925 = vld [vmem:[#allocation11 + $0x23c] sm:$0xf]
        %v1926 = vlaneseq
        %v1927 = vshrl.u32 %v1926, 7
        %v1928 = vsub.s32 1, %v1927
        %v1929 = vrot.slane %v440, %v1928
        %v2074 = vunpack.c.l.b16 %v1782
        %v2075 = vunpack.c.l.b16 %v1783
        %v2076 = vunpack.c.l.b16 %v1784
        %v2077 = vunpack.c.l.b16 %v1785
        %v2078 = vunpack.c.l.b16 %v1786
        %v2079 = vunpack.c.l.b16 %v1787
        %v2080 = vunpack.c.l.b16 %v1788
        %v2081 = vunpack.c.l.b16 %v1789
        %v2082 = vunpack.c.l.b16 %v1790
        %v2083 = vunpack.c.l.b16 %v1791
        %v2084 = vunpack.c.l.b16 %v1792
        %v2085 = vunpack.c.l.b16 %v1793
        %v2086 = vunpack.c.l.b16 %v1794
        %v2087 = vunpack.c.l.b16 %v1795
        %v2088 = vunpack.c.l.b16 %v1796
        %v2089 = vunpack.c.l.b16 %v1797
        %v2090 = vunpack.c.l.b16 %v1798
        %v2091 = vunpack.c.l.b16 %v1799
        %v2092 = vunpack.c.l.b16 %v1800
        %v2093 = vunpack.c.l.b16 %v1801
        %v2094 = vunpack.c.l.b16 %v1802
        %v2095 = vunpack.c.l.b16 %v1803
        %v2096 = vunpack.c.l.b16 %v1804
        %v2097 = vunpack.c.l.b16 %v1805
        %v2098 = vunpack.c.l.b16 %v1806
        %v2099 = vunpack.c.l.b16 %v1807
        %v2100 = vunpack.c.l.b16 %v1808
        %v2101 = vunpack.c.l.b16 %v1809
        %v2102 = vunpack.c.l.b16 %v1810
        %v2103 = vunpack.c.l.b16 %v1811
        %v2104 = vunpack.c.l.b16 %v1812
        %v2105 = vunpack.c.l.b16 %v1813
        %v2106 = vunpack.c.l.b16 %v1814
        %v2107 = vunpack.c.l.b16 %v1815
        %v2108 = vunpack.c.l.b16 %v1816
        %v2109 = vunpack.c.l.b16 %v1817
        %v2110 = vunpack.c.l.b16 %v1818
        %v2111 = vunpack.c.l.b16 %v1819
        %v2112 = vunpack.c.l.b16 %v1820
        %v2113 = vunpack.c.l.b16 %v1821
        %v2114 = vunpack.c.l.b16 %v1822
        %v2115 = vunpack.c.l.b16 %v1823
        %v2116 = vunpack.c.l.b16 %v1824
        %v2117 = vunpack.c.l.b16 %v1825
        %v2118 = vunpack.c.l.b16 %v1826
        %v2119 = vunpack.c.l.b16 %v1827
        %v2120 = vunpack.c.l.b16 %v1828
        %v2121 = vunpack.c.l.b16 %v1829
        %v2122 = vunpack.c.l.b16 %v1830
        %v2123 = vunpack.c.l.b16 %v1831
        %v2124 = vunpack.c.l.b16 %v1832
        %v2125 = vunpack.c.l.b16 %v1833
        %v2126 = vunpack.c.l.b16 %v1834
        %v2127 = vunpack.c.l.b16 %v1835
        %v2128 = vunpack.c.l.b16 %v1836
        %v2129 = vunpack.c.l.b16 %v1837
        %v2130 = vunpack.c.l.b16 %v1838
        %v2131 = vunpack.c.l.b16 %v1839
        %v2132 = vunpack.c.l.b16 %v1840
        %v2133 = vunpack.c.l.b16 %v1841
        %v2134 = vunpack.c.l.b16 %v1842
        %v2135 = vunpack.c.l.b16 %v1843
        %v2136 = vunpack.c.l.b16 %v1844
        %v2137 = vunpack.c.l.b16 %v1845
        %v2138 = vunpack.c.l.b16 %v1846
        %v2139 = vunpack.c.l.b16 %v1847
        %v2140 = vunpack.c.l.b16 %v1848
        %v2141 = vunpack.c.l.b16 %v1849
        %v2142 = vunpack.c.l.b16 %v1850
        %v2143 = vunpack.c.l.b16 %v1851
        %v2144 = vunpack.c.l.b16 %v1852
        %v2145 = vunpack.c.l.b16 %v1853
        %v2146 = vunpack.c.l.b16 %v1854
        %v2147 = vunpack.c.l.b16 %v1855
        %v2148 = vunpack.c.l.b16 %v1856
        %v2149 = vunpack.c.l.b16 %v1857
        %v2150 = vunpack.c.l.b16 %v1858
        %v2151 = vunpack.c.l.b16 %v1859
        %v2152 = vunpack.c.l.b16 %v1860
        %v2153 = vunpack.c.l.b16 %v1861
        %v2154 = vunpack.c.l.b16 %v1862
        %v2155 = vunpack.c.l.b16 %v1863
        %v2156 = vunpack.c.l.b16 %v1864
        %v2157 = vunpack.c.l.b16 %v1865
        %v2158 = vunpack.c.l.b16 %v1866
        %v2159 = vunpack.c.l.b16 %v1867
        %v2160 = vunpack.c.l.b16 %v1868
        %v2161 = vunpack.c.l.b16 %v1869
        %v2162 = vunpack.c.l.b16 %v1870
        %v2163 = vunpack.c.l.b16 %v1871
        %v2164 = vunpack.c.l.b16 %v1872
        %v2165 = vunpack.c.l.b16 %v1873
        %v2166 = vunpack.c.l.b16 %v1874
        %v2167 = vunpack.c.l.b16 %v1875
        %v2168 = vunpack.c.l.b16 %v1876
        %v2169 = vunpack.c.l.b16 %v1877
        %v2170 = vunpack.c.l.b16 %v1878
        %v2171 = vunpack.c.l.b16 %v1879
        %v2172 = vunpack.c.l.b16 %v1880
        %v2173 = vunpack.c.l.b16 %v1881
        %v2174 = vunpack.c.l.b16 %v1882
        %v2175 = vunpack.c.l.b16 %v1883
        %v2176 = vunpack.c.l.b16 %v1884
        %v2177 = vunpack.c.l.b16 %v1885
        %v2178 = vunpack.c.l.b16 %v1886
        %v2179 = vunpack.c.l.b16 %v1887
        %v2180 = vunpack.c.l.b16 %v1888
        %v2181 = vunpack.c.l.b16 %v1889
        %v2182 = vunpack.c.l.b16 %v1890
        %v2183 = vunpack.c.l.b16 %v1891
        %v2184 = vunpack.c.l.b16 %v1892
        %v2185 = vunpack.c.l.b16 %v1893
        %v2186 = vunpack.c.l.b16 %v1894
        %v2187 = vunpack.c.l.b16 %v1895
        %v2188 = vunpack.c.l.b16 %v1896
        %v2189 = vunpack.c.l.b16 %v1897
        %v2190 = vunpack.c.l.b16 %v1898
        %v2191 = vunpack.c.l.b16 %v1899
        %v2192 = vunpack.c.l.b16 %v1900
        %v2193 = vunpack.c.l.b16 %v1901
        %v2194 = vunpack.c.l.b16 %v1902
        %v2195 = vunpack.c.l.b16 %v1903
        %v2196 = vunpack.c.l.b16 %v1904
        %v2197 = vunpack.c.l.b16 %v1905
        %v2198 = vunpack.c.l.b16 %v1906
        %v2199 = vunpack.c.l.b16 %v1907
        %v2200 = vunpack.c.l.b16 %v1908
        %v2201 = vunpack.c.l.b16 %v1909
        %v2202 = vunpack.c.l.b16 %v1910
        %v2203 = vunpack.c.l.b16 %v1911
        %v2204 = vunpack.c.l.b16 %v1912
        %v2205 = vunpack.c.l.b16 %v1913
        %v2206 = vunpack.c.l.b16 %v1914
        %v2207 = vunpack.c.l.b16 %v1915
        %v2208 = vunpack.c.l.b16 %v1916
        %v2209 = vunpack.c.l.b16 %v1917
        %v2210 = vunpack.c.l.b16 %v1918
        %v2211 = vunpack.c.l.b16 %v1919
        %v2212 = vunpack.c.l.b16 %v1920
        %v2213 = vunpack.c.l.b16 %v1921
        %v2214 = vunpack.c.l.b16 %v1922
        %v2215 = vunpack.c.l.b16 %v1923
        %v2216 = vunpack.c.l.b16 %v1924
        %v2217 = vunpack.c.l.b16 %v1925
        %v2218 = vpack.c.b16 %v2075, %v2074
        %v2219 = vpack.c.b16 %v2077, %v2076
        %v2220 = vpack.c.b16 %v2079, %v2078
        %v2221 = vpack.c.b16 %v2081, %v2080
        %v2222 = vpack.c.b16 %v2083, %v2082
        %v2223 = vpack.c.b16 %v2085, %v2084
        %v2224 = vpack.c.b16 %v2087, %v2086
        %v2225 = vpack.c.b16 %v2089, %v2088
        %v2226 = vpack.c.b16 %v2091, %v2090
        %v2227 = vpack.c.b16 %v2093, %v2092
        %v2228 = vpack.c.b16 %v2095, %v2094
        %v2229 = vpack.c.b16 %v2097, %v2096
        %v2230 = vpack.c.b16 %v2099, %v2098
        %v2231 = vpack.c.b16 %v2101, %v2100
        %v2232 = vpack.c.b16 %v2103, %v2102
        %v2233 = vpack.c.b16 %v2105, %v2104
        %v2234 = vpack.c.b16 %v2107, %v2106
        %v2235 = vpack.c.b16 %v2109, %v2108
        %v2236 = vpack.c.b16 %v2111, %v2110
        %v2237 = vpack.c.b16 %v2113, %v2112
        %v2238 = vpack.c.b16 %v2115, %v2114
        %v2239 = vpack.c.b16 %v2117, %v2116
        %v2240 = vpack.c.b16 %v2119, %v2118
        %v2241 = vpack.c.b16 %v2121, %v2120
        %v2242 = vpack.c.b16 %v2123, %v2122
        %v2243 = vpack.c.b16 %v2125, %v2124
        %v2244 = vpack.c.b16 %v2127, %v2126
        %v2245 = vpack.c.b16 %v2129, %v2128
        %v2246 = vpack.c.b16 %v2131, %v2130
        %v2247 = vpack.c.b16 %v2133, %v2132
        %v2248 = vpack.c.b16 %v2135, %v2134
        %v2249 = vpack.c.b16 %v2137, %v2136
        %v2250 = vpack.c.b16 %v2139, %v2138
        %v2251 = vpack.c.b16 %v2141, %v2140
        %v2252 = vpack.c.b16 %v2143, %v2142
        %v2253 = vpack.c.b16 %v2145, %v2144
        %v2254 = vpack.c.b16 %v2147, %v2146
        %v2255 = vpack.c.b16 %v2149, %v2148
        %v2256 = vpack.c.b16 %v2151, %v2150
        %v2257 = vpack.c.b16 %v2153, %v2152
        %v2258 = vpack.c.b16 %v2155, %v2154
        %v2259 = vpack.c.b16 %v2157, %v2156
        %v2260 = vpack.c.b16 %v2159, %v2158
        %v2261 = vpack.c.b16 %v2161, %v2160
        %v2262 = vpack.c.b16 %v2163, %v2162
        %v2263 = vpack.c.b16 %v2165, %v2164
        %v2264 = vpack.c.b16 %v2167, %v2166
        %v2265 = vpack.c.b16 %v2169, %v2168
        %v2266 = vpack.c.b16 %v2171, %v2170
        %v2267 = vpack.c.b16 %v2173, %v2172
        %v2268 = vpack.c.b16 %v2175, %v2174
        %v2269 = vpack.c.b16 %v2177, %v2176
        %v2270 = vpack.c.b16 %v2179, %v2178
        %v2271 = vpack.c.b16 %v2181, %v2180
        %v2272 = vpack.c.b16 %v2183, %v2182
        %v2273 = vpack.c.b16 %v2185, %v2184
        %v2274 = vpack.c.b16 %v2187, %v2186
        %v2275 = vpack.c.b16 %v2189, %v2188
        %v2276 = vpack.c.b16 %v2191, %v2190
        %v2277 = vpack.c.b16 %v2193, %v2192
        %v2278 = vpack.c.b16 %v2195, %v2194
        %v2279 = vpack.c.b16 %v2197, %v2196
        %v2280 = vpack.c.b16 %v2199, %v2198
        %v2281 = vpack.c.b16 %v2201, %v2200
        %v2282 = vpack.c.b16 %v2203, %v2202
        %v2283 = vpack.c.b16 %v2205, %v2204
        %v2284 = vpack.c.b16 %v2207, %v2206
        %v2285 = vpack.c.b16 %v2209, %v2208
        %v2286 = vpack.c.b16 %v2211, %v2210
        %v2287 = vpack.c.b16 %v2213, %v2212
        %v2288 = vpack.c.b16 %v2215, %v2214
        %v2289 = vpack.c.b16 %v2217, %v2216
        %2362 = vmatprep.subr.bf16.mxu0 0
        %2363 = vmatpush1.bf16.msra.mxu0 %v2218
        %2364 = vmatprep.subr.bf16.mxu0 0
        %2365 = vmatpush1.bf16.msra.mxu0 %v2219
        %2366 = vmatprep.subr.bf16.mxu0 0
        %2367 = vmatpush1.bf16.msra.mxu0 %v2220
        %2368 = vmatprep.subr.bf16.mxu0 0
        %2369 = vmatpush1.bf16.msra.mxu0 %v2221
        %2370 = vmatprep.subr.bf16.mxu0 0
        %2371 = vmatpush1.bf16.msra.mxu0 %v2222
        %2372 = vmatprep.subr.bf16.mxu0 0
        %2373 = vmatpush1.bf16.msra.mxu0 %v2223
        %2374 = vmatprep.subr.bf16.mxu0 0
        %2375 = vmatpush1.bf16.msra.mxu0 %v2224
        %2376 = vmatprep.subr.bf16.mxu0 0
        %2377 = vmatpush1.bf16.msra.mxu0 %v2225
        %2378 = vmatprep.subr.bf16.mxu0 0
        %2379 = vmatpush1.bf16.msra.mxu0 %v2226
        %2380 = vmatprep.subr.bf16.mxu0 0
        %2381 = vmatpush1.bf16.msra.mxu0 %v2227
        %2382 = vmatprep.subr.bf16.mxu0 0
        %2383 = vmatpush1.bf16.msra.mxu0 %v2228
        %2384 = vmatprep.subr.bf16.mxu0 0
        %2385 = vmatpush1.bf16.msra.mxu0 %v2229
        %2386 = vmatprep.subr.bf16.mxu0 0
        %2387 = vmatpush1.bf16.msra.mxu0 %v2230
        %2388 = vmatprep.subr.bf16.mxu0 0
        %2389 = vmatpush1.bf16.msra.mxu0 %v2231
        %2390 = vmatprep.subr.bf16.mxu0 0
        %2391 = vmatpush1.bf16.msra.mxu0 %v2232
        %2392 = vmatprep.subr.bf16.mxu0 0
        %2393 = vmatpush1.bf16.msra.mxu0 %v2233
        %2394 = vmatprep.mubr.bf16.mxu0 %v1765
        %2395 = vmatmul.mubr.bf16.gmra.mrb[0].mxu0 %v1764
        %v2396 = vpop.f32.mrb[0].mxu0
        %v2397 = vadd.f32 %v1929, %v2396
        %v2398 = vpop.f32.mrb[0].mxu0
        %v2399 = vpop.f32.mrb[0].mxu0
        %v2400 = vadd.f32 %v1929, %v2399
        %v2401 = vpop.f32.mrb[0].mxu0
        %2402 = vmatprep.mubr.bf16.mxu0 %v1774
        %2403 = vmatmul.mubr.bf16.gmra.mrb[0].mxu0 %v1773
        %v2404 = vpop.f32.mrb[0].mxu0
        %v2405 = vadd.f32 %v1929, %v2404
        %v2406 = vpop.f32.mrb[0].mxu0
        %v2407 = vpop.f32.mrb[0].mxu0
        %v2408 = vadd.f32 %v1929, %v2407
        %v2409 = vpop.f32.mrb[0].mxu0
        %2410 = vdwg.mxu0
        %2411 = vmatprep.subr.bf16.mxu0 0
        %2412 = vmatpush1.bf16.msra.mxu0 %v2234
        %2413 = vmatprep.subr.bf16.mxu0 0
        %2414 = vmatpush1.bf16.msra.mxu0 %v2235
        %2415 = vmatprep.subr.bf16.mxu0 0
        %2416 = vmatpush1.bf16.msra.mxu0 %v2236
        %2417 = vmatprep.subr.bf16.mxu0 0
        %2418 = vmatpush1.bf16.msra.mxu0 %v2237
        %2419 = vmatprep.subr.bf16.mxu0 0
        %2420 = vmatpush1.bf16.msra.mxu0 %v2238
        %2421 = vmatprep.subr.bf16.mxu0 0
        %2422 = vmatpush1.bf16.msra.mxu0 %v2239
        %2423 = vmatprep.subr.bf16.mxu0 0
        %2424 = vmatpush1.bf16.msra.mxu0 %v2240
        %2425 = vmatprep.subr.bf16.mxu0 0
        %2426 = vmatpush1.bf16.msra.mxu0 %v2241
        %2427 = vmatprep.subr.bf16.mxu0 0
        %2428 = vmatpush1.bf16.msra.mxu0 %v2242
        %2429 = vmatprep.subr.bf16.mxu0 0
        %2430 = vmatpush1.bf16.msra.mxu0 %v2243
        %2431 = vmatprep.subr.bf16.mxu0 0
        %2432 = vmatpush1.bf16.msra.mxu0 %v2244
        %2433 = vmatprep.subr.bf16.mxu0 0
        %2434 = vmatpush1.bf16.msra.mxu0 %v2245
        %2435 = vmatprep.subr.bf16.mxu0 0
        %2436 = vmatpush1.bf16.msra.mxu0 %v2246
        %2437 = vmatprep.subr.bf16.mxu0 0
        %2438 = vmatpush1.bf16.msra.mxu0 %v2247
        %2439 = vmatprep.subr.bf16.mxu0 0
        %2440 = vmatpush1.bf16.msra.mxu0 %v2248
        %2441 = vmatprep.subr.bf16.mxu0 0
        %2442 = vmatpush1.bf16.msra.mxu0 %v2249
        %2443 = vmatprep.mubr.bf16.mxu0 %v1767
        %2444 = vmatmul.mubr.bf16.gmra.mrb[0].mxu0 %v1766
        %v2445 = vpop.f32.mrb[0].mxu0
        %v2446 = vadd.f32 %v2397, %v2445
        %v2447 = vpop.f32.mrb[0].mxu0
        %v2448 = vpop.f32.mrb[0].mxu0
        %v2449 = vadd.f32 %v2400, %v2448
        %v2450 = vpop.f32.mrb[0].mxu0
        %2451 = vmatprep.mubr.bf16.mxu0 %v1776
        %2452 = vmatmul.mubr.bf16.gmra.mrb[0].mxu0 %v1775
        %v2453 = vpop.f32.mrb[0].mxu0
        %v2454 = vadd.f32 %v2405, %v2453
        %v2455 = vpop.f32.mrb[0].mxu0
        %v2456 = vpop.f32.mrb[0].mxu0
        %v2457 = vadd.f32 %v2408, %v2456
        %v2458 = vpop.f32.mrb[0].mxu0
        %2459 = vdwg.mxu0
        %2460 = vmatprep.subr.bf16.mxu0 0
        %2461 = vmatpush1.bf16.msra.mxu0 %v2250
        %2462 = vmatprep.subr.bf16.mxu0 0
        %2463 = vmatpush1.bf16.msra.mxu0 %v2251
        %2464 = vmatprep.subr.bf16.mxu0 0
        %2465 = vmatpush1.bf16.msra.mxu0 %v2252
        %2466 = vmatprep.subr.bf16.mxu0 0
        %2467 = vmatpush1.bf16.msra.mxu0 %v2253
        %2468 = vmatprep.subr.bf16.mxu0 0
        %2469 = vmatpush1.bf16.msra.mxu0 %v2254
        %2470 = vmatprep.subr.bf16.mxu0 0
        %2471 = vmatpush1.bf16.msra.mxu0 %v2255
        %2472 = vmatprep.subr.bf16.mxu0 0
        %2473 = vmatpush1.bf16.msra.mxu0 %v2256
        %2474 = vmatprep.subr.bf16.mxu0 0
        %2475 = vmatpush1.bf16.msra.mxu0 %v2257
        %2476 = vmatprep.subr.bf16.mxu0 0
        %2477 = vmatpush1.bf16.msra.mxu0 %v2258
        %2478 = vmatprep.subr.bf16.mxu0 0
        %2479 = vmatpush1.bf16.msra.mxu0 %v2259
        %2480 = vmatprep.subr.bf16.mxu0 0
        %2481 = vmatpush1.bf16.msra.mxu0 %v2260
        %2482 = vmatprep.subr.bf16.mxu0 0
        %2483 = vmatpush1.bf16.msra.mxu0 %v2261
        %2484 = vmatprep.subr.bf16.mxu0 0
        %2485 = vmatpush1.bf16.msra.mxu0 %v2262
        %2486 = vmatprep.subr.bf16.mxu0 0
        %2487 = vmatpush1.bf16.msra.mxu0 %v2263
        %2488 = vmatprep.subr.bf16.mxu0 0
        %2489 = vmatpush1.bf16.msra.mxu0 %v2264
        %2490 = vmatprep.subr.bf16.mxu0 0
        %2491 = vmatpush1.bf16.msra.mxu0 %v2265
        %2492 = vmatprep.mubr.bf16.mxu0 %v1769
        %2493 = vmatmul.mubr.bf16.gmra.mrb[0].mxu0 %v1768
        %v2494 = vpop.f32.mrb[0].mxu0
        %v2495 = vadd.f32 %v2446, %v2494
        %v2496 = vpop.f32.mrb[0].mxu0
        %v2497 = vpop.f32.mrb[0].mxu0
        %v2498 = vadd.f32 %v2449, %v2497
        %v2499 = vpop.f32.mrb[0].mxu0
        %2500 = vmatprep.mubr.bf16.mxu0 %v1778
        %2501 = vmatmul.mubr.bf16.gmra.mrb[0].mxu0 %v1777
        %v2502 = vpop.f32.mrb[0].mxu0
        %v2503 = vadd.f32 %v2454, %v2502
        %v2504 = vpop.f32.mrb[0].mxu0
        %v2505 = vpop.f32.mrb[0].mxu0
        %v2506 = vadd.f32 %v2457, %v2505
        %v2507 = vpop.f32.mrb[0].mxu0
        %2508 = vdwg.mxu0
        %2509 = vmatprep.subr.bf16.mxu0 0
        %2510 = vmatpush1.bf16.msra.mxu0 %v2266
        %2511 = vmatprep.subr.bf16.mxu0 0
        %2512 = vmatpush1.bf16.msra.mxu0 %v2267
        %2513 = vmatprep.subr.bf16.mxu0 0
        %2514 = vmatpush1.bf16.msra.mxu0 %v2268
        %2515 = vmatprep.subr.bf16.mxu0 0
        %2516 = vmatpush1.bf16.msra.mxu0 %v2269
        %2517 = vmatprep.subr.bf16.mxu0 0
        %2518 = vmatpush1.bf16.msra.mxu0 %v2270
        %2519 = vmatprep.subr.bf16.mxu0 0
        %2520 = vmatpush1.bf16.msra.mxu0 %v2271
        %2521 = vmatprep.subr.bf16.mxu0 0
        %2522 = vmatpush1.bf16.msra.mxu0 %v2272
        %2523 = vmatprep.subr.bf16.mxu0 0
        %2524 = vmatpush1.bf16.msra.mxu0 %v2273
        %2525 = vmatprep.subr.bf16.mxu0 0
        %2526 = vmatpush1.bf16.msra.mxu0 %v2274
        %2527 = vmatprep.subr.bf16.mxu0 0
        %2528 = vmatpush1.bf16.msra.mxu0 %v2275
        %2529 = vmatprep.subr.bf16.mxu0 0
        %2530 = vmatpush1.bf16.msra.mxu0 %v2276
        %2531 = vmatprep.subr.bf16.mxu0 0
        %2532 = vmatpush1.bf16.msra.mxu0 %v2277
        %2533 = vmatprep.subr.bf16.mxu0 0
        %2534 = vmatpush1.bf16.msra.mxu0 %v2278
        %2535 = vmatprep.subr.bf16.mxu0 0
        %2536 = vmatpush1.bf16.msra.mxu0 %v2279
        %2537 = vmatprep.subr.bf16.mxu0 0
        %2538 = vmatpush1.bf16.msra.mxu0 %v2280
        %2539 = vmatprep.subr.bf16.mxu0 0
        %2540 = vmatpush1.bf16.msra.mxu0 %v2281
        %2541 = vmatprep.mubr.bf16.mxu0 %v1771
        %2542 = vmatmul.mubr.bf16.gmra.mrb[0].mxu0 %v1770
        %v2543 = vpop.f32.mrb[0].mxu0
        %v2544 = vadd.f32 %v2495, %v2543
        %v2545 = vpop.f32.mrb[0].mxu0
        %v2546 = vpop.f32.mrb[0].mxu0
        %v2547 = vadd.f32 %v2498, %v2546
        %v2548 = vpop.f32.mrb[0].mxu0
        %2549 = vmatprep.mubr.bf16.mxu0 %v1780
        %2550 = vmatmul.mubr.bf16.gmra.mrb[0].mxu0 %v1779
        %v2551 = vpop.f32.mrb[0].mxu0
        %v2552 = vadd.f32 %v2503, %v2551
        %v2553 = vpop.f32.mrb[0].mxu0
        %v2554 = vpop.f32.mrb[0].mxu0
        %v2555 = vadd.f32 %v2506, %v2554
        %v2556 = vpop.f32.mrb[0].mxu0
        %2557 = vdwg.mxu0
        %2558 = vmatprep.subr.bf16.mxu0 0
        %2559 = vmatpush1.bf16.msra.mxu0 %v2282
        %2560 = vmatprep.subr.bf16.mxu0 0
        %2561 = vmatpush1.bf16.msra.mxu0 %v2283
        %2562 = vmatprep.subr.bf16.mxu0 0
        %2563 = vmatpush1.bf16.msra.mxu0 %v2284
        %2564 = vmatprep.subr.bf16.mxu0 0
        %2565 = vmatpush1.bf16.msra.mxu0 %v2285
        %2566 = vmatprep.subr.bf16.mxu0 0
        %2567 = vmatpush1.bf16.msra.mxu0 %v2286
        %2568 = vmatprep.subr.bf16.mxu0 0
        %2569 = vmatpush1.bf16.msra.mxu0 %v2287
        %2570 = vmatprep.subr.bf16.mxu0 0
        %2571 = vmatpush1.bf16.msra.mxu0 %v2288
        %2572 = vmatprep.subr.bf16.mxu0 0
        %2573 = vmatpush1.bf16.msra.mxu0 %v2289
        %2574 = vmatprep.subr.bf16.mxu0 0
        %2575 = vmatpush1.bf16.msra.mxu0 0
        %2576 = vmatprep.subr.bf16.mxu0 0
        %2577 = vmatpush1.bf16.msra.mxu0 0
        %2578 = vmatprep.subr.bf16.mxu0 0
        %2579 = vmatpush1.bf16.msra.mxu0 0
        %2580 = vmatprep.subr.bf16.mxu0 0
        %2581 = vmatpush1.bf16.msra.mxu0 0
        %2582 = vmatprep.subr.bf16.mxu0 0
        %2583 = vmatpush1.bf16.msra.mxu0 0
        %2584 = vmatprep.subr.bf16.mxu0 0
        %2585 = vmatpush1.bf16.msra.mxu0 0
        %2586 = vmatprep.subr.bf16.mxu0 0
        %2587 = vmatpush1.bf16.msra.mxu0 0
        %2588 = vmatprep.subr.bf16.mxu0 0
        %2589 = vmatpush1.bf16.msra.mxu0 0
        %2590 = vmatprep.mubr.bf16.mxu0 0
        %2591 = vmatmul.mubr.bf16.gmra.mrb[0].mxu0 %v1772
        %v2592 = vpop.f32.mrb[0].mxu0
        %v2593 = vadd.f32 %v2544, %v2592
        %v2594 = vpop.f32.mrb[0].mxu0
        %v2595 = vpop.f32.mrb[0].mxu0
        %v2596 = vadd.f32 %v2547, %v2595
        %v2597 = vpop.f32.mrb[0].mxu0
        %2598 = vmatprep.mubr.bf16.mxu0 0
        %2599 = vmatmul.mubr.bf16.gmra.mrb[0].mxu0 %v1781
        %v2600 = vpop.f32.mrb[0].mxu0
        %v2601 = vadd.f32 %v2552, %v2600
        %v2602 = vpop.f32.mrb[0].mxu0
        %v2603 = vpop.f32.mrb[0].mxu0
        %v2604 = vadd.f32 %v2555, %v2603
        %v2605 = vpop.f32.mrb[0].mxu0
        %2606 = vdwg.mxu0
        %v2607 = vmul.f32 %v2593, 0.01
        %v2608 = vmul.f32 %v2596, 0.01
        %v2609 = vmul.f32 %v2601, 0.01
        %v2610 = vmul.f32 %v2604, 0.01
        %v2611 = vmax.f32 %v2593, %v2607
        %v2612 = vmax.f32 %v2596, %v2608
        %v2613 = vmax.f32 %v2601, %v2609
        %v2614 = vmax.f32 %v2604, %v2610
        %v2615 = vrot.slane %v2611, 7
        %v2616 = vrot.slane %v2612, 7
        %v2617 = vrot.slane %v2613, 7
        %v2618 = vrot.slane %v2614, 7
        %v2619 = vsel %vm518, %v2617, %v2618
        %v2620 = vsel %vm518, %v2616, %v2617
        %v2621 = vsel %vm518, %v2615, %v2616
        %v2622 = vsel %vm518, %v2618, %v2615
        %v2623 = vsel %vm496, %v2622, 0.0
        %v2624 = vsel %vm497, %v2621, 0.0
        %v2625 = vsel %vm498, %v2620, 0.0
        %v2626 = vsel %vm499, %v2619, 0.0
        %2627 = vrot.lane.b32.xlu0 %v2623, 8
        %v2628 = vpop.permute.xlu0 %2627
        %2629 = vrot.lane.b32.xlu0 %v2624, 8
        %v2630 = vpop.permute.xlu0 %2629
        %2631 = vrot.lane.b32.xlu0 %v2625, 8
        %v2632 = vpop.permute.xlu0 %2631
        %2633 = vrot.lane.b32.xlu0 %v2626, 8
        %v2634 = vpop.permute.xlu0 %2633
        %v2635 = vsel %vm504, %v2628, 0.0
        %v2636 = vsel %vm504, %v2630, 0.0
        %v2637 = vsel %vm504, %v2632, 0.0
        %v2638 = vsel %vm504, %v2634, 0.0
        %v2639 = vpack.c.bf16 %v2636, %v2635
        %v2640 = vpack.c.bf16 %v2638, %v2637
        %2641 = vst [vmem:[#allocation2] sm:$0xff] %v2639
        %2642 = vst [vmem:[#allocation2 + $0x48] sm:$0xff] %v2640
        %v2643 = vpack.c.bf16 %v2624, %v2623
        %v2644 = vpack.c.bf16 %v2626, %v2625
        %2645 = vst [vmem:[#allocation2 + $0x8] sm:$0xff] %v2643
        %2646 = vst [vmem:[#allocation2 + $0x50] sm:$0xff] %v2644
        %2647 = vrot.lane.b32.xlu0 %v2623, 120
        %v2648 = vpop.permute.xlu0 %2647
        %2649 = vrot.lane.b32.xlu0 %v2624, 120
        %v2650 = vpop.permute.xlu0 %2649
        %2651 = vrot.lane.b32.xlu0 %v2625, 120
        %v2652 = vpop.permute.xlu0 %2651
        %2653 = vrot.lane.b32.xlu0 %v2626, 120
        %v2654 = vpop.permute.xlu0 %2653
        %v2655 = vsel %vm505, %v2648, 0.0
        %v2656 = vsel %vm505, %v2650, 0.0
        %v2657 = vsel %vm505, %v2652, 0.0
        %v2658 = vsel %vm505, %v2654, 0.0
        %v2659 = vpack.c.bf16 %v2656, %v2655
        %v2660 = vpack.c.bf16 %v2658, %v2657
        %2661 = vst [vmem:[#allocation2 + $0x10] sm:$0xff] %v2659
        %2662 = vst [vmem:[#allocation2 + $0x58] sm:$0xff] %v2660
        %2663 = vrot.lane.b32.xlu0 %v2611, 8
        %v2664 = vpop.permute.xlu0 %2663
        %2665 = vrot.lane.b32.xlu0 %v2612, 8
        %v2666 = vpop.permute.xlu0 %2665
        %2667 = vrot.lane.b32.xlu0 %v2613, 8
        %v2668 = vpop.permute.xlu0 %2667
        %2669 = vrot.lane.b32.xlu0 %v2614, 8
        %v2670 = vpop.permute.xlu0 %2669
        %v2671 = vsel %vm504, %v2664, 0.0
        %v2672 = vsel %vm504, %v2666, 0.0
        %v2673 = vsel %vm504, %v2668, 0.0
        %v2674 = vsel %vm504, %v2670, 0.0
        %v2675 = vpack.c.bf16 %v2672, %v2671
        %v2676 = vpack.c.bf16 %v2674, %v2673
        %2677 = vst [vmem:[#allocation2 + $0x18] sm:$0xff] %v2675
        %2678 = vst [vmem:[#allocation2 + $0x60] sm:$0xff] %v2676
        %v2679 = vpack.c.bf16 %v2612, %v2611
        %v2680 = vpack.c.bf16 %v2614, %v2613
        %2681 = vst [vmem:[#allocation2 + $0x20] sm:$0xff] %v2679
        %2682 = vst [vmem:[#allocation2 + $0x68] sm:$0xff] %v2680
        %2683 = vrot.lane.b32.xlu0 %v2611, 120
        %v2684 = vpop.permute.xlu0 %2683
        %2685 = vrot.lane.b32.xlu0 %v2612, 120
        %v2686 = vpop.permute.xlu0 %2685
        %2687 = vrot.lane.b32.xlu0 %v2613, 120
        %v2688 = vpop.permute.xlu0 %2687
        %2689 = vrot.lane.b32.xlu0 %v2614, 120
        %v2690 = vpop.permute.xlu0 %2689
        %v2691 = vsel %vm505, %v2684, 0.0
        %v2692 = vsel %vm505, %v2686, 0.0
        %v2693 = vsel %vm505, %v2688, 0.0
        %v2694 = vsel %vm505, %v2690, 0.0
        %v2695 = vpack.c.bf16 %v2692, %v2691
        %v2696 = vpack.c.bf16 %v2694, %v2693
        %2697 = vst [vmem:[#allocation2 + $0x28] sm:$0xff] %v2695
        %2698 = vst [vmem:[#allocation2 + $0x70] sm:$0xff] %v2696
        %v2699 = vrot.slane %v2611, 1
        %v2700 = vrot.slane %v2612, 1
        %v2701 = vrot.slane %v2613, 1
        %v2702 = vrot.slane %v2614, 1
        %v2703 = vsel %vm613, %v2701, %v2702
        %v2704 = vsel %vm613, %v2700, %v2701
        %v2705 = vsel %vm613, %v2699, %v2700
        %v2706 = vsel %vm613, %v2702, %v2699
        %v2707 = vsel %vm500, %v2705, 0.0
        %v2708 = vsel %vm501, %v2704, 0.0
        %v2709 = vsel %vm502, %v2703, 0.0
        %v2710 = vsel %vm503, %v2706, 0.0
        %2711 = vrot.lane.b32.xlu0 %v2707, 8
        %v2712 = vpop.permute.xlu0 %2711
        %2713 = vrot.lane.b32.xlu0 %v2708, 8
        %v2714 = vpop.permute.xlu0 %2713
        %2715 = vrot.lane.b32.xlu0 %v2709, 8
        %v2716 = vpop.permute.xlu0 %2715
        %2717 = vrot.lane.b32.xlu0 %v2710, 8
        %v2718 = vpop.permute.xlu0 %2717
        %v2719 = vsel %vm504, %v2712, 0.0
        %v2720 = vsel %vm504, %v2714, 0.0
        %v2721 = vsel %vm504, %v2716, 0.0
        %v2722 = vsel %vm504, %v2718, 0.0
        %v2723 = vpack.c.bf16 %v2720, %v2719
        %v2724 = vpack.c.bf16 %v2722, %v2721
        %2725 = vst [vmem:[#allocation2 + $0x30] sm:$0xff] %v2723
        %2726 = vst [vmem:[#allocation2 + $0x78] sm:$0xff] %v2724
        %v2727 = vpack.c.bf16 %v2708, %v2707
        %v2728 = vpack.c.bf16 %v2710, %v2709
        %2729 = vst [vmem:[#allocation2 + $0x38] sm:$0xff] %v2727
        %2730 = vst [vmem:[#allocation2 + $0x80] sm:$0xff] %v2728
        %2731 = vrot.lane.b32.xlu0 %v2707, 120
        %v2732 = vpop.permute.xlu0 %2731
        %2733 = vrot.lane.b32.xlu0 %v2708, 120
        %v2734 = vpop.permute.xlu0 %2733
        %2735 = vrot.lane.b32.xlu0 %v2709, 120
        %v2736 = vpop.permute.xlu0 %2735
        %2737 = vrot.lane.b32.xlu0 %v2710, 120
        %v2738 = vpop.permute.xlu0 %2737
        %v2739 = vsel %vm505, %v2732, 0.0
        %v2740 = vsel %vm505, %v2734, 0.0
        %v2741 = vsel %vm505, %v2736, 0.0
        %v2742 = vsel %vm505, %v2738, 0.0
        %v2743 = vpack.c.bf16 %v2740, %v2739
        %v2744 = vpack.c.bf16 %v2742, %v2741
        %2745 = vst [vmem:[#allocation2 + $0x40] sm:$0xff] %v2743
        %2746 = vst [vmem:[#allocation2 + $0x88] sm:$0xff] %v2744
        %v2747 = vld [vmem:[#allocation2] sm:$0xff]
        %v2748 = vld [vmem:[#allocation2 + $0x8] sm:$0xff]
        %v2749 = vld [vmem:[#allocation2 + $0x10] sm:$0xff]
        %v2750 = vld [vmem:[#allocation2 + $0x18] sm:$0xff]
        %v2751 = vld [vmem:[#allocation2 + $0x20] sm:$0xff]
        %v2752 = vld [vmem:[#allocation2 + $0x28] sm:$0xff]
        %v2753 = vld [vmem:[#allocation2 + $0x30] sm:$0xff]
        %v2754 = vld [vmem:[#allocation2 + $0x38] sm:$0xff]
        %v2755 = vld [vmem:[#allocation2 + $0x40] sm:$0xff]
        %v2756 = vld [vmem:[#allocation2 + $0x48] sm:$0xff]
        %v2757 = vld [vmem:[#allocation2 + $0x50] sm:$0xff]
        %v2758 = vld [vmem:[#allocation2 + $0x58] sm:$0xff]
        %v2759 = vld [vmem:[#allocation2 + $0x60] sm:$0xff]
        %v2760 = vld [vmem:[#allocation2 + $0x68] sm:$0xff]
        %v2761 = vld [vmem:[#allocation2 + $0x70] sm:$0xff]
        %v2762 = vld [vmem:[#allocation2 + $0x78] sm:$0xff]
        %v2763 = vld [vmem:[#allocation2 + $0x80] sm:$0xff]
        %v2764 = vld [vmem:[#allocation2 + $0x88] sm:$0xff]
        %v2765 = vld [vmem:[#allocation12] sm:$0xf]
        %v2766 = vld [vmem:[#allocation12 + $0x4] sm:$0xf]
        %v2767 = vld [vmem:[#allocation12 + $0x8] sm:$0xf]
        %v2768 = vld [vmem:[#allocation12 + $0xc] sm:$0xf]
        %v2769 = vld [vmem:[#allocation12 + $0x10] sm:$0xf]
        %v2770 = vld [vmem:[#allocation12 + $0x14] sm:$0xf]
        %v2771 = vld [vmem:[#allocation12 + $0x18] sm:$0xf]
        %v2772 = vld [vmem:[#allocation12 + $0x1c] sm:$0xf]
        %v2773 = vld [vmem:[#allocation12 + $0x20] sm:$0xf]
        %v2774 = vld [vmem:[#allocation12 + $0x24] sm:$0xf]
        %v2775 = vld [vmem:[#allocation12 + $0x28] sm:$0xf]
        %v2776 = vld [vmem:[#allocation12 + $0x2c] sm:$0xf]
        %v2777 = vld [vmem:[#allocation12 + $0x30] sm:$0xf]
        %v2778 = vld [vmem:[#allocation12 + $0x34] sm:$0xf]
        %v2779 = vld [vmem:[#allocation12 + $0x38] sm:$0xf]
        %v2780 = vld [vmem:[#allocation12 + $0x3c] sm:$0xf]
        %v2781 = vld [vmem:[#allocation12 + $0x40] sm:$0xf]
        %v2782 = vld [vmem:[#allocation12 + $0x44] sm:$0xf]
        %v2783 = vld [vmem:[#allocation12 + $0x48] sm:$0xf]
        %v2784 = vld [vmem:[#allocation12 + $0x4c] sm:$0xf]
        %v2785 = vld [vmem:[#allocation12 + $0x50] sm:$0xf]
        %v2786 = vld [vmem:[#allocation12 + $0x54] sm:$0xf]
        %v2787 = vld [vmem:[#allocation12 + $0x58] sm:$0xf]
        %v2788 = vld [vmem:[#allocation12 + $0x5c] sm:$0xf]
        %v2789 = vld [vmem:[#allocation12 + $0x60] sm:$0xf]
        %v2790 = vld [vmem:[#allocation12 + $0x64] sm:$0xf]
        %v2791 = vld [vmem:[#allocation12 + $0x68] sm:$0xf]
        %v2792 = vld [vmem:[#allocation12 + $0x6c] sm:$0xf]
        %v2793 = vld [vmem:[#allocation12 + $0x70] sm:$0xf]
        %v2794 = vld [vmem:[#allocation12 + $0x74] sm:$0xf]
        %v2795 = vld [vmem:[#allocation12 + $0x78] sm:$0xf]
        %v2796 = vld [vmem:[#allocation12 + $0x7c] sm:$0xf]
        %v2797 = vld [vmem:[#allocation12 + $0x80] sm:$0xf]
        %v2798 = vld [vmem:[#allocation12 + $0x84] sm:$0xf]
        %v2799 = vld [vmem:[#allocation12 + $0x88] sm:$0xf]
        %v2800 = vld [vmem:[#allocation12 + $0x8c] sm:$0xf]
        %v2801 = vld [vmem:[#allocation12 + $0x90] sm:$0xf]
        %v2802 = vld [vmem:[#allocation12 + $0x94] sm:$0xf]
        %v2803 = vld [vmem:[#allocation12 + $0x98] sm:$0xf]
        %v2804 = vld [vmem:[#allocation12 + $0x9c] sm:$0xf]
        %v2805 = vld [vmem:[#allocation12 + $0xa0] sm:$0xf]
        %v2806 = vld [vmem:[#allocation12 + $0xa4] sm:$0xf]
        %v2807 = vld [vmem:[#allocation12 + $0xa8] sm:$0xf]
        %v2808 = vld [vmem:[#allocation12 + $0xac] sm:$0xf]
        %v2809 = vld [vmem:[#allocation12 + $0xb0] sm:$0xf]
        %v2810 = vld [vmem:[#allocation12 + $0xb4] sm:$0xf]
        %v2811 = vld [vmem:[#allocation12 + $0xb8] sm:$0xf]
        %v2812 = vld [vmem:[#allocation12 + $0xbc] sm:$0xf]
        %v2813 = vld [vmem:[#allocation12 + $0xc0] sm:$0xf]
        %v2814 = vld [vmem:[#allocation12 + $0xc4] sm:$0xf]
        %v2815 = vld [vmem:[#allocation12 + $0xc8] sm:$0xf]
        %v2816 = vld [vmem:[#allocation12 + $0xcc] sm:$0xf]
        %v2817 = vld [vmem:[#allocation12 + $0xd0] sm:$0xf]
        %v2818 = vld [vmem:[#allocation12 + $0xd4] sm:$0xf]
        %v2819 = vld [vmem:[#allocation12 + $0xd8] sm:$0xf]
        %v2820 = vld [vmem:[#allocation12 + $0xdc] sm:$0xf]
        %v2821 = vld [vmem:[#allocation12 + $0xe0] sm:$0xf]
        %v2822 = vld [vmem:[#allocation12 + $0xe4] sm:$0xf]
        %v2823 = vld [vmem:[#allocation12 + $0xe8] sm:$0xf]
        %v2824 = vld [vmem:[#allocation12 + $0xec] sm:$0xf]
        %v2825 = vld [vmem:[#allocation12 + $0xf0] sm:$0xf]
        %v2826 = vld [vmem:[#allocation12 + $0xf4] sm:$0xf]
        %v2827 = vld [vmem:[#allocation12 + $0xf8] sm:$0xf]
        %v2828 = vld [vmem:[#allocation12 + $0xfc] sm:$0xf]
        %v2829 = vld [vmem:[#allocation12 + $0x100] sm:$0xf]
        %v2830 = vld [vmem:[#allocation12 + $0x104] sm:$0xf]
        %v2831 = vld [vmem:[#allocation12 + $0x108] sm:$0xf]
        %v2832 = vld [vmem:[#allocation12 + $0x10c] sm:$0xf]
        %v2833 = vld [vmem:[#allocation12 + $0x110] sm:$0xf]
        %v2834 = vld [vmem:[#allocation12 + $0x114] sm:$0xf]
        %v2835 = vld [vmem:[#allocation12 + $0x118] sm:$0xf]
        %v2836 = vld [vmem:[#allocation12 + $0x11c] sm:$0xf]
        %v2837 = vld [vmem:[#allocation12 + $0x120] sm:$0xf]
        %v2838 = vld [vmem:[#allocation12 + $0x124] sm:$0xf]
        %v2839 = vld [vmem:[#allocation12 + $0x128] sm:$0xf]
        %v2840 = vld [vmem:[#allocation12 + $0x12c] sm:$0xf]
        %v2841 = vld [vmem:[#allocation12 + $0x130] sm:$0xf]
        %v2842 = vld [vmem:[#allocation12 + $0x134] sm:$0xf]
        %v2843 = vld [vmem:[#allocation12 + $0x138] sm:$0xf]
        %v2844 = vld [vmem:[#allocation12 + $0x13c] sm:$0xf]
        %v2845 = vld [vmem:[#allocation12 + $0x140] sm:$0xf]
        %v2846 = vld [vmem:[#allocation12 + $0x144] sm:$0xf]
        %v2847 = vld [vmem:[#allocation12 + $0x148] sm:$0xf]
        %v2848 = vld [vmem:[#allocation12 + $0x14c] sm:$0xf]
        %v2849 = vld [vmem:[#allocation12 + $0x150] sm:$0xf]
        %v2850 = vld [vmem:[#allocation12 + $0x154] sm:$0xf]
        %v2851 = vld [vmem:[#allocation12 + $0x158] sm:$0xf]
        %v2852 = vld [vmem:[#allocation12 + $0x15c] sm:$0xf]
        %v2853 = vld [vmem:[#allocation12 + $0x160] sm:$0xf]
        %v2854 = vld [vmem:[#allocation12 + $0x164] sm:$0xf]
        %v2855 = vld [vmem:[#allocation12 + $0x168] sm:$0xf]
        %v2856 = vld [vmem:[#allocation12 + $0x16c] sm:$0xf]
        %v2857 = vld [vmem:[#allocation12 + $0x170] sm:$0xf]
        %v2858 = vld [vmem:[#allocation12 + $0x174] sm:$0xf]
        %v2859 = vld [vmem:[#allocation12 + $0x178] sm:$0xf]
        %v2860 = vld [vmem:[#allocation12 + $0x17c] sm:$0xf]
        %v2861 = vld [vmem:[#allocation12 + $0x180] sm:$0xf]
        %v2862 = vld [vmem:[#allocation12 + $0x184] sm:$0xf]
        %v2863 = vld [vmem:[#allocation12 + $0x188] sm:$0xf]
        %v2864 = vld [vmem:[#allocation12 + $0x18c] sm:$0xf]
        %v2865 = vld [vmem:[#allocation12 + $0x190] sm:$0xf]
        %v2866 = vld [vmem:[#allocation12 + $0x194] sm:$0xf]
        %v2867 = vld [vmem:[#allocation12 + $0x198] sm:$0xf]
        %v2868 = vld [vmem:[#allocation12 + $0x19c] sm:$0xf]
        %v2869 = vld [vmem:[#allocation12 + $0x1a0] sm:$0xf]
        %v2870 = vld [vmem:[#allocation12 + $0x1a4] sm:$0xf]
        %v2871 = vld [vmem:[#allocation12 + $0x1a8] sm:$0xf]
        %v2872 = vld [vmem:[#allocation12 + $0x1ac] sm:$0xf]
        %v2873 = vld [vmem:[#allocation12 + $0x1b0] sm:$0xf]
        %v2874 = vld [vmem:[#allocation12 + $0x1b4] sm:$0xf]
        %v2875 = vld [vmem:[#allocation12 + $0x1b8] sm:$0xf]
        %v2876 = vld [vmem:[#allocation12 + $0x1bc] sm:$0xf]
        %v2877 = vld [vmem:[#allocation12 + $0x1c0] sm:$0xf]
        %v2878 = vld [vmem:[#allocation12 + $0x1c4] sm:$0xf]
        %v2879 = vld [vmem:[#allocation12 + $0x1c8] sm:$0xf]
        %v2880 = vld [vmem:[#allocation12 + $0x1cc] sm:$0xf]
        %v2881 = vld [vmem:[#allocation12 + $0x1d0] sm:$0xf]
        %v2882 = vld [vmem:[#allocation12 + $0x1d4] sm:$0xf]
        %v2883 = vld [vmem:[#allocation12 + $0x1d8] sm:$0xf]
        %v2884 = vld [vmem:[#allocation12 + $0x1dc] sm:$0xf]
        %v2885 = vld [vmem:[#allocation12 + $0x1e0] sm:$0xf]
        %v2886 = vld [vmem:[#allocation12 + $0x1e4] sm:$0xf]
        %v2887 = vld [vmem:[#allocation12 + $0x1e8] sm:$0xf]
        %v2888 = vld [vmem:[#allocation12 + $0x1ec] sm:$0xf]
        %v2889 = vld [vmem:[#allocation12 + $0x1f0] sm:$0xf]
        %v2890 = vld [vmem:[#allocation12 + $0x1f4] sm:$0xf]
        %v2891 = vld [vmem:[#allocation12 + $0x1f8] sm:$0xf]
        %v2892 = vld [vmem:[#allocation12 + $0x1fc] sm:$0xf]
        %v2893 = vld [vmem:[#allocation12 + $0x200] sm:$0xf]
        %v2894 = vld [vmem:[#allocation12 + $0x204] sm:$0xf]
        %v2895 = vld [vmem:[#allocation12 + $0x208] sm:$0xf]
        %v2896 = vld [vmem:[#allocation12 + $0x20c] sm:$0xf]
        %v2897 = vld [vmem:[#allocation12 + $0x210] sm:$0xf]
        %v2898 = vld [vmem:[#allocation12 + $0x214] sm:$0xf]
        %v2899 = vld [vmem:[#allocation12 + $0x218] sm:$0xf]
        %v2900 = vld [vmem:[#allocation12 + $0x21c] sm:$0xf]
        %v2901 = vld [vmem:[#allocation12 + $0x220] sm:$0xf]
        %v2902 = vld [vmem:[#allocation12 + $0x224] sm:$0xf]
        %v2903 = vld [vmem:[#allocation12 + $0x228] sm:$0xf]
        %v2904 = vld [vmem:[#allocation12 + $0x22c] sm:$0xf]
        %v2905 = vld [vmem:[#allocation12 + $0x230] sm:$0xf]
        %v2906 = vld [vmem:[#allocation12 + $0x234] sm:$0xf]
        %v2907 = vld [vmem:[#allocation12 + $0x238] sm:$0xf]
        %v2908 = vld [vmem:[#allocation12 + $0x23c] sm:$0xf]
        %v2909 = vlaneseq
        %v2910 = vshrl.u32 %v2909, 7
        %v2911 = vsub.s32 2, %v2910
        %v2912 = vrot.slane %v440, %v2911
        %v3057 = vunpack.c.l.b16 %v2765
        %v3058 = vunpack.c.l.b16 %v2766
        %v3059 = vunpack.c.l.b16 %v2767
        %v3060 = vunpack.c.l.b16 %v2768
        %v3061 = vunpack.c.l.b16 %v2769
        %v3062 = vunpack.c.l.b16 %v2770
        %v3063 = vunpack.c.l.b16 %v2771
        %v3064 = vunpack.c.l.b16 %v2772
        %v3065 = vunpack.c.l.b16 %v2773
        %v3066 = vunpack.c.l.b16 %v2774
        %v3067 = vunpack.c.l.b16 %v2775
        %v3068 = vunpack.c.l.b16 %v2776
        %v3069 = vunpack.c.l.b16 %v2777
        %v3070 = vunpack.c.l.b16 %v2778
        %v3071 = vunpack.c.l.b16 %v2779
        %v3072 = vunpack.c.l.b16 %v2780
        %v3073 = vunpack.c.l.b16 %v2781
        %v3074 = vunpack.c.l.b16 %v2782
        %v3075 = vunpack.c.l.b16 %v2783
        %v3076 = vunpack.c.l.b16 %v2784
        %v3077 = vunpack.c.l.b16 %v2785
        %v3078 = vunpack.c.l.b16 %v2786
        %v3079 = vunpack.c.l.b16 %v2787
        %v3080 = vunpack.c.l.b16 %v2788
        %v3081 = vunpack.c.l.b16 %v2789
        %v3082 = vunpack.c.l.b16 %v2790
        %v3083 = vunpack.c.l.b16 %v2791
        %v3084 = vunpack.c.l.b16 %v2792
        %v3085 = vunpack.c.l.b16 %v2793
        %v3086 = vunpack.c.l.b16 %v2794
        %v3087 = vunpack.c.l.b16 %v2795
        %v3088 = vunpack.c.l.b16 %v2796
        %v3089 = vunpack.c.l.b16 %v2797
        %v3090 = vunpack.c.l.b16 %v2798
        %v3091 = vunpack.c.l.b16 %v2799
        %v3092 = vunpack.c.l.b16 %v2800
        %v3093 = vunpack.c.l.b16 %v2801
        %v3094 = vunpack.c.l.b16 %v2802
        %v3095 = vunpack.c.l.b16 %v2803
        %v3096 = vunpack.c.l.b16 %v2804
        %v3097 = vunpack.c.l.b16 %v2805
        %v3098 = vunpack.c.l.b16 %v2806
        %v3099 = vunpack.c.l.b16 %v2807
        %v3100 = vunpack.c.l.b16 %v2808
        %v3101 = vunpack.c.l.b16 %v2809
        %v3102 = vunpack.c.l.b16 %v2810
        %v3103 = vunpack.c.l.b16 %v2811
        %v3104 = vunpack.c.l.b16 %v2812
        %v3105 = vunpack.c.l.b16 %v2813
        %v3106 = vunpack.c.l.b16 %v2814
        %v3107 = vunpack.c.l.b16 %v2815
        %v3108 = vunpack.c.l.b16 %v2816
        %v3109 = vunpack.c.l.b16 %v2817
        %v3110 = vunpack.c.l.b16 %v2818
        %v3111 = vunpack.c.l.b16 %v2819
        %v3112 = vunpack.c.l.b16 %v2820
        %v3113 = vunpack.c.l.b16 %v2821
        %v3114 = vunpack.c.l.b16 %v2822
        %v3115 = vunpack.c.l.b16 %v2823
        %v3116 = vunpack.c.l.b16 %v2824
        %v3117 = vunpack.c.l.b16 %v2825
        %v3118 = vunpack.c.l.b16 %v2826
        %v3119 = vunpack.c.l.b16 %v2827
        %v3120 = vunpack.c.l.b16 %v2828
        %v3121 = vunpack.c.l.b16 %v2829
        %v3122 = vunpack.c.l.b16 %v2830
        %v3123 = vunpack.c.l.b16 %v2831
        %v3124 = vunpack.c.l.b16 %v2832
        %v3125 = vunpack.c.l.b16 %v2833
        %v3126 = vunpack.c.l.b16 %v2834
        %v3127 = vunpack.c.l.b16 %v2835
        %v3128 = vunpack.c.l.b16 %v2836
        %v3129 = vunpack.c.l.b16 %v2837
        %v3130 = vunpack.c.l.b16 %v2838
        %v3131 = vunpack.c.l.b16 %v2839
        %v3132 = vunpack.c.l.b16 %v2840
        %v3133 = vunpack.c.l.b16 %v2841
        %v3134 = vunpack.c.l.b16 %v2842
        %v3135 = vunpack.c.l.b16 %v2843
        %v3136 = vunpack.c.l.b16 %v2844
        %v3137 = vunpack.c.l.b16 %v2845
        %v3138 = vunpack.c.l.b16 %v2846
        %v3139 = vunpack.c.l.b16 %v2847
        %v3140 = vunpack.c.l.b16 %v2848
        %v3141 = vunpack.c.l.b16 %v2849
        %v3142 = vunpack.c.l.b16 %v2850
        %v3143 = vunpack.c.l.b16 %v2851
        %v3144 = vunpack.c.l.b16 %v2852
        %v3145 = vunpack.c.l.b16 %v2853
        %v3146 = vunpack.c.l.b16 %v2854
        %v3147 = vunpack.c.l.b16 %v2855
        %v3148 = vunpack.c.l.b16 %v2856
        %v3149 = vunpack.c.l.b16 %v2857
        %v3150 = vunpack.c.l.b16 %v2858
        %v3151 = vunpack.c.l.b16 %v2859
        %v3152 = vunpack.c.l.b16 %v2860
        %v3153 = vunpack.c.l.b16 %v2861
        %v3154 = vunpack.c.l.b16 %v2862
        %v3155 = vunpack.c.l.b16 %v2863
        %v3156 = vunpack.c.l.b16 %v2864
        %v3157 = vunpack.c.l.b16 %v2865
        %v3158 = vunpack.c.l.b16 %v2866
        %v3159 = vunpack.c.l.b16 %v2867
        %v3160 = vunpack.c.l.b16 %v2868
        %v3161 = vunpack.c.l.b16 %v2869
        %v3162 = vunpack.c.l.b16 %v2870
        %v3163 = vunpack.c.l.b16 %v2871
        %v3164 = vunpack.c.l.b16 %v2872
        %v3165 = vunpack.c.l.b16 %v2873
        %v3166 = vunpack.c.l.b16 %v2874
        %v3167 = vunpack.c.l.b16 %v2875
        %v3168 = vunpack.c.l.b16 %v2876
        %v3169 = vunpack.c.l.b16 %v2877
        %v3170 = vunpack.c.l.b16 %v2878
        %v3171 = vunpack.c.l.b16 %v2879
        %v3172 = vunpack.c.l.b16 %v2880
        %v3173 = vunpack.c.l.b16 %v2881
        %v3174 = vunpack.c.l.b16 %v2882
        %v3175 = vunpack.c.l.b16 %v2883
        %v3176 = vunpack.c.l.b16 %v2884
        %v3177 = vunpack.c.l.b16 %v2885
        %v3178 = vunpack.c.l.b16 %v2886
        %v3179 = vunpack.c.l.b16 %v2887
        %v3180 = vunpack.c.l.b16 %v2888
        %v3181 = vunpack.c.l.b16 %v2889
        %v3182 = vunpack.c.l.b16 %v2890
        %v3183 = vunpack.c.l.b16 %v2891
        %v3184 = vunpack.c.l.b16 %v2892
        %v3185 = vunpack.c.l.b16 %v2893
        %v3186 = vunpack.c.l.b16 %v2894
        %v3187 = vunpack.c.l.b16 %v2895
        %v3188 = vunpack.c.l.b16 %v2896
        %v3189 = vunpack.c.l.b16 %v2897
        %v3190 = vunpack.c.l.b16 %v2898
        %v3191 = vunpack.c.l.b16 %v2899
        %v3192 = vunpack.c.l.b16 %v2900
        %v3193 = vunpack.c.l.b16 %v2901
        %v3194 = vunpack.c.l.b16 %v2902
        %v3195 = vunpack.c.l.b16 %v2903
        %v3196 = vunpack.c.l.b16 %v2904
        %v3197 = vunpack.c.l.b16 %v2905
        %v3198 = vunpack.c.l.b16 %v2906
        %v3199 = vunpack.c.l.b16 %v2907
        %v3200 = vunpack.c.l.b16 %v2908
        %v3201 = vpack.c.b16 %v3058, %v3057
        %v3202 = vpack.c.b16 %v3060, %v3059
        %v3203 = vpack.c.b16 %v3062, %v3061
        %v3204 = vpack.c.b16 %v3064, %v3063
        %v3205 = vpack.c.b16 %v3066, %v3065
        %v3206 = vpack.c.b16 %v3068, %v3067
        %v3207 = vpack.c.b16 %v3070, %v3069
        %v3208 = vpack.c.b16 %v3072, %v3071
        %v3209 = vpack.c.b16 %v3074, %v3073
        %v3210 = vpack.c.b16 %v3076, %v3075
        %v3211 = vpack.c.b16 %v3078, %v3077
        %v3212 = vpack.c.b16 %v3080, %v3079
        %v3213 = vpack.c.b16 %v3082, %v3081
        %v3214 = vpack.c.b16 %v3084, %v3083
        %v3215 = vpack.c.b16 %v3086, %v3085
        %v3216 = vpack.c.b16 %v3088, %v3087
        %v3217 = vpack.c.b16 %v3090, %v3089
        %v3218 = vpack.c.b16 %v3092, %v3091
        %v3219 = vpack.c.b16 %v3094, %v3093
        %v3220 = vpack.c.b16 %v3096, %v3095
        %v3221 = vpack.c.b16 %v3098, %v3097
        %v3222 = vpack.c.b16 %v3100, %v3099
        %v3223 = vpack.c.b16 %v3102, %v3101
        %v3224 = vpack.c.b16 %v3104, %v3103
        %v3225 = vpack.c.b16 %v3106, %v3105
        %v3226 = vpack.c.b16 %v3108, %v3107
        %v3227 = vpack.c.b16 %v3110, %v3109
        %v3228 = vpack.c.b16 %v3112, %v3111
        %v3229 = vpack.c.b16 %v3114, %v3113
        %v3230 = vpack.c.b16 %v3116, %v3115
        %v3231 = vpack.c.b16 %v3118, %v3117
        %v3232 = vpack.c.b16 %v3120, %v3119
        %v3233 = vpack.c.b16 %v3122, %v3121
        %v3234 = vpack.c.b16 %v3124, %v3123
        %v3235 = vpack.c.b16 %v3126, %v3125
        %v3236 = vpack.c.b16 %v3128, %v3127
        %v3237 = vpack.c.b16 %v3130, %v3129
        %v3238 = vpack.c.b16 %v3132, %v3131
        %v3239 = vpack.c.b16 %v3134, %v3133
        %v3240 = vpack.c.b16 %v3136, %v3135
        %v3241 = vpack.c.b16 %v3138, %v3137
        %v3242 = vpack.c.b16 %v3140, %v3139
        %v3243 = vpack.c.b16 %v3142, %v3141
        %v3244 = vpack.c.b16 %v3144, %v3143
        %v3245 = vpack.c.b16 %v3146, %v3145
        %v3246 = vpack.c.b16 %v3148, %v3147
        %v3247 = vpack.c.b16 %v3150, %v3149
        %v3248 = vpack.c.b16 %v3152, %v3151
        %v3249 = vpack.c.b16 %v3154, %v3153
        %v3250 = vpack.c.b16 %v3156, %v3155
        %v3251 = vpack.c.b16 %v3158, %v3157
        %v3252 = vpack.c.b16 %v3160, %v3159
        %v3253 = vpack.c.b16 %v3162, %v3161
        %v3254 = vpack.c.b16 %v3164, %v3163
        %v3255 = vpack.c.b16 %v3166, %v3165
        %v3256 = vpack.c.b16 %v3168, %v3167
        %v3257 = vpack.c.b16 %v3170, %v3169
        %v3258 = vpack.c.b16 %v3172, %v3171
        %v3259 = vpack.c.b16 %v3174, %v3173
        %v3260 = vpack.c.b16 %v3176, %v3175
        %v3261 = vpack.c.b16 %v3178, %v3177
        %v3262 = vpack.c.b16 %v3180, %v3179
        %v3263 = vpack.c.b16 %v3182, %v3181
        %v3264 = vpack.c.b16 %v3184, %v3183
        %v3265 = vpack.c.b16 %v3186, %v3185
        %v3266 = vpack.c.b16 %v3188, %v3187
        %v3267 = vpack.c.b16 %v3190, %v3189
        %v3268 = vpack.c.b16 %v3192, %v3191
        %v3269 = vpack.c.b16 %v3194, %v3193
        %v3270 = vpack.c.b16 %v3196, %v3195
        %v3271 = vpack.c.b16 %v3198, %v3197
        %v3272 = vpack.c.b16 %v3200, %v3199
        %3345 = vmatprep.subr.bf16.mxu0 0
        %3346 = vmatpush1.bf16.msra.mxu0 %v3201
        %3347 = vmatprep.subr.bf16.mxu0 0
        %3348 = vmatpush1.bf16.msra.mxu0 %v3202
        %3349 = vmatprep.subr.bf16.mxu0 0
        %3350 = vmatpush1.bf16.msra.mxu0 %v3203
        %3351 = vmatprep.subr.bf16.mxu0 0
        %3352 = vmatpush1.bf16.msra.mxu0 %v3204
        %3353 = vmatprep.subr.bf16.mxu0 0
        %3354 = vmatpush1.bf16.msra.mxu0 %v3205
        %3355 = vmatprep.subr.bf16.mxu0 0
        %3356 = vmatpush1.bf16.msra.mxu0 %v3206
        %3357 = vmatprep.subr.bf16.mxu0 0
        %3358 = vmatpush1.bf16.msra.mxu0 %v3207
        %3359 = vmatprep.subr.bf16.mxu0 0
        %3360 = vmatpush1.bf16.msra.mxu0 %v3208
        %3361 = vmatprep.subr.bf16.mxu0 0
        %3362 = vmatpush1.bf16.msra.mxu0 %v3209
        %3363 = vmatprep.subr.bf16.mxu0 0
        %3364 = vmatpush1.bf16.msra.mxu0 %v3210
        %3365 = vmatprep.subr.bf16.mxu0 0
        %3366 = vmatpush1.bf16.msra.mxu0 %v3211
        %3367 = vmatprep.subr.bf16.mxu0 0
        %3368 = vmatpush1.bf16.msra.mxu0 %v3212
        %3369 = vmatprep.subr.bf16.mxu0 0
        %3370 = vmatpush1.bf16.msra.mxu0 %v3213
        %3371 = vmatprep.subr.bf16.mxu0 0
        %3372 = vmatpush1.bf16.msra.mxu0 %v3214
        %3373 = vmatprep.subr.bf16.mxu0 0
        %3374 = vmatpush1.bf16.msra.mxu0 %v3215
        %3375 = vmatprep.subr.bf16.mxu0 0
        %3376 = vmatpush1.bf16.msra.mxu0 %v3216
        %3377 = vmatprep.mubr.bf16.mxu0 %v2748
        %3378 = vmatmul.mubr.bf16.gmra.mrb[0].mxu0 %v2747
        %v3379 = vpop.f32.mrb[0].mxu0
        %v3380 = vadd.f32 %v2912, %v3379
        %v3381 = vpop.f32.mrb[0].mxu0
        %v3382 = vpop.f32.mrb[0].mxu0
        %v3383 = vadd.f32 %v2912, %v3382
        %v3384 = vpop.f32.mrb[0].mxu0
        %3385 = vmatprep.mubr.bf16.mxu0 %v2757
        %3386 = vmatmul.mubr.bf16.gmra.mrb[0].mxu0 %v2756
        %v3387 = vpop.f32.mrb[0].mxu0
        %v3388 = vadd.f32 %v2912, %v3387
        %v3389 = vpop.f32.mrb[0].mxu0
        %v3390 = vpop.f32.mrb[0].mxu0
        %v3391 = vadd.f32 %v2912, %v3390
        %v3392 = vpop.f32.mrb[0].mxu0
        %3393 = vdwg.mxu0
        %3394 = vmatprep.subr.bf16.mxu0 0
        %3395 = vmatpush1.bf16.msra.mxu0 %v3217
        %3396 = vmatprep.subr.bf16.mxu0 0
        %3397 = vmatpush1.bf16.msra.mxu0 %v3218
        %3398 = vmatprep.subr.bf16.mxu0 0
        %3399 = vmatpush1.bf16.msra.mxu0 %v3219
        %3400 = vmatprep.subr.bf16.mxu0 0
        %3401 = vmatpush1.bf16.msra.mxu0 %v3220
        %3402 = vmatprep.subr.bf16.mxu0 0
        %3403 = vmatpush1.bf16.msra.mxu0 %v3221
        %3404 = vmatprep.subr.bf16.mxu0 0
        %3405 = vmatpush1.bf16.msra.mxu0 %v3222
        %3406 = vmatprep.subr.bf16.mxu0 0
        %3407 = vmatpush1.bf16.msra.mxu0 %v3223
        %3408 = vmatprep.subr.bf16.mxu0 0
        %3409 = vmatpush1.bf16.msra.mxu0 %v3224
        %3410 = vmatprep.subr.bf16.mxu0 0
        %3411 = vmatpush1.bf16.msra.mxu0 %v3225
        %3412 = vmatprep.subr.bf16.mxu0 0
        %3413 = vmatpush1.bf16.msra.mxu0 %v3226
        %3414 = vmatprep.subr.bf16.mxu0 0
        %3415 = vmatpush1.bf16.msra.mxu0 %v3227
        %3416 = vmatprep.subr.bf16.mxu0 0
        %3417 = vmatpush1.bf16.msra.mxu0 %v3228
        %3418 = vmatprep.subr.bf16.mxu0 0
        %3419 = vmatpush1.bf16.msra.mxu0 %v3229
        %3420 = vmatprep.subr.bf16.mxu0 0
        %3421 = vmatpush1.bf16.msra.mxu0 %v3230
        %3422 = vmatprep.subr.bf16.mxu0 0
        %3423 = vmatpush1.bf16.msra.mxu0 %v3231
        %3424 = vmatprep.subr.bf16.mxu0 0
        %3425 = vmatpush1.bf16.msra.mxu0 %v3232
        %3426 = vmatprep.mubr.bf16.mxu0 %v2750
        %3427 = vmatmul.mubr.bf16.gmra.mrb[0].mxu0 %v2749
        %v3428 = vpop.f32.mrb[0].mxu0
        %v3429 = vadd.f32 %v3380, %v3428
        %v3430 = vpop.f32.mrb[0].mxu0
        %v3431 = vpop.f32.mrb[0].mxu0
        %v3432 = vadd.f32 %v3383, %v3431
        %v3433 = vpop.f32.mrb[0].mxu0
        %3434 = vmatprep.mubr.bf16.mxu0 %v2759
        %3435 = vmatmul.mubr.bf16.gmra.mrb[0].mxu0 %v2758
        %v3436 = vpop.f32.mrb[0].mxu0
        %v3437 = vadd.f32 %v3388, %v3436
        %v3438 = vpop.f32.mrb[0].mxu0
        %v3439 = vpop.f32.mrb[0].mxu0
        %v3440 = vadd.f32 %v3391, %v3439
        %v3441 = vpop.f32.mrb[0].mxu0
        %3442 = vdwg.mxu0
        %3443 = vmatprep.subr.bf16.mxu0 0
        %3444 = vmatpush1.bf16.msra.mxu0 %v3233
        %3445 = vmatprep.subr.bf16.mxu0 0
        %3446 = vmatpush1.bf16.msra.mxu0 %v3234
        %3447 = vmatprep.subr.bf16.mxu0 0
        %3448 = vmatpush1.bf16.msra.mxu0 %v3235
        %3449 = vmatprep.subr.bf16.mxu0 0
        %3450 = vmatpush1.bf16.msra.mxu0 %v3236
        %3451 = vmatprep.subr.bf16.mxu0 0
        %3452 = vmatpush1.bf16.msra.mxu0 %v3237
        %3453 = vmatprep.subr.bf16.mxu0 0
        %3454 = vmatpush1.bf16.msra.mxu0 %v3238
        %3455 = vmatprep.subr.bf16.mxu0 0
        %3456 = vmatpush1.bf16.msra.mxu0 %v3239
        %3457 = vmatprep.subr.bf16.mxu0 0
        %3458 = vmatpush1.bf16.msra.mxu0 %v3240
        %3459 = vmatprep.subr.bf16.mxu0 0
        %3460 = vmatpush1.bf16.msra.mxu0 %v3241
        %3461 = vmatprep.subr.bf16.mxu0 0
        %3462 = vmatpush1.bf16.msra.mxu0 %v3242
        %3463 = vmatprep.subr.bf16.mxu0 0
        %3464 = vmatpush1.bf16.msra.mxu0 %v3243
        %3465 = vmatprep.subr.bf16.mxu0 0
        %3466 = vmatpush1.bf16.msra.mxu0 %v3244
        %3467 = vmatprep.subr.bf16.mxu0 0
        %3468 = vmatpush1.bf16.msra.mxu0 %v3245
        %3469 = vmatprep.subr.bf16.mxu0 0
        %3470 = vmatpush1.bf16.msra.mxu0 %v3246
        %3471 = vmatprep.subr.bf16.mxu0 0
        %3472 = vmatpush1.bf16.msra.mxu0 %v3247
        %3473 = vmatprep.subr.bf16.mxu0 0
        %3474 = vmatpush1.bf16.msra.mxu0 %v3248
        %3475 = vmatprep.mubr.bf16.mxu0 %v2752
        %3476 = vmatmul.mubr.bf16.gmra.mrb[0].mxu0 %v2751
        %v3477 = vpop.f32.mrb[0].mxu0
        %v3478 = vadd.f32 %v3429, %v3477
        %v3479 = vpop.f32.mrb[0].mxu0
        %v3480 = vpop.f32.mrb[0].mxu0
        %v3481 = vadd.f32 %v3432, %v3480
        %v3482 = vpop.f32.mrb[0].mxu0
        %3483 = vmatprep.mubr.bf16.mxu0 %v2761
        %3484 = vmatmul.mubr.bf16.gmra.mrb[0].mxu0 %v2760
        %v3485 = vpop.f32.mrb[0].mxu0
        %v3486 = vadd.f32 %v3437, %v3485
        %v3487 = vpop.f32.mrb[0].mxu0
        %v3488 = vpop.f32.mrb[0].mxu0
        %v3489 = vadd.f32 %v3440, %v3488
        %v3490 = vpop.f32.mrb[0].mxu0
        %3491 = vdwg.mxu0
        %3492 = vmatprep.subr.bf16.mxu0 0
        %3493 = vmatpush1.bf16.msra.mxu0 %v3249
        %3494 = vmatprep.subr.bf16.mxu0 0
        %3495 = vmatpush1.bf16.msra.mxu0 %v3250
        %3496 = vmatprep.subr.bf16.mxu0 0
        %3497 = vmatpush1.bf16.msra.mxu0 %v3251
        %3498 = vmatprep.subr.bf16.mxu0 0
        %3499 = vmatpush1.bf16.msra.mxu0 %v3252
        %3500 = vmatprep.subr.bf16.mxu0 0
        %3501 = vmatpush1.bf16.msra.mxu0 %v3253
        %3502 = vmatprep.subr.bf16.mxu0 0
        %3503 = vmatpush1.bf16.msra.mxu0 %v3254
        %3504 = vmatprep.subr.bf16.mxu0 0
        %3505 = vmatpush1.bf16.msra.mxu0 %v3255
        %3506 = vmatprep.subr.bf16.mxu0 0
        %3507 = vmatpush1.bf16.msra.mxu0 %v3256
        %3508 = vmatprep.subr.bf16.mxu0 0
        %3509 = vmatpush1.bf16.msra.mxu0 %v3257
        %3510 = vmatprep.subr.bf16.mxu0 0
        %3511 = vmatpush1.bf16.msra.mxu0 %v3258
        %3512 = vmatprep.subr.bf16.mxu0 0
        %3513 = vmatpush1.bf16.msra.mxu0 %v3259
        %3514 = vmatprep.subr.bf16.mxu0 0
        %3515 = vmatpush1.bf16.msra.mxu0 %v3260
        %3516 = vmatprep.subr.bf16.mxu0 0
        %3517 = vmatpush1.bf16.msra.mxu0 %v3261
        %3518 = vmatprep.subr.bf16.mxu0 0
        %3519 = vmatpush1.bf16.msra.mxu0 %v3262
        %3520 = vmatprep.subr.bf16.mxu0 0
        %3521 = vmatpush1.bf16.msra.mxu0 %v3263
        %3522 = vmatprep.subr.bf16.mxu0 0
        %3523 = vmatpush1.bf16.msra.mxu0 %v3264
        %3524 = vmatprep.mubr.bf16.mxu0 %v2754
        %3525 = vmatmul.mubr.bf16.gmra.mrb[0].mxu0 %v2753
        %v3526 = vpop.f32.mrb[0].mxu0
        %v3527 = vadd.f32 %v3478, %v3526
        %v3528 = vpop.f32.mrb[0].mxu0
        %v3529 = vpop.f32.mrb[0].mxu0
        %v3530 = vadd.f32 %v3481, %v3529
        %v3531 = vpop.f32.mrb[0].mxu0
        %3532 = vmatprep.mubr.bf16.mxu0 %v2763
        %3533 = vmatmul.mubr.bf16.gmra.mrb[0].mxu0 %v2762
        %v3534 = vpop.f32.mrb[0].mxu0
        %v3535 = vadd.f32 %v3486, %v3534
        %v3536 = vpop.f32.mrb[0].mxu0
        %v3537 = vpop.f32.mrb[0].mxu0
        %v3538 = vadd.f32 %v3489, %v3537
        %v3539 = vpop.f32.mrb[0].mxu0
        %3540 = vdwg.mxu0
        %3541 = vmatprep.subr.bf16.mxu0 0
        %3542 = vmatpush1.bf16.msra.mxu0 %v3265
        %3543 = vmatprep.subr.bf16.mxu0 0
        %3544 = vmatpush1.bf16.msra.mxu0 %v3266
        %3545 = vmatprep.subr.bf16.mxu0 0
        %3546 = vmatpush1.bf16.msra.mxu0 %v3267
        %3547 = vmatprep.subr.bf16.mxu0 0
        %3548 = vmatpush1.bf16.msra.mxu0 %v3268
        %3549 = vmatprep.subr.bf16.mxu0 0
        %3550 = vmatpush1.bf16.msra.mxu0 %v3269
        %3551 = vmatprep.subr.bf16.mxu0 0
        %3552 = vmatpush1.bf16.msra.mxu0 %v3270
        %3553 = vmatprep.subr.bf16.mxu0 0
        %3554 = vmatpush1.bf16.msra.mxu0 %v3271
        %3555 = vmatprep.subr.bf16.mxu0 0
        %3556 = vmatpush1.bf16.msra.mxu0 %v3272
        %3557 = vmatprep.subr.bf16.mxu0 0
        %3558 = vmatpush1.bf16.msra.mxu0 0
        %3559 = vmatprep.subr.bf16.mxu0 0
        %3560 = vmatpush1.bf16.msra.mxu0 0
        %3561 = vmatprep.subr.bf16.mxu0 0
        %3562 = vmatpush1.bf16.msra.mxu0 0
        %3563 = vmatprep.subr.bf16.mxu0 0
        %3564 = vmatpush1.bf16.msra.mxu0 0
        %3565 = vmatprep.subr.bf16.mxu0 0
        %3566 = vmatpush1.bf16.msra.mxu0 0
        %3567 = vmatprep.subr.bf16.mxu0 0
        %3568 = vmatpush1.bf16.msra.mxu0 0
        %3569 = vmatprep.subr.bf16.mxu0 0
        %3570 = vmatpush1.bf16.msra.mxu0 0
        %3571 = vmatprep.subr.bf16.mxu0 0
        %3572 = vmatpush1.bf16.msra.mxu0 0
        %3573 = vmatprep.mubr.bf16.mxu0 0
        %3574 = vmatmul.mubr.bf16.gmra.mrb[0].mxu0 %v2755
        %v3575 = vpop.f32.mrb[0].mxu0
        %v3576 = vadd.f32 %v3527, %v3575
        %v3577 = vpop.f32.mrb[0].mxu0
        %v3578 = vpop.f32.mrb[0].mxu0
        %v3579 = vadd.f32 %v3530, %v3578
        %v3580 = vpop.f32.mrb[0].mxu0
        %3581 = vmatprep.mubr.bf16.mxu0 0
        %3582 = vmatmul.mubr.bf16.gmra.mrb[0].mxu0 %v2764
        %v3583 = vpop.f32.mrb[0].mxu0
        %v3584 = vadd.f32 %v3535, %v3583
        %v3585 = vpop.f32.mrb[0].mxu0
        %v3586 = vpop.f32.mrb[0].mxu0
        %v3587 = vadd.f32 %v3538, %v3586
        %v3588 = vpop.f32.mrb[0].mxu0
        %3589 = vdwg.mxu0
        %v3590 = vmul.f32 %v3576, 0.01
        %v3591 = vmul.f32 %v3579, 0.01
        %v3592 = vmul.f32 %v3584, 0.01
        %v3593 = vmul.f32 %v3587, 0.01
        %v3594 = vmax.f32 %v3576, %v3590
        %v3595 = vmax.f32 %v3579, %v3591
        %v3596 = vmax.f32 %v3584, %v3592
        %v3597 = vmax.f32 %v3587, %v3593
        %v3598 = vpack.c.bf16 %v3595, %v3594
        %v3599 = vpack.c.bf16 %v3597, %v3596
        %v3600 = vld [vmem:[#allocation14] sm:$0xf]
        %v3601 = vld [vmem:[#allocation14 + $0x4] sm:$0xf]
        %v3602 = vld [vmem:[#allocation14 + $0x8] sm:$0xf]
        %v3603 = vld [vmem:[#allocation14 + $0xc] sm:$0xf]
        %v3604 = vld [vmem:[#allocation14 + $0x10] sm:$0xf]
        %v3605 = vld [vmem:[#allocation14 + $0x14] sm:$0xf]
        %v3606 = vld [vmem:[#allocation14 + $0x18] sm:$0xf]
        %v3607 = vld [vmem:[#allocation14 + $0x1c] sm:$0xf]
        %v3608 = vld [vmem:[#allocation14 + $0x20] sm:$0xf]
        %v3609 = vld [vmem:[#allocation14 + $0x24] sm:$0xf]
        %v3610 = vld [vmem:[#allocation14 + $0x28] sm:$0xf]
        %v3611 = vld [vmem:[#allocation14 + $0x2c] sm:$0xf]
        %v3612 = vld [vmem:[#allocation14 + $0x30] sm:$0xf]
        %v3613 = vld [vmem:[#allocation14 + $0x34] sm:$0xf]
        %v3614 = vld [vmem:[#allocation14 + $0x38] sm:$0xf]
        %v3615 = vld [vmem:[#allocation14 + $0x3c] sm:$0xf]
        %v3616 = vld [vmem:[%s378] sm:$0xf]
        %v3617 = vld [vmem:[%s378 + $0x4] sm:$0xf]
        %v3618 = vld [vmem:[%s378 + $0x8] sm:$0xf]
        %v3619 = vld [vmem:[%s378 + $0xc] sm:$0xf]
        %v3620 = vunpack.c.l.bf16 %v3616
        %v3621 = vunpack.c.l.bf16 %v3617
        %v3622 = vunpack.c.l.bf16 %v3618
        %v3623 = vunpack.c.l.bf16 %v3619
        %v3640 = vunpack.c.l.b16 %v3600
        %v3641 = vunpack.c.l.b16 %v3601
        %v3642 = vunpack.c.l.b16 %v3602
        %v3643 = vunpack.c.l.b16 %v3603
        %v3644 = vunpack.c.l.b16 %v3604
        %v3645 = vunpack.c.l.b16 %v3605
        %v3646 = vunpack.c.l.b16 %v3606
        %v3647 = vunpack.c.l.b16 %v3607
        %v3648 = vunpack.c.l.b16 %v3608
        %v3649 = vunpack.c.l.b16 %v3609
        %v3650 = vunpack.c.l.b16 %v3610
        %v3651 = vunpack.c.l.b16 %v3611
        %v3652 = vunpack.c.l.b16 %v3612
        %v3653 = vunpack.c.l.b16 %v3613
        %v3654 = vunpack.c.l.b16 %v3614
        %v3655 = vunpack.c.l.b16 %v3615
        %v3656 = vpack.c.b16 %v3641, %v3640
        %v3657 = vpack.c.b16 %v3643, %v3642
        %v3658 = vpack.c.b16 %v3645, %v3644
        %v3659 = vpack.c.b16 %v3647, %v3646
        %v3660 = vpack.c.b16 %v3649, %v3648
        %v3661 = vpack.c.b16 %v3651, %v3650
        %v3662 = vpack.c.b16 %v3653, %v3652
        %v3663 = vpack.c.b16 %v3655, %v3654
        %3672 = vmatprep.subr.bf16.mxu0 0
        %3673 = vmatpush1.bf16.msra.mxu0 %v3656
        %3674 = vmatprep.subr.bf16.mxu0 0
        %3675 = vmatpush1.bf16.msra.mxu0 %v3657
        %3676 = vmatprep.subr.bf16.mxu0 0
        %3677 = vmatpush1.bf16.msra.mxu0 %v3658
        %3678 = vmatprep.subr.bf16.mxu0 0
        %3679 = vmatpush1.bf16.msra.mxu0 %v3659
        %3680 = vmatprep.subr.bf16.mxu0 0
        %3681 = vmatpush1.bf16.msra.mxu0 %v3660
        %3682 = vmatprep.subr.bf16.mxu0 0
        %3683 = vmatpush1.bf16.msra.mxu0 %v3661
        %3684 = vmatprep.subr.bf16.mxu0 0
        %3685 = vmatpush1.bf16.msra.mxu0 %v3662
        %3686 = vmatprep.subr.bf16.mxu0 0
        %3687 = vmatpush1.bf16.msra.mxu0 %v3663
        %3688 = vmatprep.subr.bf16.mxu0 0
        %3689 = vmatpush1.bf16.msra.mxu0 0
        %3690 = vmatprep.subr.bf16.mxu0 0
        %3691 = vmatpush1.bf16.msra.mxu0 0
        %3692 = vmatprep.subr.bf16.mxu0 0
        %3693 = vmatpush1.bf16.msra.mxu0 0
        %3694 = vmatprep.subr.bf16.mxu0 0
        %3695 = vmatpush1.bf16.msra.mxu0 0
        %3696 = vmatprep.subr.bf16.mxu0 0
        %3697 = vmatpush1.bf16.msra.mxu0 0
        %3698 = vmatprep.subr.bf16.mxu0 0
        %3699 = vmatpush1.bf16.msra.mxu0 0
        %3700 = vmatprep.subr.bf16.mxu0 0
        %3701 = vmatpush1.bf16.msra.mxu0 0
        %3702 = vmatprep.subr.bf16.mxu0 0
        %3703 = vmatpush1.bf16.msra.mxu0 0
        %3704 = vmatprep.mubr.bf16.mxu0 0
        %3705 = vmatmul.mubr.bf16.gmra.mrb[0].mxu0 %v3598
        %v3706 = vpop.f32.mrb[0].mxu0
        %v3707 = vadd.f32 %v3620, %v3706
        %v3708 = vpop.f32.mrb[0].mxu0
        %v3709 = vpop.f32.mrb[0].mxu0
        %v3710 = vadd.f32 %v3621, %v3709
        %v3711 = vpop.f32.mrb[0].mxu0
        %3712 = vmatprep.mubr.bf16.mxu0 0
        %3713 = vmatmul.mubr.bf16.gmra.mrb[0].mxu0 %v3599
        %v3714 = vpop.f32.mrb[0].mxu0
        %v3715 = vadd.f32 %v3622, %v3714
        %v3716 = vpop.f32.mrb[0].mxu0
        %v3717 = vpop.f32.mrb[0].mxu0
        %v3718 = vadd.f32 %v3623, %v3717
        %v3719 = vpop.f32.mrb[0].mxu0
        %3720 = vdwg.mxu0
        %v3721 = vpack.c.bf16 %v3710, %v3707
        %v3722 = vpack.c.bf16 %v3718, %v3715
        %v3725 = vunpack.c.l.b16 %v3721
        %v3726 = vunpack.c.h.b16 %v3721
        %v3727 = vunpack.c.l.b16 %v3722
        %v3728 = vunpack.c.h.b16 %v3722
        %v3729 = vpack.c.b16 %v3725, %v3725
        %v3730 = vpack.c.b16 %v3726, %v3726
        %v3731 = vpack.c.b16 %v3727, %v3727
        %v3732 = vpack.c.b16 %v3728, %v3728
        %3737 = vst [vmem:[%s435] sm:$0xf] %v3729
        %3738 = vst [vmem:[%s435 + $0x4] sm:$0xf] %v3730
        %3739 = vst [vmem:[%s435 + $0x8] sm:$0xf] %v3731
        %3740 = vst [vmem:[%s435 + $0xc] sm:$0xf] %v3732
        %s3741 = sand.u32 %s216, 1
        %s3742 = scalar_lea.sflag [#allocation5], %s3741
        %s3743 = sand.u32 %s216, 1
        %s3744 = smul.addr %s3743, 16
        %s3745 = scalar_lea.vmem [#allocation15], %s3744
        // Predicated region
        $region81: #{tpu_custom_call.1} parent=51 // pred_check
          %p3746 = pneg %p226
        $region82: #{tpu_custom_call.1} parent=51 // pred_check_branch
          %3748 = sbr.rel (%p3746) target = $region84
        $region83: #{tpu_custom_call.1} parent=51 // pred_region
          %s3749 = smul.u32 4, %s30
          %s3751 = ssub.s32 256, 256
          %3752 = vsyncadd %s3742, %s3751
          %s3753 = smul.addr %s3749, 64
          %s3754 = scalar_lea.hbm %s8, %s3753
          %s3755 = sshll.u32 %s3745, 4
          %s3756 = int_to_ptr.vmem [resolvable:$true] %s3755
          %3761 = dma.vmem_to_hbm [thread:$0]  %s3756, 256, %s3754, %s3742, 64, 64, 4
        $region84: #{tpu_custom_call.1} parent=51 // pred_fallthru
          _
      $region52: #{tpu_custom_call.1} parent=5 // pred_fallthru
        _
      %p3762 = scmp.le.s32.totalorder 2, %s25
      // Predicated region
      $region85: #{tpu_custom_call.1} parent=5 // pred_check
        %p3763 = pneg %p3762
      $region86: #{tpu_custom_call.1} parent=5 // pred_check_branch
        %3765 = sbr.rel (%p3763) target = $region88
      $region87: #{tpu_custom_call.1} parent=5 // pred_region
        %s3766 = ssub.s32 %s25, 2
        // Predicated region
        $region89: #{tpu_custom_call.1} parent=87 // pred_check
          %p3767 = pneg %p232
        $region90: #{tpu_custom_call.1} parent=87 // pred_check_branch
          %3769 = sbr.rel (%p3767) target = $region92
        $region91: #{tpu_custom_call.1} parent=87 // pred_region
          %s3770 = sand.u32 %s217, 1
          %s3771 = scalar_lea.sflag [#allocation5], %s3770
          %s3772 = sand.u32 %s217, 1
          %s3773 = smul.addr %s3772, 16
          %s3774 = scalar_lea.vmem [#allocation15], %s3773
          %3775 = dma.done %s3771, 256
        $region92: #{tpu_custom_call.1} parent=87 // pred_fallthru
          _
      $region88: #{tpu_custom_call.1} parent=5 // pred_fallthru
        _
    $region6: #{tpu_custom_call.1} parent=1 // loop_footer
      %s29 = sadd.s32 1, %s25
    $region7: #{tpu_custom_call.1} parent=1 // loop_footer_branch
      %24 = sbr.rel target = $region3
    $region8: #{tpu_custom_call.1} parent=1 // loop_exit
      _
    %3776 = vsyncpa [#allocation4], 1
    %s3777 = scalar_lea.sflag [#allocation4], 1
    %3778 = vsyncpa %s3777, 1
    %3779 = vsyncpa [#allocation7], 1
    %s3780 = scalar_lea.sflag [#allocation7], 1
    %3781 = vsyncpa %s3780, 1
    %3782 = vsyncpa [#allocation10], 1
    %3783 = vsyncpa [#allocation13], 1
    %3784 = vsyncpa [#allocation5], 1
    %s3785 = scalar_lea.sflag [#allocation5], 1
    %3786 = vsyncpa %s3785, 1

</llo_original>
